<compile_context>
chip_gen: v5e
topology: v5e:2x2
jax: 0.10.0
libtpu: 0.0.40
codegen_flags: <defaults>
</compile_context>

<pallas_src>
import functools
import math

import jax
import jax.numpy as jnp
from jax.experimental import pallas as pl
from jax.experimental.pallas import tpu as pltpu


# ------------------------- fused BertCl kernel -----------------------------

def _bert_cl_kernel(ids_ref, seg_ref, msk_ref,                 # SMEM (scalar prefetch)
                    word_ref, pos_ref, type_ref,               # embedding tables (VMEM)
                    eg_ref, eb_ref,                            # embedding LayerNorm
                    wqkv_ref, bqkv_ref, wo_ref, bo_ref, g1_ref, b1_ref,
                    wi_ref, bi_ref, wo2_ref, bo2_ref, g2_ref, b2_ref,
                    wp_ref, bp_ref, wc_ref, bc_ref,            # pooler + classifier
                    out_ref,
                    emb_scratch,                               # (S, H) f32 VMEM scratch
                    *, num_heads):
    """One grid step = one batch element:
    embedding gather + LayerNorm -> L encoder layers -> pooler(tanh) -> classifier."""
    f32, bf16 = jnp.float32, jnp.bfloat16
    num_layers, hidden, _ = wqkv_ref.shape
    seq = emb_scratch.shape[0]
    dh = hidden // num_heads
    scale = 1.0 / math.sqrt(dh)
    inv_sqrt2 = 1.0 / math.sqrt(2.0)
    b = pl.program_id(0)

    def layer_norm(h, g, beta):         # BERT LayerNorm: biased var, eps=1e-12
        mu = jnp.mean(h, axis=-1, keepdims=True)
        c = h - mu
        var = jnp.mean(c * c, axis=-1, keepdims=True)
        return c * jax.lax.rsqrt(var + 1e-12) * g + beta

    def mxu(a_bf16, w_bf16):            # bf16 operands, f32 accumulation on the MXU
        return jnp.dot(a_bf16, w_bf16, preferred_element_type=f32)

    # ---- embedding lookup (token / segment ids read as scalars from SMEM) ----
    for s in range(seq):
        tok = ids_ref[b, s]
        seg = seg_ref[b, s]
        emb_scratch[s:s + 1, :] = (word_ref[pl.ds(tok, 1), :]
                                   + type_ref[pl.ds(seg, 1), :]
                                   + pos_ref[s:s + 1, :])
    # embedding dropout = identity (inference)
    x = layer_norm(emb_scratch[...], eg_ref[...], eb_ref[...])          # (S, H) f32

    # additive attention-mask bias over keys: 0 for real tokens, -1e4 for padding
    col = jax.lax.broadcasted_iota(jnp.int32, (1, seq), 1)
    mask_bias = jnp.zeros((1, seq), f32)
    for s in range(seq):
        neg = (1.0 - msk_ref[b, s].astype(f32)) * -10000.0
        mask_bias = jnp.where(col == s, neg, mask_bias)

    for li in range(num_layers):
        # ---- self-attention: fused QKV projection, per-head scores ----
        xb = x.astype(bf16)                                  # cast once per stage
        qkv = mxu(xb, wqkv_ref[li]) + bqkv_ref[li]           # (S, 3H) f32
        qkv_b = qkv.astype(bf16)                             # cast once, slice per head
        ctx_heads = []
        for h in range(num_heads):
            qh = qkv_b[:, h * dh:(h + 1) * dh]
            kh = qkv_b[:, hidden + h * dh:hidden + (h + 1) * dh]
            vh = qkv_b[:, 2 * hidden + h * dh:2 * hidden + (h + 1) * dh]
            # q @ k^T with the transpose folded into the MXU operand load
            sc = jax.lax.dot_general(qh, kh, (((1,), (1,)), ((), ())),
                                     preferred_element_type=f32)
            sc = sc * scale + mask_bias
            sc = sc - jnp.max(sc, axis=-1, keepdims=True)
            p = jnp.exp(sc)
            p = p / jnp.sum(p, axis=-1, keepdims=True)       # exact softmax divide
            ctx_heads.append(mxu(p.astype(bf16), vh))        # (S, D)
        ctx = jnp.concatenate(ctx_heads, axis=1)             # (S, H) lane concat
        attn = mxu(ctx.astype(bf16), wo_ref[li]) + bo_ref[li]
        # attention-output dropout = identity (inference)
        x = layer_norm(attn + x, g1_ref[li], b1_ref[li])

        # ---- feed-forward (exact-erf GELU, as in BERT) ----
        inter = mxu(x.astype(bf16), wi_ref[li]) + bi_ref[li]             # (S, I)
        inter = inter * 0.5 * (1.0 + jax.lax.erf(inter * inv_sqrt2))
        ffn = mxu(inter.astype(bf16), wo2_ref[li]) + bo2_ref[li]         # (S, H)
        # FFN-output dropout = identity (inference)
        x = layer_norm(ffn + x, g2_ref[li], b2_ref[li])

    # ---- pooler on the [CLS] token + classifier (dropout = identity) ----
    cls = x[0:1, :]
    pooled = jnp.tanh(mxu(cls.astype(bf16), wp_ref[...]) + bp_ref[...])
    logits = mxu(pooled.astype(bf16), wc_ref[...]) + bc_ref[...]         # (1, C)
    out_ref[0] = logits.astype(out_ref.dtype)


# ------------------------------ model glue ---------------------------------

_WEIGHT_NAMES = ("word_emb", "pos_emb", "type_emb", "emb_ln_g", "emb_ln_b",
                 "wqkv", "bqkv", "wo", "bo", "ln1_g", "ln1_b",
                 "wi", "bi", "wo2", "bo2", "ln2_g", "ln2_b",
                 "wp", "bp", "wc", "bc")


def bert_cl_forward(params, input_ids, segment_ids, input_mask, *, num_heads=4):
    B, S = input_ids.shape
    H = params["word_emb"].shape[1]
    C = params["wc"].shape[1]
    weights = tuple(params[n] for n in _WEIGHT_NAMES)

    def resident(a):
        # Whole array, same block every grid step -> stays resident in VMEM.
        nd = a.ndim
        return pl.BlockSpec(a.shape, lambda b, *prefetch: (0,) * nd)

    kernel = functools.partial(_bert_cl_kernel, num_heads=num_heads)

    out = pl.pallas_call(
        kernel,
        out_shape=jax.ShapeDtypeStruct((B, 1, C), jnp.float32),
        grid_spec=pltpu.PrefetchScalarGridSpec(
            num_scalar_prefetch=3,                    # ids / segments / mask -> SMEM
            grid=(B,),
            in_specs=[resident(a) for a in weights],
            out_specs=pl.BlockSpec((1, 1, C), lambda b, *prefetch: (b, 0, 0)),
            scratch_shapes=[pltpu.VMEM((S, H), jnp.float32)]),
        compiler_params=pltpu.CompilerParams(
            dimension_semantics=("parallel",),        # batch across TCs (v7x megacore)
            vmem_limit_bytes=32 * 1024 * 1024),
    )(input_ids.astype(jnp.int32), segment_ids.astype(jnp.int32),
      input_mask.astype(jnp.int32), *weights)
    return out[:, 0, :]                               # (B, num_labels)


def init_params(key, *, vocab_size=128, max_pos=32, type_vocab=2, hidden=32,
                num_heads=4, intermediate=64, num_layers=2, num_labels=3):
    """Synthetic normal(0, 0.02) weights, laid out for the fused kernel:
    Q/K/V are packed into one (H, 3H) matrix with a lane-dense fused bias."""
    assert hidden % num_heads == 0
    H, I, L = hidden, intermediate, num_layers
    keys = iter(jax.random.split(key, 3 + 6 * L + 2))

    def nrm(shape):
        return jax.random.normal(next(keys), shape, jnp.float32) * 0.02

    wqkv, wo, wi, wo2 = [], [], [], []
    for _ in range(L):
        # TODO(synk): real BertCl checkpoints store nn.Linear weights as (out,in)
        # and compute x @ W^T; transpose before packing when loading pretrained
        # weights (BertModel.from_pretrained has no Pallas equivalent here).
        wqkv.append(jnp.concatenate([nrm((H, H)), nrm((H, H)), nrm((H, H))], axis=1))
        wo.append(nrm((H, H)))
        wi.append(nrm((H, I)))
        wo2.append(nrm((I, H)))

    bf16, f32 = jnp.bfloat16, jnp.float32
    return {
        # embedding tables (gathered in-kernel via SMEM token ids)
        "word_emb": nrm((vocab_size, H)),
        "pos_emb": nrm((max_pos, H)),
        "type_emb": nrm((type_vocab, H)),
        "emb_ln_g": jnp.ones((1, H), f32),
        "emb_ln_b": jnp.zeros((1, H), f32),
        # encoder layers (matmul weights bf16 for the MXU; biases / LN params f32)
        "wqkv": jnp.stack(wqkv).astype(bf16),          # (L, H, 3H) fused Q|K|V
        "bqkv": jnp.zeros((L, 1, 3 * H), f32),         # lane-dense fused bias
        "wo": jnp.stack(wo).astype(bf16),              # (L, H, H) un-split out-proj
        "bo": jnp.zeros((L, 1, H), f32),
        "ln1_g": jnp.ones((L, 1, H), f32),
        "ln1_b": jnp.zeros((L, 1, H), f32),
        "wi": jnp.stack(wi).astype(bf16),              # (L, H, I)
        "bi": jnp.zeros((L, 1, I), f32),
        "wo2": jnp.stack(wo2).astype(bf16),            # (L, I, H)
        "bo2": jnp.zeros((L, 1, H), f32),
        "ln2_g": jnp.ones((L, 1, H), f32),
        "ln2_b": jnp.zeros((L, 1, H), f32),
        # pooler + classifier
        "wp": nrm((H, H)).astype(bf16),
        "bp": jnp.zeros((1, H), f32),
        "wc": nrm((H, num_labels)).astype(bf16),
        "bc": jnp.zeros((1, num_labels), f32),
    }


if __name__ == "__main__":
    B, S = 2, 8
    VOCAB, NUM_LABELS = 128, 3

    key = jax.random.PRNGKey(0)
    pkey, ikey, skey = jax.random.split(key, 3)
    params = init_params(pkey, vocab_size=VOCAB, max_pos=32, type_vocab=2,
                         hidden=32, num_heads=4, intermediate=64,
                         num_layers=2, num_labels=NUM_LABELS)

    input_ids = jax.random.randint(ikey, (B, S), 0, VOCAB, dtype=jnp.int32)
    segment_ids = jax.random.randint(skey, (B, S), 0, 2, dtype=jnp.int32)
    input_mask = jnp.ones((B, S), jnp.int32).at[:, 6:].set(0)   # last 2 tokens padded

    forward = jax.jit(bert_cl_forward)
    logits = forward(params, input_ids, segment_ids, input_mask)
    jax.block_until_ready(logits)
    assert logits.shape == (B, NUM_LABELS)
    assert bool(jnp.all(jnp.isfinite(logits)))
    print("KERNEL_OK")
</pallas_src>

<mosaic_0001>
module attributes {stable_mosaic.version = 11 : i64} {
  func.func @_bert_cl_kernel(%arg0: i32, %arg1: memref<2x8xi32, #tpu.memory_space<smem>>, %arg2: memref<2x8xi32, #tpu.memory_space<smem>>, %arg3: memref<2x8xi32, #tpu.memory_space<smem>>, %arg4: memref<128x32xf32, #tpu.memory_space<vmem>>, %arg5: memref<32x32xf32, #tpu.memory_space<vmem>>, %arg6: memref<2x32xf32, #tpu.memory_space<vmem>>, %arg7: memref<1x32xf32, #tpu.memory_space<vmem>>, %arg8: memref<1x32xf32, #tpu.memory_space<vmem>>, %arg9: memref<2x32x96xbf16, #tpu.memory_space<vmem>>, %arg10: memref<2x1x96xf32, #tpu.memory_space<vmem>>, %arg11: memref<2x32x32xbf16, #tpu.memory_space<vmem>>, %arg12: memref<2x1x32xf32, #tpu.memory_space<vmem>>, %arg13: memref<2x1x32xf32, #tpu.memory_space<vmem>>, %arg14: memref<2x1x32xf32, #tpu.memory_space<vmem>>, %arg15: memref<2x32x64xbf16, #tpu.memory_space<vmem>>, %arg16: memref<2x1x64xf32, #tpu.memory_space<vmem>>, %arg17: memref<2x64x32xbf16, #tpu.memory_space<vmem>>, %arg18: memref<2x1x32xf32, #tpu.memory_space<vmem>>, %arg19: memref<2x1x32xf32, #tpu.memory_space<vmem>>, %arg20: memref<2x1x32xf32, #tpu.memory_space<vmem>>, %arg21: memref<32x32xbf16, #tpu.memory_space<vmem>>, %arg22: memref<1x32xf32, #tpu.memory_space<vmem>>, %arg23: memref<32x3xbf16, #tpu.memory_space<vmem>>, %arg24: memref<1x3xf32, #tpu.memory_space<vmem>>, %arg25: memref<1x1x3xf32, #tpu.memory_space<vmem>>, %arg26: memref<8x32xf32, #tpu.memory_space<vmem>>) attributes {dimension_semantics = [#tpu.dimension_semantics<parallel>], iteration_bounds = array<i64: 2>, scalar_prefetch = 3 : i64, scratch_operands = 1 : i64, tpu.core_type = #tpu.core_type<tc>, window_params = [{pipeline_mode = #tpu.pipeline_mode<synchronous>, transform_indices = @transform_0, window_bounds = array<i64: 128, 32>}, {pipeline_mode = #tpu.pipeline_mode<synchronous>, transform_indices = @transform_1, window_bounds = array<i64: 32, 32>}, {pipeline_mode = #tpu.pipeline_mode<synchronous>, transform_indices = @transform_2, window_bounds = array<i64: 2, 32>}, {pipeline_mode = #tpu.pipeline_mode<synchronous>, transform_indices = @transform_3, window_bounds = array<i64: 1, 32>}, {pipeline_mode = #tpu.pipeline_mode<synchronous>, transform_indices = @transform_4, window_bounds = array<i64: 1, 32>}, {pipeline_mode = #tpu.pipeline_mode<synchronous>, transform_indices = @transform_5, window_bounds = array<i64: 2, 32, 96>}, {pipeline_mode = #tpu.pipeline_mode<synchronous>, transform_indices = @transform_6, window_bounds = array<i64: 2, 1, 96>}, {pipeline_mode = #tpu.pipeline_mode<synchronous>, transform_indices = @transform_7, window_bounds = array<i64: 2, 32, 32>}, {pipeline_mode = #tpu.pipeline_mode<synchronous>, transform_indices = @transform_8, window_bounds = array<i64: 2, 1, 32>}, {pipeline_mode = #tpu.pipeline_mode<synchronous>, transform_indices = @transform_9, window_bounds = array<i64: 2, 1, 32>}, {pipeline_mode = #tpu.pipeline_mode<synchronous>, transform_indices = @transform_10, window_bounds = array<i64: 2, 1, 32>}, {pipeline_mode = #tpu.pipeline_mode<synchronous>, transform_indices = @transform_11, window_bounds = array<i64: 2, 32, 64>}, {pipeline_mode = #tpu.pipeline_mode<synchronous>, transform_indices = @transform_12, window_bounds = array<i64: 2, 1, 64>}, {pipeline_mode = #tpu.pipeline_mode<synchronous>, transform_indices = @transform_13, window_bounds = array<i64: 2, 64, 32>}, {pipeline_mode = #tpu.pipeline_mode<synchronous>, transform_indices = @transform_14, window_bounds = array<i64: 2, 1, 32>}, {pipeline_mode = #tpu.pipeline_mode<synchronous>, transform_indices = @transform_15, window_bounds = array<i64: 2, 1, 32>}, {pipeline_mode = #tpu.pipeline_mode<synchronous>, transform_indices = @transform_16, window_bounds = array<i64: 2, 1, 32>}, {pipeline_mode = #tpu.pipeline_mode<synchronous>, transform_indices = @transform_17, window_bounds = array<i64: 32, 32>}, {pipeline_mode = #tpu.pipeline_mode<synchronous>, transform_indices = @transform_18, window_bounds = array<i64: 1, 32>}, {pipeline_mode = #tpu.pipeline_mode<synchronous>, transform_indices = @transform_19, window_bounds = array<i64: 32, 3>}, {pipeline_mode = #tpu.pipeline_mode<synchronous>, transform_indices = @transform_20, window_bounds = array<i64: 1, 3>}, {transform_indices = @transform_21, window_bounds = array<i64: 1, 1, 3>}]} {
    %0 = arith.index_cast %arg0 : i32 to index
    %c0 = arith.constant 0 : index
    %1 = memref.load %arg1[%0, %c0] : memref<2x8xi32, #tpu.memory_space<smem>>
    %2 = arith.index_cast %arg0 : i32 to index
    %c0_0 = arith.constant 0 : index
    %3 = memref.load %arg2[%2, %c0_0] : memref<2x8xi32, #tpu.memory_space<smem>>
    %4 = arith.index_cast %1 : i32 to index
    %c0_1 = arith.constant 0 : index
    %5 = vector.load %arg4[%4, %c0_1] : memref<128x32xf32, #tpu.memory_space<vmem>>, vector<1x32xf32>
    %6 = arith.index_cast %3 : i32 to index
    %c0_2 = arith.constant 0 : index
    %7 = vector.load %arg6[%6, %c0_2] : memref<2x32xf32, #tpu.memory_space<vmem>>, vector<1x32xf32>
    %8 = arith.addf %5, %7 : vector<1x32xf32>
    %c0_3 = arith.constant 0 : index
    %c0_4 = arith.constant 0 : index
    %9 = vector.load %arg5[%c0_3, %c0_4] : memref<32x32xf32, #tpu.memory_space<vmem>>, vector<1x32xf32>
    %10 = arith.addf %8, %9 : vector<1x32xf32>
    %c0_5 = arith.constant 0 : index
    %c0_6 = arith.constant 0 : index
    %11 = vector.load %arg26[%c0_5, %c0_6] : memref<8x32xf32, #tpu.memory_space<vmem>>, vector<1x32xf32>
    tpu.vector_store %arg26[%c0_5, %c0_6], %10 {strides = array<i32>} : memref<8x32xf32, #tpu.memory_space<vmem>>, vector<1x32xf32>,
    %12 = arith.index_cast %arg0 : i32 to index
    %c1 = arith.constant 1 : index
    %13 = memref.load %arg1[%12, %c1] : memref<2x8xi32, #tpu.memory_space<smem>>
    %14 = arith.index_cast %arg0 : i32 to index
    %c1_7 = arith.constant 1 : index
    %15 = memref.load %arg2[%14, %c1_7] : memref<2x8xi32, #tpu.memory_space<smem>>
    %16 = arith.index_cast %13 : i32 to index
    %c0_8 = arith.constant 0 : index
    %17 = vector.load %arg4[%16, %c0_8] : memref<128x32xf32, #tpu.memory_space<vmem>>, vector<1x32xf32>
    %18 = arith.index_cast %15 : i32 to index
    %c0_9 = arith.constant 0 : index
    %19 = vector.load %arg6[%18, %c0_9] : memref<2x32xf32, #tpu.memory_space<vmem>>, vector<1x32xf32>
    %20 = arith.addf %17, %19 : vector<1x32xf32>
    %c1_10 = arith.constant 1 : index
    %c0_11 = arith.constant 0 : index
    %21 = vector.load %arg5[%c1_10, %c0_11] : memref<32x32xf32, #tpu.memory_space<vmem>>, vector<1x32xf32>
    %22 = arith.addf %20, %21 : vector<1x32xf32>
    %c1_12 = arith.constant 1 : index
    %c0_13 = arith.constant 0 : index
    %23 = vector.load %arg26[%c1_12, %c0_13] : memref<8x32xf32, #tpu.memory_space<vmem>>, vector<1x32xf32>
    tpu.vector_store %arg26[%c1_12, %c0_13], %22 {strides = array<i32>} : memref<8x32xf32, #tpu.memory_space<vmem>>, vector<1x32xf32>,
    %24 = arith.index_cast %arg0 : i32 to index
    %c2 = arith.constant 2 : index
    %25 = memref.load %arg1[%24, %c2] : memref<2x8xi32, #tpu.memory_space<smem>>
    %26 = arith.index_cast %arg0 : i32 to index
    %c2_14 = arith.constant 2 : index
    %27 = memref.load %arg2[%26, %c2_14] : memref<2x8xi32, #tpu.memory_space<smem>>
    %28 = arith.index_cast %25 : i32 to index
    %c0_15 = arith.constant 0 : index
    %29 = vector.load %arg4[%28, %c0_15] : memref<128x32xf32, #tpu.memory_space<vmem>>, vector<1x32xf32>
    %30 = arith.index_cast %27 : i32 to index
    %c0_16 = arith.constant 0 : index
    %31 = vector.load %arg6[%30, %c0_16] : memref<2x32xf32, #tpu.memory_space<vmem>>, vector<1x32xf32>
    %32 = arith.addf %29, %31 : vector<1x32xf32>
    %c2_17 = arith.constant 2 : index
    %c0_18 = arith.constant 0 : index
    %33 = vector.load %arg5[%c2_17, %c0_18] : memref<32x32xf32, #tpu.memory_space<vmem>>, vector<1x32xf32>
    %34 = arith.addf %32, %33 : vector<1x32xf32>
    %c2_19 = arith.constant 2 : index
    %c0_20 = arith.constant 0 : index
    %35 = vector.load %arg26[%c2_19, %c0_20] : memref<8x32xf32, #tpu.memory_space<vmem>>, vector<1x32xf32>
    tpu.vector_store %arg26[%c2_19, %c0_20], %34 {strides = array<i32>} : memref<8x32xf32, #tpu.memory_space<vmem>>, vector<1x32xf32>,
    %36 = arith.index_cast %arg0 : i32 to index
    %c3 = arith.constant 3 : index
    %37 = memref.load %arg1[%36, %c3] : memref<2x8xi32, #tpu.memory_space<smem>>
    %38 = arith.index_cast %arg0 : i32 to index
    %c3_21 = arith.constant 3 : index
    %39 = memref.load %arg2[%38, %c3_21] : memref<2x8xi32, #tpu.memory_space<smem>>
    %40 = arith.index_cast %37 : i32 to index
    %c0_22 = arith.constant 0 : index
    %41 = vector.load %arg4[%40, %c0_22] : memref<128x32xf32, #tpu.memory_space<vmem>>, vector<1x32xf32>
    %42 = arith.index_cast %39 : i32 to index
    %c0_23 = arith.constant 0 : index
    %43 = vector.load %arg6[%42, %c0_23] : memref<2x32xf32, #tpu.memory_space<vmem>>, vector<1x32xf32>
    %44 = arith.addf %41, %43 : vector<1x32xf32>
    %c3_24 = arith.constant 3 : index
    %c0_25 = arith.constant 0 : index
    %45 = vector.load %arg5[%c3_24, %c0_25] : memref<32x32xf32, #tpu.memory_space<vmem>>, vector<1x32xf32>
    %46 = arith.addf %44, %45 : vector<1x32xf32>
    %c3_26 = arith.constant 3 : index
    %c0_27 = arith.constant 0 : index
    %47 = vector.load %arg26[%c3_26, %c0_27] : memref<8x32xf32, #tpu.memory_space<vmem>>, vector<1x32xf32>
    tpu.vector_store %arg26[%c3_26, %c0_27], %46 {strides = array<i32>} : memref<8x32xf32, #tpu.memory_space<vmem>>, vector<1x32xf32>,
    %48 = arith.index_cast %arg0 : i32 to index
    %c4 = arith.constant 4 : index
    %49 = memref.load %arg1[%48, %c4] : memref<2x8xi32, #tpu.memory_space<smem>>
    %50 = arith.index_cast %arg0 : i32 to index
    %c4_28 = arith.constant 4 : index
    %51 = memref.load %arg2[%50, %c4_28] : memref<2x8xi32, #tpu.memory_space<smem>>
    %52 = arith.index_cast %49 : i32 to index
    %c0_29 = arith.constant 0 : index
    %53 = vector.load %arg4[%52, %c0_29] : memref<128x32xf32, #tpu.memory_space<vmem>>, vector<1x32xf32>
    %54 = arith.index_cast %51 : i32 to index
    %c0_30 = arith.constant 0 : index
    %55 = vector.load %arg6[%54, %c0_30] : memref<2x32xf32, #tpu.memory_space<vmem>>, vector<1x32xf32>
    %56 = arith.addf %53, %55 : vector<1x32xf32>
    %c4_31 = arith.constant 4 : index
    %c0_32 = arith.constant 0 : index
    %57 = vector.load %arg5[%c4_31, %c0_32] : memref<32x32xf32, #tpu.memory_space<vmem>>, vector<1x32xf32>
    %58 = arith.addf %56, %57 : vector<1x32xf32>
    %c4_33 = arith.constant 4 : index
    %c0_34 = arith.constant 0 : index
    %59 = vector.load %arg26[%c4_33, %c0_34] : memref<8x32xf32, #tpu.memory_space<vmem>>, vector<1x32xf32>
    tpu.vector_store %arg26[%c4_33, %c0_34], %58 {strides = array<i32>} : memref<8x32xf32, #tpu.memory_space<vmem>>, vector<1x32xf32>,
    %60 = arith.index_cast %arg0 : i32 to index
    %c5 = arith.constant 5 : index
    %61 = memref.load %arg1[%60, %c5] : memref<2x8xi32, #tpu.memory_space<smem>>
    %62 = arith.index_cast %arg0 : i32 to index
    %c5_35 = arith.constant 5 : index
    %63 = memref.load %arg2[%62, %c5_35] : memref<2x8xi32, #tpu.memory_space<smem>>
    %64 = arith.index_cast %61 : i32 to index
    %c0_36 = arith.constant 0 : index
    %65 = vector.load %arg4[%64, %c0_36] : memref<128x32xf32, #tpu.memory_space<vmem>>, vector<1x32xf32>
    %66 = arith.index_cast %63 : i32 to index
    %c0_37 = arith.constant 0 : index
    %67 = vector.load %arg6[%66, %c0_37] : memref<2x32xf32, #tpu.memory_space<vmem>>, vector<1x32xf32>
    %68 = arith.addf %65, %67 : vector<1x32xf32>
    %c5_38 = arith.constant 5 : index
    %c0_39 = arith.constant 0 : index
    %69 = vector.load %arg5[%c5_38, %c0_39] : memref<32x32xf32, #tpu.memory_space<vmem>>, vector<1x32xf32>
    %70 = arith.addf %68, %69 : vector<1x32xf32>
    %c5_40 = arith.constant 5 : index
    %c0_41 = arith.constant 0 : index
    %71 = vector.load %arg26[%c5_40, %c0_41] : memref<8x32xf32, #tpu.memory_space<vmem>>, vector<1x32xf32>
    tpu.vector_store %arg26[%c5_40, %c0_41], %70 {strides = array<i32>} : memref<8x32xf32, #tpu.memory_space<vmem>>, vector<1x32xf32>,
    %72 = arith.index_cast %arg0 : i32 to index
    %c6 = arith.constant 6 : index
    %73 = memref.load %arg1[%72, %c6] : memref<2x8xi32, #tpu.memory_space<smem>>
    %74 = arith.index_cast %arg0 : i32 to index
    %c6_42 = arith.constant 6 : index
    %75 = memref.load %arg2[%74, %c6_42] : memref<2x8xi32, #tpu.memory_space<smem>>
    %76 = arith.index_cast %73 : i32 to index
    %c0_43 = arith.constant 0 : index
    %77 = vector.load %arg4[%76, %c0_43] : memref<128x32xf32, #tpu.memory_space<vmem>>, vector<1x32xf32>
    %78 = arith.index_cast %75 : i32 to index
    %c0_44 = arith.constant 0 : index
    %79 = vector.load %arg6[%78, %c0_44] : memref<2x32xf32, #tpu.memory_space<vmem>>, vector<1x32xf32>
    %80 = arith.addf %77, %79 : vector<1x32xf32>
    %c6_45 = arith.constant 6 : index
    %c0_46 = arith.constant 0 : index
    %81 = vector.load %arg5[%c6_45, %c0_46] : memref<32x32xf32, #tpu.memory_space<vmem>>, vector<1x32xf32>
    %82 = arith.addf %80, %81 : vector<1x32xf32>
    %c6_47 = arith.constant 6 : index
    %c0_48 = arith.constant 0 : index
    %83 = vector.load %arg26[%c6_47, %c0_48] : memref<8x32xf32, #tpu.memory_space<vmem>>, vector<1x32xf32>
    tpu.vector_store %arg26[%c6_47, %c0_48], %82 {strides = array<i32>} : memref<8x32xf32, #tpu.memory_space<vmem>>, vector<1x32xf32>,
    %84 = arith.index_cast %arg0 : i32 to index
    %c7 = arith.constant 7 : index
    %85 = memref.load %arg1[%84, %c7] : memref<2x8xi32, #tpu.memory_space<smem>>
    %86 = arith.index_cast %arg0 : i32 to index
    %c7_49 = arith.constant 7 : index
    %87 = memref.load %arg2[%86, %c7_49] : memref<2x8xi32, #tpu.memory_space<smem>>
    %88 = arith.index_cast %85 : i32 to index
    %c0_50 = arith.constant 0 : index
    %89 = vector.load %arg4[%88, %c0_50] : memref<128x32xf32, #tpu.memory_space<vmem>>, vector<1x32xf32>
    %90 = arith.index_cast %87 : i32 to index
    %c0_51 = arith.constant 0 : index
    %91 = vector.load %arg6[%90, %c0_51] : memref<2x32xf32, #tpu.memory_space<vmem>>, vector<1x32xf32>
    %92 = arith.addf %89, %91 : vector<1x32xf32>
    %c7_52 = arith.constant 7 : index
    %c0_53 = arith.constant 0 : index
    %93 = vector.load %arg5[%c7_52, %c0_53] : memref<32x32xf32, #tpu.memory_space<vmem>>, vector<1x32xf32>
    %94 = arith.addf %92, %93 : vector<1x32xf32>
    %c7_54 = arith.constant 7 : index
    %c0_55 = arith.constant 0 : index
    %95 = vector.load %arg26[%c7_54, %c0_55] : memref<8x32xf32, #tpu.memory_space<vmem>>, vector<1x32xf32>
    tpu.vector_store %arg26[%c7_54, %c0_55], %94 {strides = array<i32>} : memref<8x32xf32, #tpu.memory_space<vmem>>, vector<1x32xf32>,
    %c0_56 = arith.constant 0 : index
    %c0_57 = arith.constant 0 : index
    %96 = vector.load %arg26[%c0_56, %c0_57] : memref<8x32xf32, #tpu.memory_space<vmem>>, vector<8x32xf32>
    %c0_58 = arith.constant 0 : index
    %c0_59 = arith.constant 0 : index
    %97 = vector.load %arg7[%c0_58, %c0_59] : memref<1x32xf32, #tpu.memory_space<vmem>>, vector<1x32xf32>
    %c0_60 = arith.constant 0 : index
    %c0_61 = arith.constant 0 : index
    %98 = vector.load %arg8[%c0_60, %c0_61] : memref<1x32xf32, #tpu.memory_space<vmem>>, vector<1x32xf32>
    %cst = arith.constant dense<0.000000e+00> : vector<8xf32>
    %99 = vector.multi_reduction <add>, %96, %cst [1] : vector<8x32xf32> to vector<8xf32>
    %100 = vector.shape_cast %99 : vector<8xf32> to vector<8x1xf32>
    %cst_62 = arith.constant 3.200000e+01 : f32
    %101 = vector.broadcast %cst_62 : f32 to vector<8x1xf32>
    %102 = arith.divf %100, %101 : vector<8x1xf32>
    %103 = vector.broadcast %102 : vector<8x1xf32> to vector<8x32xf32>
    %104 = arith.subf %96, %103 : vector<8x32xf32>
    %105 = arith.mulf %104, %104 : vector<8x32xf32>
    %cst_63 = arith.constant dense<0.000000e+00> : vector<8xf32>
    %106 = vector.multi_reduction <add>, %105, %cst_63 [1] : vector<8x32xf32> to vector<8xf32>
    %107 = vector.shape_cast %106 : vector<8xf32> to vector<8x1xf32>
    %cst_64 = arith.constant 3.200000e+01 : f32
    %108 = vector.broadcast %cst_64 : f32 to vector<8x1xf32>
    %109 = arith.divf %107, %108 : vector<8x1xf32>
    %cst_65 = arith.constant 9.99999996E-13 : f32
    %110 = vector.broadcast %cst_65 : f32 to vector<8x1xf32>
    %111 = arith.addf %109, %110 : vector<8x1xf32>
    %112 = math.rsqrt %111 : vector<8x1xf32>
    %113 = vector.broadcast %112 : vector<8x1xf32> to vector<8x32xf32>
    %114 = arith.mulf %104, %113 : vector<8x32xf32>
    %115 = vector.broadcast %97 : vector<1x32xf32> to vector<8x32xf32>
    %116 = arith.mulf %114, %115 : vector<8x32xf32>
    %117 = vector.broadcast %98 : vector<1x32xf32> to vector<8x32xf32>
    %118 = arith.addf %116, %117 : vector<8x32xf32>
    %119 = tpu.iota {dimensions = array<i32: 1>} : vector<1x8xi32>
    %cst_66 = arith.constant 0.000000e+00 : f32
    %120 = vector.broadcast %cst_66 : f32 to vector<1x8xf32>
    %121 = arith.index_cast %arg0 : i32 to index
    %c0_67 = arith.constant 0 : index
    %122 = memref.load %arg3[%121, %c0_67] : memref<2x8xi32, #tpu.memory_space<smem>>
    %123 = arith.sitofp %122 : i32 to f32
    %cst_68 = arith.constant 1.000000e+00 : f32
    %124 = arith.subf %cst_68, %123 : f32
    %cst_69 = arith.constant -1.000000e+04 : f32
    %125 = arith.mulf %124, %cst_69 : f32
    %c0_i32 = arith.constant 0 : i32
    %126 = vector.broadcast %c0_i32 : i32 to vector<1x8xi32>
    %127 = arith.cmpi eq, %119, %126 : vector<1x8xi32>
    %128 = vector.broadcast %125 : f32 to vector<1x8xf32>
    %129 = arith.select %127, %128, %120 : vector<1x8xi1>, vector<1x8xf32>
    %130 = arith.index_cast %arg0 : i32 to index
    %c1_70 = arith.constant 1 : index
    %131 = memref.load %arg3[%130, %c1_70] : memref<2x8xi32, #tpu.memory_space<smem>>
    %132 = arith.sitofp %131 : i32 to f32
    %cst_71 = arith.constant 1.000000e+00 : f32
    %133 = arith.subf %cst_71, %132 : f32
    %cst_72 = arith.constant -1.000000e+04 : f32
    %134 = arith.mulf %133, %cst_72 : f32
    %c1_i32 = arith.constant 1 : i32
    %135 = vector.broadcast %c1_i32 : i32 to vector<1x8xi32>
    %136 = arith.cmpi eq, %119, %135 : vector<1x8xi32>
    %137 = vector.broadcast %134 : f32 to vector<1x8xf32>
    %138 = arith.select %136, %137, %129 : vector<1x8xi1>, vector<1x8xf32>
    %139 = arith.index_cast %arg0 : i32 to index
    %c2_73 = arith.constant 2 : index
    %140 = memref.load %arg3[%139, %c2_73] : memref<2x8xi32, #tpu.memory_space<smem>>
    %141 = arith.sitofp %140 : i32 to f32
    %cst_74 = arith.constant 1.000000e+00 : f32
    %142 = arith.subf %cst_74, %141 : f32
    %cst_75 = arith.constant -1.000000e+04 : f32
    %143 = arith.mulf %142, %cst_75 : f32
    %c2_i32 = arith.constant 2 : i32
    %144 = vector.broadcast %c2_i32 : i32 to vector<1x8xi32>
    %145 = arith.cmpi eq, %119, %144 : vector<1x8xi32>
    %146 = vector.broadcast %143 : f32 to vector<1x8xf32>
    %147 = arith.select %145, %146, %138 : vector<1x8xi1>, vector<1x8xf32>
    %148 = arith.index_cast %arg0 : i32 to index
    %c3_76 = arith.constant 3 : index
    %149 = memref.load %arg3[%148, %c3_76] : memref<2x8xi32, #tpu.memory_space<smem>>
    %150 = arith.sitofp %149 : i32 to f32
    %cst_77 = arith.constant 1.000000e+00 : f32
    %151 = arith.subf %cst_77, %150 : f32
    %cst_78 = arith.constant -1.000000e+04 : f32
    %152 = arith.mulf %151, %cst_78 : f32
    %c3_i32 = arith.constant 3 : i32
    %153 = vector.broadcast %c3_i32 : i32 to vector<1x8xi32>
    %154 = arith.cmpi eq, %119, %153 : vector<1x8xi32>
    %155 = vector.broadcast %152 : f32 to vector<1x8xf32>
    %156 = arith.select %154, %155, %147 : vector<1x8xi1>, vector<1x8xf32>
    %157 = arith.index_cast %arg0 : i32 to index
    %c4_79 = arith.constant 4 : index
    %158 = memref.load %arg3[%157, %c4_79] : memref<2x8xi32, #tpu.memory_space<smem>>
    %159 = arith.sitofp %158 : i32 to f32
    %cst_80 = arith.constant 1.000000e+00 : f32
    %160 = arith.subf %cst_80, %159 : f32
    %cst_81 = arith.constant -1.000000e+04 : f32
    %161 = arith.mulf %160, %cst_81 : f32
    %c4_i32 = arith.constant 4 : i32
    %162 = vector.broadcast %c4_i32 : i32 to vector<1x8xi32>
    %163 = arith.cmpi eq, %119, %162 : vector<1x8xi32>
    %164 = vector.broadcast %161 : f32 to vector<1x8xf32>
    %165 = arith.select %163, %164, %156 : vector<1x8xi1>, vector<1x8xf32>
    %166 = arith.index_cast %arg0 : i32 to index
    %c5_82 = arith.constant 5 : index
    %167 = memref.load %arg3[%166, %c5_82] : memref<2x8xi32, #tpu.memory_space<smem>>
    %168 = arith.sitofp %167 : i32 to f32
    %cst_83 = arith.constant 1.000000e+00 : f32
    %169 = arith.subf %cst_83, %168 : f32
    %cst_84 = arith.constant -1.000000e+04 : f32
    %170 = arith.mulf %169, %cst_84 : f32
    %c5_i32 = arith.constant 5 : i32
    %171 = vector.broadcast %c5_i32 : i32 to vector<1x8xi32>
    %172 = arith.cmpi eq, %119, %171 : vector<1x8xi32>
    %173 = vector.broadcast %170 : f32 to vector<1x8xf32>
    %174 = arith.select %172, %173, %165 : vector<1x8xi1>, vector<1x8xf32>
    %175 = arith.index_cast %arg0 : i32 to index
    %c6_85 = arith.constant 6 : index
    %176 = memref.load %arg3[%175, %c6_85] : memref<2x8xi32, #tpu.memory_space<smem>>
    %177 = arith.sitofp %176 : i32 to f32
    %cst_86 = arith.constant 1.000000e+00 : f32
    %178 = arith.subf %cst_86, %177 : f32
    %cst_87 = arith.constant -1.000000e+04 : f32
    %179 = arith.mulf %178, %cst_87 : f32
    %c6_i32 = arith.constant 6 : i32
    %180 = vector.broadcast %c6_i32 : i32 to vector<1x8xi32>
    %181 = arith.cmpi eq, %119, %180 : vector<1x8xi32>
    %182 = vector.broadcast %179 : f32 to vector<1x8xf32>
    %183 = arith.select %181, %182, %174 : vector<1x8xi1>, vector<1x8xf32>
    %184 = arith.index_cast %arg0 : i32 to index
    %c7_88 = arith.constant 7 : index
    %185 = memref.load %arg3[%184, %c7_88] : memref<2x8xi32, #tpu.memory_space<smem>>
    %186 = arith.sitofp %185 : i32 to f32
    %cst_89 = arith.constant 1.000000e+00 : f32
    %187 = arith.subf %cst_89, %186 : f32
    %cst_90 = arith.constant -1.000000e+04 : f32
    %188 = arith.mulf %187, %cst_90 : f32
    %c7_i32 = arith.constant 7 : i32
    %189 = vector.broadcast %c7_i32 : i32 to vector<1x8xi32>
    %190 = arith.cmpi eq, %119, %189 : vector<1x8xi32>
    %191 = vector.broadcast %188 : f32 to vector<1x8xf32>
    %192 = arith.select %190, %191, %183 : vector<1x8xi1>, vector<1x8xf32>
    %193 = arith.truncf %118 : vector<8x32xf32> to vector<8x32xbf16>
    %c0_91 = arith.constant 0 : index
    %c0_92 = arith.constant 0 : index
    %c0_93 = arith.constant 0 : index
    %194 = vector.load %arg9[%c0_91, %c0_92, %c0_93] : memref<2x32x96xbf16, #tpu.memory_space<vmem>>, vector<1x32x96xbf16>
    %195 = vector.shape_cast %194 : vector<1x32x96xbf16> to vector<32x96xbf16>
    %cst_94 = arith.constant dense<0.000000e+00> : vector<8x96xf32>
    %196 = tpu.matmul %193, %195, %cst_94 {dimension_numbers = #tpu.dot_dimension_numbers<[1], [0], [0], [1], [0, 0, 1, 1], [], []>} : vector<8x32xbf16>, vector<32x96xbf16>, vector<8x96xf32> -> vector<8x96xf32>
    %c0_95 = arith.constant 0 : index
    %c0_96 = arith.constant 0 : index
    %c0_97 = arith.constant 0 : index
    %197 = vector.load %arg10[%c0_95, %c0_96, %c0_97] : memref<2x1x96xf32, #tpu.memory_space<vmem>>, vector<1x1x96xf32>
    %198 = vector.shape_cast %197 : vector<1x1x96xf32> to vector<1x96xf32>
    %199 = vector.broadcast %198 : vector<1x96xf32> to vector<8x96xf32>
    %200 = arith.addf %196, %199 : vector<8x96xf32>
    %201 = arith.truncf %200 : vector<8x96xf32> to vector<8x96xbf16>
    %202 = vector.extract_strided_slice %201 {offsets = [0, 0], sizes = [8, 8], strides = [1, 1]} : vector<8x96xbf16> to vector<8x8xbf16>
    %203 = vector.extract_strided_slice %201 {offsets = [0, 32], sizes = [8, 8], strides = [1, 1]} : vector<8x96xbf16> to vector<8x8xbf16>
    %204 = vector.extract_strided_slice %201 {offsets = [0, 64], sizes = [8, 8], strides = [1, 1]} : vector<8x96xbf16> to vector<8x8xbf16>
    %cst_98 = arith.constant dense<0.000000e+00> : vector<8x8xf32>
    %205 = tpu.matmul %202, %203, %cst_98 {dimension_numbers = #tpu.dot_dimension_numbers<[1], [1], [0], [0], [0, 0, 1, 0], [], []>} : vector<8x8xbf16>, vector<8x8xbf16>, vector<8x8xf32> -> vector<8x8xf32>
    %cst_99 = arith.constant 0.353553385 : f32
    %206 = vector.broadcast %cst_99 : f32 to vector<8x8xf32>
    %207 = arith.mulf %205, %206 : vector<8x8xf32>
    %208 = vector.broadcast %192 : vector<1x8xf32> to vector<8x8xf32>
    %209 = arith.addf %207, %208 : vector<8x8xf32>
    %cst_100 = arith.constant dense<0xFF800000> : vector<8xf32>
    %210 = vector.multi_reduction <maximumf>, %209, %cst_100 [1] : vector<8x8xf32> to vector<8xf32>
    %211 = vector.shape_cast %210 : vector<8xf32> to vector<8x1xf32>
    %212 = vector.broadcast %211 : vector<8x1xf32> to vector<8x8xf32>
    %213 = arith.subf %209, %212 : vector<8x8xf32>
    %214 = math.exp %213 : vector<8x8xf32>
    %cst_101 = arith.constant dense<0.000000e+00> : vector<8xf32>
    %215 = vector.multi_reduction <add>, %214, %cst_101 [1] : vector<8x8xf32> to vector<8xf32>
    %216 = vector.shape_cast %215 : vector<8xf32> to vector<8x1xf32>
    %217 = vector.broadcast %216 : vector<8x1xf32> to vector<8x8xf32>
    %218 = arith.divf %214, %217 : vector<8x8xf32>
    %219 = arith.truncf %218 : vector<8x8xf32> to vector<8x8xbf16>
    %cst_102 = arith.constant dense<0.000000e+00> : vector<8x8xf32>
    %220 = tpu.matmul %219, %204, %cst_102 {dimension_numbers = #tpu.dot_dimension_numbers<[1], [0], [0], [1], [0, 0, 1, 1], [], []>} : vector<8x8xbf16>, vector<8x8xbf16>, vector<8x8xf32> -> vector<8x8xf32>
    %221 = vector.extract_strided_slice %201 {offsets = [0, 8], sizes = [8, 8], strides = [1, 1]} : vector<8x96xbf16> to vector<8x8xbf16>
    %222 = vector.extract_strided_slice %201 {offsets = [0, 40], sizes = [8, 8], strides = [1, 1]} : vector<8x96xbf16> to vector<8x8xbf16>
    %223 = vector.extract_strided_slice %201 {offsets = [0, 72], sizes = [8, 8], strides = [1, 1]} : vector<8x96xbf16> to vector<8x8xbf16>
    %cst_103 = arith.constant dense<0.000000e+00> : vector<8x8xf32>
    %224 = tpu.matmul %221, %222, %cst_103 {dimension_numbers = #tpu.dot_dimension_numbers<[1], [1], [0], [0], [0, 0, 1, 0], [], []>} : vector<8x8xbf16>, vector<8x8xbf16>, vector<8x8xf32> -> vector<8x8xf32>
    %cst_104 = arith.constant 0.353553385 : f32
    %225 = vector.broadcast %cst_104 : f32 to vector<8x8xf32>
    %226 = arith.mulf %224, %225 : vector<8x8xf32>
    %227 = vector.broadcast %192 : vector<1x8xf32> to vector<8x8xf32>
    %228 = arith.addf %226, %227 : vector<8x8xf32>
    %cst_105 = arith.constant dense<0xFF800000> : vector<8xf32>
    %229 = vector.multi_reduction <maximumf>, %228, %cst_105 [1] : vector<8x8xf32> to vector<8xf32>
    %230 = vector.shape_cast %229 : vector<8xf32> to vector<8x1xf32>
    %231 = vector.broadcast %230 : vector<8x1xf32> to vector<8x8xf32>
    %232 = arith.subf %228, %231 : vector<8x8xf32>
    %233 = math.exp %232 : vector<8x8xf32>
    %cst_106 = arith.constant dense<0.000000e+00> : vector<8xf32>
    %234 = vector.multi_reduction <add>, %233, %cst_106 [1] : vector<8x8xf32> to vector<8xf32>
    %235 = vector.shape_cast %234 : vector<8xf32> to vector<8x1xf32>
    %236 = vector.broadcast %235 : vector<8x1xf32> to vector<8x8xf32>
    %237 = arith.divf %233, %236 : vector<8x8xf32>
    %238 = arith.truncf %237 : vector<8x8xf32> to vector<8x8xbf16>
    %cst_107 = arith.constant dense<0.000000e+00> : vector<8x8xf32>
    %239 = tpu.matmul %238, %223, %cst_107 {dimension_numbers = #tpu.dot_dimension_numbers<[1], [0], [0], [1], [0, 0, 1, 1], [], []>} : vector<8x8xbf16>, vector<8x8xbf16>, vector<8x8xf32> -> vector<8x8xf32>
    %240 = vector.extract_strided_slice %201 {offsets = [0, 16], sizes = [8, 8], strides = [1, 1]} : vector<8x96xbf16> to vector<8x8xbf16>
    %241 = vector.extract_strided_slice %201 {offsets = [0, 48], sizes = [8, 8], strides = [1, 1]} : vector<8x96xbf16> to vector<8x8xbf16>
    %242 = vector.extract_strided_slice %201 {offsets = [0, 80], sizes = [8, 8], strides = [1, 1]} : vector<8x96xbf16> to vector<8x8xbf16>
    %cst_108 = arith.constant dense<0.000000e+00> : vector<8x8xf32>
    %243 = tpu.matmul %240, %241, %cst_108 {dimension_numbers = #tpu.dot_dimension_numbers<[1], [1], [0], [0], [0, 0, 1, 0], [], []>} : vector<8x8xbf16>, vector<8x8xbf16>, vector<8x8xf32> -> vector<8x8xf32>
    %cst_109 = arith.constant 0.353553385 : f32
    %244 = vector.broadcast %cst_109 : f32 to vector<8x8xf32>
    %245 = arith.mulf %243, %244 : vector<8x8xf32>
    %246 = vector.broadcast %192 : vector<1x8xf32> to vector<8x8xf32>
    %247 = arith.addf %245, %246 : vector<8x8xf32>
    %cst_110 = arith.constant dense<0xFF800000> : vector<8xf32>
    %248 = vector.multi_reduction <maximumf>, %247, %cst_110 [1] : vector<8x8xf32> to vector<8xf32>
    %249 = vector.shape_cast %248 : vector<8xf32> to vector<8x1xf32>
    %250 = vector.broadcast %249 : vector<8x1xf32> to vector<8x8xf32>
    %251 = arith.subf %247, %250 : vector<8x8xf32>
    %252 = math.exp %251 : vector<8x8xf32>
    %cst_111 = arith.constant dense<0.000000e+00> : vector<8xf32>
    %253 = vector.multi_reduction <add>, %252, %cst_111 [1] : vector<8x8xf32> to vector<8xf32>
    %254 = vector.shape_cast %253 : vector<8xf32> to vector<8x1xf32>
    %255 = vector.broadcast %254 : vector<8x1xf32> to vector<8x8xf32>
    %256 = arith.divf %252, %255 : vector<8x8xf32>
    %257 = arith.truncf %256 : vector<8x8xf32> to vector<8x8xbf16>
    %cst_112 = arith.constant dense<0.000000e+00> : vector<8x8xf32>
    %258 = tpu.matmul %257, %242, %cst_112 {dimension_numbers = #tpu.dot_dimension_numbers<[1], [0], [0], [1], [0, 0, 1, 1], [], []>} : vector<8x8xbf16>, vector<8x8xbf16>, vector<8x8xf32> -> vector<8x8xf32>
    %259 = vector.extract_strided_slice %201 {offsets = [0, 24], sizes = [8, 8], strides = [1, 1]} : vector<8x96xbf16> to vector<8x8xbf16>
    %260 = vector.extract_strided_slice %201 {offsets = [0, 56], sizes = [8, 8], strides = [1, 1]} : vector<8x96xbf16> to vector<8x8xbf16>
    %261 = vector.extract_strided_slice %201 {offsets = [0, 88], sizes = [8, 8], strides = [1, 1]} : vector<8x96xbf16> to vector<8x8xbf16>
    %cst_113 = arith.constant dense<0.000000e+00> : vector<8x8xf32>
    %262 = tpu.matmul %259, %260, %cst_113 {dimension_numbers = #tpu.dot_dimension_numbers<[1], [1], [0], [0], [0, 0, 1, 0], [], []>} : vector<8x8xbf16>, vector<8x8xbf16>, vector<8x8xf32> -> vector<8x8xf32>
    %cst_114 = arith.constant 0.353553385 : f32
    %263 = vector.broadcast %cst_114 : f32 to vector<8x8xf32>
    %264 = arith.mulf %262, %263 : vector<8x8xf32>
    %265 = vector.broadcast %192 : vector<1x8xf32> to vector<8x8xf32>
    %266 = arith.addf %264, %265 : vector<8x8xf32>
    %cst_115 = arith.constant dense<0xFF800000> : vector<8xf32>
    %267 = vector.multi_reduction <maximumf>, %266, %cst_115 [1] : vector<8x8xf32> to vector<8xf32>
    %268 = vector.shape_cast %267 : vector<8xf32> to vector<8x1xf32>
    %269 = vector.broadcast %268 : vector<8x1xf32> to vector<8x8xf32>
    %270 = arith.subf %266, %269 : vector<8x8xf32>
    %271 = math.exp %270 : vector<8x8xf32>
    %cst_116 = arith.constant dense<0.000000e+00> : vector<8xf32>
    %272 = vector.multi_reduction <add>, %271, %cst_116 [1] : vector<8x8xf32> to vector<8xf32>
    %273 = vector.shape_cast %272 : vector<8xf32> to vector<8x1xf32>
    %274 = vector.broadcast %273 : vector<8x1xf32> to vector<8x8xf32>
    %275 = arith.divf %271, %274 : vector<8x8xf32>
    %276 = arith.truncf %275 : vector<8x8xf32> to vector<8x8xbf16>
    %cst_117 = arith.constant dense<0.000000e+00> : vector<8x8xf32>
    %277 = tpu.matmul %276, %261, %cst_117 {dimension_numbers = #tpu.dot_dimension_numbers<[1], [0], [0], [1], [0, 0, 1, 1], [], []>} : vector<8x8xbf16>, vector<8x8xbf16>, vector<8x8xf32> -> vector<8x8xf32>
    %278 = tpu.concatenate %220, %239, %258, %277 in 1 : vector<8x8xf32>, vector<8x8xf32>, vector<8x8xf32>, vector<8x8xf32> -> vector<8x32xf32>
    %279 = arith.truncf %278 : vector<8x32xf32> to vector<8x32xbf16>
    %c0_118 = arith.constant 0 : index
    %c0_119 = arith.constant 0 : index
    %c0_120 = arith.constant 0 : index
    %280 = vector.load %arg11[%c0_118, %c0_119, %c0_120] : memref<2x32x32xbf16, #tpu.memory_space<vmem>>, vector<1x32x32xbf16>
    %281 = vector.shape_cast %280 : vector<1x32x32xbf16> to vector<32x32xbf16>
    %cst_121 = arith.constant dense<0.000000e+00> : vector<8x32xf32>
    %282 = tpu.matmul %279, %281, %cst_121 {dimension_numbers = #tpu.dot_dimension_numbers<[1], [0], [0], [1], [0, 0, 1, 1], [], []>} : vector<8x32xbf16>, vector<32x32xbf16>, vector<8x32xf32> -> vector<8x32xf32>
    %c0_122 = arith.constant 0 : index
    %c0_123 = arith.constant 0 : index
    %c0_124 = arith.constant 0 : index
    %283 = vector.load %arg12[%c0_122, %c0_123, %c0_124] : memref<2x1x32xf32, #tpu.memory_space<vmem>>, vector<1x1x32xf32>
    %284 = vector.shape_cast %283 : vector<1x1x32xf32> to vector<1x32xf32>
    %285 = vector.broadcast %284 : vector<1x32xf32> to vector<8x32xf32>
    %286 = arith.addf %282, %285 : vector<8x32xf32>
    %287 = arith.addf %286, %118 : vector<8x32xf32>
    %c0_125 = arith.constant 0 : index
    %c0_126 = arith.constant 0 : index
    %c0_127 = arith.constant 0 : index
    %288 = vector.load %arg13[%c0_125, %c0_126, %c0_127] : memref<2x1x32xf32, #tpu.memory_space<vmem>>, vector<1x1x32xf32>
    %289 = vector.shape_cast %288 : vector<1x1x32xf32> to vector<1x32xf32>
    %c0_128 = arith.constant 0 : index
    %c0_129 = arith.constant 0 : index
    %c0_130 = arith.constant 0 : index
    %290 = vector.load %arg14[%c0_128, %c0_129, %c0_130] : memref<2x1x32xf32, #tpu.memory_space<vmem>>, vector<1x1x32xf32>
    %291 = vector.shape_cast %290 : vector<1x1x32xf32> to vector<1x32xf32>
    %cst_131 = arith.constant dense<0.000000e+00> : vector<8xf32>
    %292 = vector.multi_reduction <add>, %287, %cst_131 [1] : vector<8x32xf32> to vector<8xf32>
    %293 = vector.shape_cast %292 : vector<8xf32> to vector<8x1xf32>
    %cst_132 = arith.constant 3.200000e+01 : f32
    %294 = vector.broadcast %cst_132 : f32 to vector<8x1xf32>
    %295 = arith.divf %293, %294 : vector<8x1xf32>
    %296 = vector.broadcast %295 : vector<8x1xf32> to vector<8x32xf32>
    %297 = arith.subf %287, %296 : vector<8x32xf32>
    %298 = arith.mulf %297, %297 : vector<8x32xf32>
    %cst_133 = arith.constant dense<0.000000e+00> : vector<8xf32>
    %299 = vector.multi_reduction <add>, %298, %cst_133 [1] : vector<8x32xf32> to vector<8xf32>
    %300 = vector.shape_cast %299 : vector<8xf32> to vector<8x1xf32>
    %cst_134 = arith.constant 3.200000e+01 : f32
    %301 = vector.broadcast %cst_134 : f32 to vector<8x1xf32>
    %302 = arith.divf %300, %301 : vector<8x1xf32>
    %cst_135 = arith.constant 9.99999996E-13 : f32
    %303 = vector.broadcast %cst_135 : f32 to vector<8x1xf32>
    %304 = arith.addf %302, %303 : vector<8x1xf32>
    %305 = math.rsqrt %304 : vector<8x1xf32>
    %306 = vector.broadcast %305 : vector<8x1xf32> to vector<8x32xf32>
    %307 = arith.mulf %297, %306 : vector<8x32xf32>
    %308 = vector.broadcast %289 : vector<1x32xf32> to vector<8x32xf32>
    %309 = arith.mulf %307, %308 : vector<8x32xf32>
    %310 = vector.broadcast %291 : vector<1x32xf32> to vector<8x32xf32>
    %311 = arith.addf %309, %310 : vector<8x32xf32>
    %312 = arith.truncf %311 : vector<8x32xf32> to vector<8x32xbf16>
    %c0_136 = arith.constant 0 : index
    %c0_137 = arith.constant 0 : index
    %c0_138 = arith.constant 0 : index
    %313 = vector.load %arg15[%c0_136, %c0_137, %c0_138] : memref<2x32x64xbf16, #tpu.memory_space<vmem>>, vector<1x32x64xbf16>
    %314 = vector.shape_cast %313 : vector<1x32x64xbf16> to vector<32x64xbf16>
    %cst_139 = arith.constant dense<0.000000e+00> : vector<8x64xf32>
    %315 = tpu.matmul %312, %314, %cst_139 {dimension_numbers = #tpu.dot_dimension_numbers<[1], [0], [0], [1], [0, 0, 1, 1], [], []>} : vector<8x32xbf16>, vector<32x64xbf16>, vector<8x64xf32> -> vector<8x64xf32>
    %c0_140 = arith.constant 0 : index
    %c0_141 = arith.constant 0 : index
    %c0_142 = arith.constant 0 : index
    %316 = vector.load %arg16[%c0_140, %c0_141, %c0_142] : memref<2x1x64xf32, #tpu.memory_space<vmem>>, vector<1x1x64xf32>
    %317 = vector.shape_cast %316 : vector<1x1x64xf32> to vector<1x64xf32>
    %318 = vector.broadcast %317 : vector<1x64xf32> to vector<8x64xf32>
    %319 = arith.addf %315, %318 : vector<8x64xf32>
    %cst_143 = arith.constant 5.000000e-01 : f32
    %320 = vector.broadcast %cst_143 : f32 to vector<8x64xf32>
    %321 = arith.mulf %319, %320 : vector<8x64xf32>
    %cst_144 = arith.constant 0.707106769 : f32
    %322 = vector.broadcast %cst_144 : f32 to vector<8x64xf32>
    %323 = arith.mulf %319, %322 : vector<8x64xf32>
    %324 = math.erf %323 : vector<8x64xf32>
    %cst_145 = arith.constant 1.000000e+00 : f32
    %325 = vector.broadcast %cst_145 : f32 to vector<8x64xf32>
    %326 = arith.addf %325, %324 : vector<8x64xf32>
    %327 = arith.mulf %321, %326 : vector<8x64xf32>
    %328 = arith.truncf %327 : vector<8x64xf32> to vector<8x64xbf16>
    %c0_146 = arith.constant 0 : index
    %c0_147 = arith.constant 0 : index
    %c0_148 = arith.constant 0 : index
    %329 = vector.load %arg17[%c0_146, %c0_147, %c0_148] : memref<2x64x32xbf16, #tpu.memory_space<vmem>>, vector<1x64x32xbf16>
    %330 = vector.shape_cast %329 : vector<1x64x32xbf16> to vector<64x32xbf16>
    %cst_149 = arith.constant dense<0.000000e+00> : vector<8x32xf32>
    %331 = tpu.matmul %328, %330, %cst_149 {dimension_numbers = #tpu.dot_dimension_numbers<[1], [0], [0], [1], [0, 0, 1, 1], [], []>} : vector<8x64xbf16>, vector<64x32xbf16>, vector<8x32xf32> -> vector<8x32xf32>
    %c0_150 = arith.constant 0 : index
    %c0_151 = arith.constant 0 : index
    %c0_152 = arith.constant 0 : index
    %332 = vector.load %arg18[%c0_150, %c0_151, %c0_152] : memref<2x1x32xf32, #tpu.memory_space<vmem>>, vector<1x1x32xf32>
    %333 = vector.shape_cast %332 : vector<1x1x32xf32> to vector<1x32xf32>
    %334 = vector.broadcast %333 : vector<1x32xf32> to vector<8x32xf32>
    %335 = arith.addf %331, %334 : vector<8x32xf32>
    %336 = arith.addf %335, %311 : vector<8x32xf32>
    %c0_153 = arith.constant 0 : index
    %c0_154 = arith.constant 0 : index
    %c0_155 = arith.constant 0 : index
    %337 = vector.load %arg19[%c0_153, %c0_154, %c0_155] : memref<2x1x32xf32, #tpu.memory_space<vmem>>, vector<1x1x32xf32>
    %338 = vector.shape_cast %337 : vector<1x1x32xf32> to vector<1x32xf32>
    %c0_156 = arith.constant 0 : index
    %c0_157 = arith.constant 0 : index
    %c0_158 = arith.constant 0 : index
    %339 = vector.load %arg20[%c0_156, %c0_157, %c0_158] : memref<2x1x32xf32, #tpu.memory_space<vmem>>, vector<1x1x32xf32>
    %340 = vector.shape_cast %339 : vector<1x1x32xf32> to vector<1x32xf32>
    %cst_159 = arith.constant dense<0.000000e+00> : vector<8xf32>
    %341 = vector.multi_reduction <add>, %336, %cst_159 [1] : vector<8x32xf32> to vector<8xf32>
    %342 = vector.shape_cast %341 : vector<8xf32> to vector<8x1xf32>
    %cst_160 = arith.constant 3.200000e+01 : f32
    %343 = vector.broadcast %cst_160 : f32 to vector<8x1xf32>
    %344 = arith.divf %342, %343 : vector<8x1xf32>
    %345 = vector.broadcast %344 : vector<8x1xf32> to vector<8x32xf32>
    %346 = arith.subf %336, %345 : vector<8x32xf32>
    %347 = arith.mulf %346, %346 : vector<8x32xf32>
    %cst_161 = arith.constant dense<0.000000e+00> : vector<8xf32>
    %348 = vector.multi_reduction <add>, %347, %cst_161 [1] : vector<8x32xf32> to vector<8xf32>
    %349 = vector.shape_cast %348 : vector<8xf32> to vector<8x1xf32>
    %cst_162 = arith.constant 3.200000e+01 : f32
    %350 = vector.broadcast %cst_162 : f32 to vector<8x1xf32>
    %351 = arith.divf %349, %350 : vector<8x1xf32>
    %cst_163 = arith.constant 9.99999996E-13 : f32
    %352 = vector.broadcast %cst_163 : f32 to vector<8x1xf32>
    %353 = arith.addf %351, %352 : vector<8x1xf32>
    %354 = math.rsqrt %353 : vector<8x1xf32>
    %355 = vector.broadcast %354 : vector<8x1xf32> to vector<8x32xf32>
    %356 = arith.mulf %346, %355 : vector<8x32xf32>
    %357 = vector.broadcast %338 : vector<1x32xf32> to vector<8x32xf32>
    %358 = arith.mulf %356, %357 : vector<8x32xf32>
    %359 = vector.broadcast %340 : vector<1x32xf32> to vector<8x32xf32>
    %360 = arith.addf %358, %359 : vector<8x32xf32>
    %361 = arith.truncf %360 : vector<8x32xf32> to vector<8x32xbf16>
    %c1_164 = arith.constant 1 : index
    %c0_165 = arith.constant 0 : index
    %c0_166 = arith.constant 0 : index
    %362 = vector.load %arg9[%c1_164, %c0_165, %c0_166] : memref<2x32x96xbf16, #tpu.memory_space<vmem>>, vector<1x32x96xbf16>
    %363 = vector.shape_cast %362 : vector<1x32x96xbf16> to vector<32x96xbf16>
    %cst_167 = arith.constant dense<0.000000e+00> : vector<8x96xf32>
    %364 = tpu.matmul %361, %363, %cst_167 {dimension_numbers = #tpu.dot_dimension_numbers<[1], [0], [0], [1], [0, 0, 1, 1], [], []>} : vector<8x32xbf16>, vector<32x96xbf16>, vector<8x96xf32> -> vector<8x96xf32>
    %c1_168 = arith.constant 1 : index
    %c0_169 = arith.constant 0 : index
    %c0_170 = arith.constant 0 : index
    %365 = vector.load %arg10[%c1_168, %c0_169, %c0_170] : memref<2x1x96xf32, #tpu.memory_space<vmem>>, vector<1x1x96xf32>
    %366 = vector.shape_cast %365 : vector<1x1x96xf32> to vector<1x96xf32>
    %367 = vector.broadcast %366 : vector<1x96xf32> to vector<8x96xf32>
    %368 = arith.addf %364, %367 : vector<8x96xf32>
    %369 = arith.truncf %368 : vector<8x96xf32> to vector<8x96xbf16>
    %370 = vector.extract_strided_slice %369 {offsets = [0, 0], sizes = [8, 8], strides = [1, 1]} : vector<8x96xbf16> to vector<8x8xbf16>
    %371 = vector.extract_strided_slice %369 {offsets = [0, 32], sizes = [8, 8], strides = [1, 1]} : vector<8x96xbf16> to vector<8x8xbf16>
    %372 = vector.extract_strided_slice %369 {offsets = [0, 64], sizes = [8, 8], strides = [1, 1]} : vector<8x96xbf16> to vector<8x8xbf16>
    %cst_171 = arith.constant dense<0.000000e+00> : vector<8x8xf32>
    %373 = tpu.matmul %370, %371, %cst_171 {dimension_numbers = #tpu.dot_dimension_numbers<[1], [1], [0], [0], [0, 0, 1, 0], [], []>} : vector<8x8xbf16>, vector<8x8xbf16>, vector<8x8xf32> -> vector<8x8xf32>
    %cst_172 = arith.constant 0.353553385 : f32
    %374 = vector.broadcast %cst_172 : f32 to vector<8x8xf32>
    %375 = arith.mulf %373, %374 : vector<8x8xf32>
    %376 = vector.broadcast %192 : vector<1x8xf32> to vector<8x8xf32>
    %377 = arith.addf %375, %376 : vector<8x8xf32>
    %cst_173 = arith.constant dense<0xFF800000> : vector<8xf32>
    %378 = vector.multi_reduction <maximumf>, %377, %cst_173 [1] : vector<8x8xf32> to vector<8xf32>
    %379 = vector.shape_cast %378 : vector<8xf32> to vector<8x1xf32>
    %380 = vector.broadcast %379 : vector<8x1xf32> to vector<8x8xf32>
    %381 = arith.subf %377, %380 : vector<8x8xf32>
    %382 = math.exp %381 : vector<8x8xf32>
    %cst_174 = arith.constant dense<0.000000e+00> : vector<8xf32>
    %383 = vector.multi_reduction <add>, %382, %cst_174 [1] : vector<8x8xf32> to vector<8xf32>
    %384 = vector.shape_cast %383 : vector<8xf32> to vector<8x1xf32>
    %385 = vector.broadcast %384 : vector<8x1xf32> to vector<8x8xf32>
    %386 = arith.divf %382, %385 : vector<8x8xf32>
    %387 = arith.truncf %386 : vector<8x8xf32> to vector<8x8xbf16>
    %cst_175 = arith.constant dense<0.000000e+00> : vector<8x8xf32>
    %388 = tpu.matmul %387, %372, %cst_175 {dimension_numbers = #tpu.dot_dimension_numbers<[1], [0], [0], [1], [0, 0, 1, 1], [], []>} : vector<8x8xbf16>, vector<8x8xbf16>, vector<8x8xf32> -> vector<8x8xf32>
    %389 = vector.extract_strided_slice %369 {offsets = [0, 8], sizes = [8, 8], strides = [1, 1]} : vector<8x96xbf16> to vector<8x8xbf16>
    %390 = vector.extract_strided_slice %369 {offsets = [0, 40], sizes = [8, 8], strides = [1, 1]} : vector<8x96xbf16> to vector<8x8xbf16>
    %391 = vector.extract_strided_slice %369 {offsets = [0, 72], sizes = [8, 8], strides = [1, 1]} : vector<8x96xbf16> to vector<8x8xbf16>
    %cst_176 = arith.constant dense<0.000000e+00> : vector<8x8xf32>
    %392 = tpu.matmul %389, %390, %cst_176 {dimension_numbers = #tpu.dot_dimension_numbers<[1], [1], [0], [0], [0, 0, 1, 0], [], []>} : vector<8x8xbf16>, vector<8x8xbf16>, vector<8x8xf32> -> vector<8x8xf32>
    %cst_177 = arith.constant 0.353553385 : f32
    %393 = vector.broadcast %cst_177 : f32 to vector<8x8xf32>
    %394 = arith.mulf %392, %393 : vector<8x8xf32>
    %395 = vector.broadcast %192 : vector<1x8xf32> to vector<8x8xf32>
    %396 = arith.addf %394, %395 : vector<8x8xf32>
    %cst_178 = arith.constant dense<0xFF800000> : vector<8xf32>
    %397 = vector.multi_reduction <maximumf>, %396, %cst_178 [1] : vector<8x8xf32> to vector<8xf32>
    %398 = vector.shape_cast %397 : vector<8xf32> to vector<8x1xf32>
    %399 = vector.broadcast %398 : vector<8x1xf32> to vector<8x8xf32>
    %400 = arith.subf %396, %399 : vector<8x8xf32>
    %401 = math.exp %400 : vector<8x8xf32>
    %cst_179 = arith.constant dense<0.000000e+00> : vector<8xf32>
    %402 = vector.multi_reduction <add>, %401, %cst_179 [1] : vector<8x8xf32> to vector<8xf32>
    %403 = vector.shape_cast %402 : vector<8xf32> to vector<8x1xf32>
    %404 = vector.broadcast %403 : vector<8x1xf32> to vector<8x8xf32>
    %405 = arith.divf %401, %404 : vector<8x8xf32>
    %406 = arith.truncf %405 : vector<8x8xf32> to vector<8x8xbf16>
    %cst_180 = arith.constant dense<0.000000e+00> : vector<8x8xf32>
    %407 = tpu.matmul %406, %391, %cst_180 {dimension_numbers = #tpu.dot_dimension_numbers<[1], [0], [0], [1], [0, 0, 1, 1], [], []>} : vector<8x8xbf16>, vector<8x8xbf16>, vector<8x8xf32> -> vector<8x8xf32>
    %408 = vector.extract_strided_slice %369 {offsets = [0, 16], sizes = [8, 8], strides = [1, 1]} : vector<8x96xbf16> to vector<8x8xbf16>
    %409 = vector.extract_strided_slice %369 {offsets = [0, 48], sizes = [8, 8], strides = [1, 1]} : vector<8x96xbf16> to vector<8x8xbf16>
    %410 = vector.extract_strided_slice %369 {offsets = [0, 80], sizes = [8, 8], strides = [1, 1]} : vector<8x96xbf16> to vector<8x8xbf16>
    %cst_181 = arith.constant dense<0.000000e+00> : vector<8x8xf32>
    %411 = tpu.matmul %408, %409, %cst_181 {dimension_numbers = #tpu.dot_dimension_numbers<[1], [1], [0], [0], [0, 0, 1, 0], [], []>} : vector<8x8xbf16>, vector<8x8xbf16>, vector<8x8xf32> -> vector<8x8xf32>
    %cst_182 = arith.constant 0.353553385 : f32
    %412 = vector.broadcast %cst_182 : f32 to vector<8x8xf32>
    %413 = arith.mulf %411, %412 : vector<8x8xf32>
    %414 = vector.broadcast %192 : vector<1x8xf32> to vector<8x8xf32>
    %415 = arith.addf %413, %414 : vector<8x8xf32>
    %cst_183 = arith.constant dense<0xFF800000> : vector<8xf32>
    %416 = vector.multi_reduction <maximumf>, %415, %cst_183 [1] : vector<8x8xf32> to vector<8xf32>
    %417 = vector.shape_cast %416 : vector<8xf32> to vector<8x1xf32>
    %418 = vector.broadcast %417 : vector<8x1xf32> to vector<8x8xf32>
    %419 = arith.subf %415, %418 : vector<8x8xf32>
    %420 = math.exp %419 : vector<8x8xf32>
    %cst_184 = arith.constant dense<0.000000e+00> : vector<8xf32>
    %421 = vector.multi_reduction <add>, %420, %cst_184 [1] : vector<8x8xf32> to vector<8xf32>
    %422 = vector.shape_cast %421 : vector<8xf32> to vector<8x1xf32>
    %423 = vector.broadcast %422 : vector<8x1xf32> to vector<8x8xf32>
    %424 = arith.divf %420, %423 : vector<8x8xf32>
    %425 = arith.truncf %424 : vector<8x8xf32> to vector<8x8xbf16>
    %cst_185 = arith.constant dense<0.000000e+00> : vector<8x8xf32>
    %426 = tpu.matmul %425, %410, %cst_185 {dimension_numbers = #tpu.dot_dimension_numbers<[1], [0], [0], [1], [0, 0, 1, 1], [], []>} : vector<8x8xbf16>, vector<8x8xbf16>, vector<8x8xf32> -> vector<8x8xf32>
    %427 = vector.extract_strided_slice %369 {offsets = [0, 24], sizes = [8, 8], strides = [1, 1]} : vector<8x96xbf16> to vector<8x8xbf16>
    %428 = vector.extract_strided_slice %369 {offsets = [0, 56], sizes = [8, 8], strides = [1, 1]} : vector<8x96xbf16> to vector<8x8xbf16>
    %429 = vector.extract_strided_slice %369 {offsets = [0, 88], sizes = [8, 8], strides = [1, 1]} : vector<8x96xbf16> to vector<8x8xbf16>
    %cst_186 = arith.constant dense<0.000000e+00> : vector<8x8xf32>
    %430 = tpu.matmul %427, %428, %cst_186 {dimension_numbers = #tpu.dot_dimension_numbers<[1], [1], [0], [0], [0, 0, 1, 0], [], []>} : vector<8x8xbf16>, vector<8x8xbf16>, vector<8x8xf32> -> vector<8x8xf32>
    %cst_187 = arith.constant 0.353553385 : f32
    %431 = vector.broadcast %cst_187 : f32 to vector<8x8xf32>
    %432 = arith.mulf %430, %431 : vector<8x8xf32>
    %433 = vector.broadcast %192 : vector<1x8xf32> to vector<8x8xf32>
    %434 = arith.addf %432, %433 : vector<8x8xf32>
    %cst_188 = arith.constant dense<0xFF800000> : vector<8xf32>
    %435 = vector.multi_reduction <maximumf>, %434, %cst_188 [1] : vector<8x8xf32> to vector<8xf32>
    %436 = vector.shape_cast %435 : vector<8xf32> to vector<8x1xf32>
    %437 = vector.broadcast %436 : vector<8x1xf32> to vector<8x8xf32>
    %438 = arith.subf %434, %437 : vector<8x8xf32>
    %439 = math.exp %438 : vector<8x8xf32>
    %cst_189 = arith.constant dense<0.000000e+00> : vector<8xf32>
    %440 = vector.multi_reduction <add>, %439, %cst_189 [1] : vector<8x8xf32> to vector<8xf32>
    %441 = vector.shape_cast %440 : vector<8xf32> to vector<8x1xf32>
    %442 = vector.broadcast %441 : vector<8x1xf32> to vector<8x8xf32>
    %443 = arith.divf %439, %442 : vector<8x8xf32>
    %444 = arith.truncf %443 : vector<8x8xf32> to vector<8x8xbf16>
    %cst_190 = arith.constant dense<0.000000e+00> : vector<8x8xf32>
    %445 = tpu.matmul %444, %429, %cst_190 {dimension_numbers = #tpu.dot_dimension_numbers<[1], [0], [0], [1], [0, 0, 1, 1], [], []>} : vector<8x8xbf16>, vector<8x8xbf16>, vector<8x8xf32> -> vector<8x8xf32>
    %446 = tpu.concatenate %388, %407, %426, %445 in 1 : vector<8x8xf32>, vector<8x8xf32>, vector<8x8xf32>, vector<8x8xf32> -> vector<8x32xf32>
    %447 = arith.truncf %446 : vector<8x32xf32> to vector<8x32xbf16>
    %c1_191 = arith.constant 1 : index
    %c0_192 = arith.constant 0 : index
    %c0_193 = arith.constant 0 : index
    %448 = vector.load %arg11[%c1_191, %c0_192, %c0_193] : memref<2x32x32xbf16, #tpu.memory_space<vmem>>, vector<1x32x32xbf16>
    %449 = vector.shape_cast %448 : vector<1x32x32xbf16> to vector<32x32xbf16>
    %cst_194 = arith.constant dense<0.000000e+00> : vector<8x32xf32>
    %450 = tpu.matmul %447, %449, %cst_194 {dimension_numbers = #tpu.dot_dimension_numbers<[1], [0], [0], [1], [0, 0, 1, 1], [], []>} : vector<8x32xbf16>, vector<32x32xbf16>, vector<8x32xf32> -> vector<8x32xf32>
    %c1_195 = arith.constant 1 : index
    %c0_196 = arith.constant 0 : index
    %c0_197 = arith.constant 0 : index
    %451 = vector.load %arg12[%c1_195, %c0_196, %c0_197] : memref<2x1x32xf32, #tpu.memory_space<vmem>>, vector<1x1x32xf32>
    %452 = vector.shape_cast %451 : vector<1x1x32xf32> to vector<1x32xf32>
    %453 = vector.broadcast %452 : vector<1x32xf32> to vector<8x32xf32>
    %454 = arith.addf %450, %453 : vector<8x32xf32>
    %455 = arith.addf %454, %360 : vector<8x32xf32>
    %c1_198 = arith.constant 1 : index
    %c0_199 = arith.constant 0 : index
    %c0_200 = arith.constant 0 : index
    %456 = vector.load %arg13[%c1_198, %c0_199, %c0_200] : memref<2x1x32xf32, #tpu.memory_space<vmem>>, vector<1x1x32xf32>
    %457 = vector.shape_cast %456 : vector<1x1x32xf32> to vector<1x32xf32>
    %c1_201 = arith.constant 1 : index
    %c0_202 = arith.constant 0 : index
    %c0_203 = arith.constant 0 : index
    %458 = vector.load %arg14[%c1_201, %c0_202, %c0_203] : memref<2x1x32xf32, #tpu.memory_space<vmem>>, vector<1x1x32xf32>
    %459 = vector.shape_cast %458 : vector<1x1x32xf32> to vector<1x32xf32>
    %cst_204 = arith.constant dense<0.000000e+00> : vector<8xf32>
    %460 = vector.multi_reduction <add>, %455, %cst_204 [1] : vector<8x32xf32> to vector<8xf32>
    %461 = vector.shape_cast %460 : vector<8xf32> to vector<8x1xf32>
    %cst_205 = arith.constant 3.200000e+01 : f32
    %462 = vector.broadcast %cst_205 : f32 to vector<8x1xf32>
    %463 = arith.divf %461, %462 : vector<8x1xf32>
    %464 = vector.broadcast %463 : vector<8x1xf32> to vector<8x32xf32>
    %465 = arith.subf %455, %464 : vector<8x32xf32>
    %466 = arith.mulf %465, %465 : vector<8x32xf32>
    %cst_206 = arith.constant dense<0.000000e+00> : vector<8xf32>
    %467 = vector.multi_reduction <add>, %466, %cst_206 [1] : vector<8x32xf32> to vector<8xf32>
    %468 = vector.shape_cast %467 : vector<8xf32> to vector<8x1xf32>
    %cst_207 = arith.constant 3.200000e+01 : f32
    %469 = vector.broadcast %cst_207 : f32 to vector<8x1xf32>
    %470 = arith.divf %468, %469 : vector<8x1xf32>
    %cst_208 = arith.constant 9.99999996E-13 : f32
    %471 = vector.broadcast %cst_208 : f32 to vector<8x1xf32>
    %472 = arith.addf %470, %471 : vector<8x1xf32>
    %473 = math.rsqrt %472 : vector<8x1xf32>
    %474 = vector.broadcast %473 : vector<8x1xf32> to vector<8x32xf32>
    %475 = arith.mulf %465, %474 : vector<8x32xf32>
    %476 = vector.broadcast %457 : vector<1x32xf32> to vector<8x32xf32>
    %477 = arith.mulf %475, %476 : vector<8x32xf32>
    %478 = vector.broadcast %459 : vector<1x32xf32> to vector<8x32xf32>
    %479 = arith.addf %477, %478 : vector<8x32xf32>
    %480 = arith.truncf %479 : vector<8x32xf32> to vector<8x32xbf16>
    %c1_209 = arith.constant 1 : index
    %c0_210 = arith.constant 0 : index
    %c0_211 = arith.constant 0 : index
    %481 = vector.load %arg15[%c1_209, %c0_210, %c0_211] : memref<2x32x64xbf16, #tpu.memory_space<vmem>>, vector<1x32x64xbf16>
    %482 = vector.shape_cast %481 : vector<1x32x64xbf16> to vector<32x64xbf16>
    %cst_212 = arith.constant dense<0.000000e+00> : vector<8x64xf32>
    %483 = tpu.matmul %480, %482, %cst_212 {dimension_numbers = #tpu.dot_dimension_numbers<[1], [0], [0], [1], [0, 0, 1, 1], [], []>} : vector<8x32xbf16>, vector<32x64xbf16>, vector<8x64xf32> -> vector<8x64xf32>
    %c1_213 = arith.constant 1 : index
    %c0_214 = arith.constant 0 : index
    %c0_215 = arith.constant 0 : index
    %484 = vector.load %arg16[%c1_213, %c0_214, %c0_215] : memref<2x1x64xf32, #tpu.memory_space<vmem>>, vector<1x1x64xf32>
    %485 = vector.shape_cast %484 : vector<1x1x64xf32> to vector<1x64xf32>
    %486 = vector.broadcast %485 : vector<1x64xf32> to vector<8x64xf32>
    %487 = arith.addf %483, %486 : vector<8x64xf32>
    %cst_216 = arith.constant 5.000000e-01 : f32
    %488 = vector.broadcast %cst_216 : f32 to vector<8x64xf32>
    %489 = arith.mulf %487, %488 : vector<8x64xf32>
    %cst_217 = arith.constant 0.707106769 : f32
    %490 = vector.broadcast %cst_217 : f32 to vector<8x64xf32>
    %491 = arith.mulf %487, %490 : vector<8x64xf32>
    %492 = math.erf %491 : vector<8x64xf32>
    %cst_218 = arith.constant 1.000000e+00 : f32
    %493 = vector.broadcast %cst_218 : f32 to vector<8x64xf32>
    %494 = arith.addf %493, %492 : vector<8x64xf32>
    %495 = arith.mulf %489, %494 : vector<8x64xf32>
    %496 = arith.truncf %495 : vector<8x64xf32> to vector<8x64xbf16>
    %c1_219 = arith.constant 1 : index
    %c0_220 = arith.constant 0 : index
    %c0_221 = arith.constant 0 : index
    %497 = vector.load %arg17[%c1_219, %c0_220, %c0_221] : memref<2x64x32xbf16, #tpu.memory_space<vmem>>, vector<1x64x32xbf16>
    %498 = vector.shape_cast %497 : vector<1x64x32xbf16> to vector<64x32xbf16>
    %cst_222 = arith.constant dense<0.000000e+00> : vector<8x32xf32>
    %499 = tpu.matmul %496, %498, %cst_222 {dimension_numbers = #tpu.dot_dimension_numbers<[1], [0], [0], [1], [0, 0, 1, 1], [], []>} : vector<8x64xbf16>, vector<64x32xbf16>, vector<8x32xf32> -> vector<8x32xf32>
    %c1_223 = arith.constant 1 : index
    %c0_224 = arith.constant 0 : index
    %c0_225 = arith.constant 0 : index
    %500 = vector.load %arg18[%c1_223, %c0_224, %c0_225] : memref<2x1x32xf32, #tpu.memory_space<vmem>>, vector<1x1x32xf32>
    %501 = vector.shape_cast %500 : vector<1x1x32xf32> to vector<1x32xf32>
    %502 = vector.broadcast %501 : vector<1x32xf32> to vector<8x32xf32>
    %503 = arith.addf %499, %502 : vector<8x32xf32>
    %504 = arith.addf %503, %479 : vector<8x32xf32>
    %c1_226 = arith.constant 1 : index
    %c0_227 = arith.constant 0 : index
    %c0_228 = arith.constant 0 : index
    %505 = vector.load %arg19[%c1_226, %c0_227, %c0_228] : memref<2x1x32xf32, #tpu.memory_space<vmem>>, vector<1x1x32xf32>
    %506 = vector.shape_cast %505 : vector<1x1x32xf32> to vector<1x32xf32>
    %c1_229 = arith.constant 1 : index
    %c0_230 = arith.constant 0 : index
    %c0_231 = arith.constant 0 : index
    %507 = vector.load %arg20[%c1_229, %c0_230, %c0_231] : memref<2x1x32xf32, #tpu.memory_space<vmem>>, vector<1x1x32xf32>
    %508 = vector.shape_cast %507 : vector<1x1x32xf32> to vector<1x32xf32>
    %cst_232 = arith.constant dense<0.000000e+00> : vector<8xf32>
    %509 = vector.multi_reduction <add>, %504, %cst_232 [1] : vector<8x32xf32> to vector<8xf32>
    %510 = vector.shape_cast %509 : vector<8xf32> to vector<8x1xf32>
    %cst_233 = arith.constant 3.200000e+01 : f32
    %511 = vector.broadcast %cst_233 : f32 to vector<8x1xf32>
    %512 = arith.divf %510, %511 : vector<8x1xf32>
    %513 = vector.broadcast %512 : vector<8x1xf32> to vector<8x32xf32>
    %514 = arith.subf %504, %513 : vector<8x32xf32>
    %515 = arith.mulf %514, %514 : vector<8x32xf32>
    %cst_234 = arith.constant dense<0.000000e+00> : vector<8xf32>
    %516 = vector.multi_reduction <add>, %515, %cst_234 [1] : vector<8x32xf32> to vector<8xf32>
    %517 = vector.shape_cast %516 : vector<8xf32> to vector<8x1xf32>
    %cst_235 = arith.constant 3.200000e+01 : f32
    %518 = vector.broadcast %cst_235 : f32 to vector<8x1xf32>
    %519 = arith.divf %517, %518 : vector<8x1xf32>
    %cst_236 = arith.constant 9.99999996E-13 : f32
    %520 = vector.broadcast %cst_236 : f32 to vector<8x1xf32>
    %521 = arith.addf %519, %520 : vector<8x1xf32>
    %522 = math.rsqrt %521 : vector<8x1xf32>
    %523 = vector.broadcast %522 : vector<8x1xf32> to vector<8x32xf32>
    %524 = arith.mulf %514, %523 : vector<8x32xf32>
    %525 = vector.broadcast %506 : vector<1x32xf32> to vector<8x32xf32>
    %526 = arith.mulf %524, %525 : vector<8x32xf32>
    %527 = vector.broadcast %508 : vector<1x32xf32> to vector<8x32xf32>
    %528 = arith.addf %526, %527 : vector<8x32xf32>
    %529 = vector.extract_strided_slice %528 {offsets = [0, 0], sizes = [1, 32], strides = [1, 1]} : vector<8x32xf32> to vector<1x32xf32>
    %530 = arith.truncf %529 : vector<1x32xf32> to vector<1x32xbf16>
    %c0_237 = arith.constant 0 : index
    %c0_238 = arith.constant 0 : index
    %531 = vector.load %arg21[%c0_237, %c0_238] : memref<32x32xbf16, #tpu.memory_space<vmem>>, vector<32x32xbf16>
    %cst_239 = arith.constant dense<0.000000e+00> : vector<1x32xf32>
    %532 = tpu.matmul %530, %531, %cst_239 {dimension_numbers = #tpu.dot_dimension_numbers<[1], [0], [0], [1], [0, 0, 1, 1], [], []>} : vector<1x32xbf16>, vector<32x32xbf16>, vector<1x32xf32> -> vector<1x32xf32>
    %c0_240 = arith.constant 0 : index
    %c0_241 = arith.constant 0 : index
    %533 = vector.load %arg22[%c0_240, %c0_241] : memref<1x32xf32, #tpu.memory_space<vmem>>, vector<1x32xf32>
    %534 = arith.addf %532, %533 : vector<1x32xf32>
    %535 = math.tanh %534 : vector<1x32xf32>
    %536 = arith.truncf %535 : vector<1x32xf32> to vector<1x32xbf16>
    %c0_242 = arith.constant 0 : index
    %c0_243 = arith.constant 0 : index
    %537 = vector.load %arg23[%c0_242, %c0_243] : memref<32x3xbf16, #tpu.memory_space<vmem>>, vector<32x3xbf16>
    %cst_244 = arith.constant dense<0.000000e+00> : vector<1x3xf32>
    %538 = tpu.matmul %536, %537, %cst_244 {dimension_numbers = #tpu.dot_dimension_numbers<[1], [0], [0], [1], [0, 0, 1, 1], [], []>} : vector<1x32xbf16>, vector<32x3xbf16>, vector<1x3xf32> -> vector<1x3xf32>
    %c0_245 = arith.constant 0 : index
    %c0_246 = arith.constant 0 : index
    %539 = vector.load %arg24[%c0_245, %c0_246] : memref<1x3xf32, #tpu.memory_space<vmem>>, vector<1x3xf32>
    %540 = arith.addf %538, %539 : vector<1x3xf32>
    %c0_247 = arith.constant 0 : index
    %c0_248 = arith.constant 0 : index
    %c0_249 = arith.constant 0 : index
    %541 = vector.load %arg25[%c0_247, %c0_248, %c0_249] : memref<1x1x3xf32, #tpu.memory_space<vmem>>, vector<1x1x3xf32>
    %542 = vector.shape_cast %541 : vector<1x1x3xf32> to vector<1x3xf32>
    %543 = vector.shape_cast %540 : vector<1x3xf32> to vector<1x1x3xf32>
    tpu.vector_store %arg25[%c0_247, %c0_248, %c0_249], %543 {strides = array<i32>} : memref<1x1x3xf32, #tpu.memory_space<vmem>>, vector<1x1x3xf32>,
    return
  }
  func.func @transform_0(%arg0: i32, %arg1: memref<2x8xi32, #tpu.memory_space<smem>>, %arg2: memref<2x8xi32, #tpu.memory_space<smem>>, %arg3: memref<2x8xi32, #tpu.memory_space<smem>>) -> (i32, i32) {
    %c0_i32 = arith.constant 0 : i32
    %c0_i32_0 = arith.constant 0 : i32
    %c0_i32_1 = arith.constant 0 : i32
    return %c0_i32, %c0_i32_0 : i32, i32
  }
  func.func @transform_1(%arg0: i32, %arg1: memref<2x8xi32, #tpu.memory_space<smem>>, %arg2: memref<2x8xi32, #tpu.memory_space<smem>>, %arg3: memref<2x8xi32, #tpu.memory_space<smem>>) -> (i32, i32) {
    %c0_i32 = arith.constant 0 : i32
    %c0_i32_0 = arith.constant 0 : i32
    %c0_i32_1 = arith.constant 0 : i32
    return %c0_i32, %c0_i32_0 : i32, i32
  }
  func.func @transform_2(%arg0: i32, %arg1: memref<2x8xi32, #tpu.memory_space<smem>>, %arg2: memref<2x8xi32, #tpu.memory_space<smem>>, %arg3: memref<2x8xi32, #tpu.memory_space<smem>>) -> (i32, i32) {
    %c0_i32 = arith.constant 0 : i32
    %c0_i32_0 = arith.constant 0 : i32
    %c0_i32_1 = arith.constant 0 : i32
    return %c0_i32, %c0_i32_0 : i32, i32
  }
  func.func @transform_3(%arg0: i32, %arg1: memref<2x8xi32, #tpu.memory_space<smem>>, %arg2: memref<2x8xi32, #tpu.memory_space<smem>>, %arg3: memref<2x8xi32, #tpu.memory_space<smem>>) -> (i32, i32) {
    %c0_i32 = arith.constant 0 : i32
    %c0_i32_0 = arith.constant 0 : i32
    %c0_i32_1 = arith.constant 0 : i32
    return %c0_i32, %c0_i32_0 : i32, i32
  }
  func.func @transform_4(%arg0: i32, %arg1: memref<2x8xi32, #tpu.memory_space<smem>>, %arg2: memref<2x8xi32, #tpu.memory_space<smem>>, %arg3: memref<2x8xi32, #tpu.memory_space<smem>>) -> (i32, i32) {
    %c0_i32 = arith.constant 0 : i32
    %c0_i32_0 = arith.constant 0 : i32
    %c0_i32_1 = arith.constant 0 : i32
    return %c0_i32, %c0_i32_0 : i32, i32
  }
  func.func @transform_5(%arg0: i32, %arg1: memref<2x8xi32, #tpu.memory_space<smem>>, %arg2: memref<2x8xi32, #tpu.memory_space<smem>>, %arg3: memref<2x8xi32, #tpu.memory_space<smem>>) -> (i32, i32, i32) {
    %c0_i32 = arith.constant 0 : i32
    %c0_i32_0 = arith.constant 0 : i32
    %c0_i32_1 = arith.constant 0 : i32
    %c0_i32_2 = arith.constant 0 : i32
    return %c0_i32, %c0_i32_0, %c0_i32_1 : i32, i32, i32
  }
  func.func @transform_6(%arg0: i32, %arg1: memref<2x8xi32, #tpu.memory_space<smem>>, %arg2: memref<2x8xi32, #tpu.memory_space<smem>>, %arg3: memref<2x8xi32, #tpu.memory_space<smem>>) -> (i32, i32, i32) {
    %c0_i32 = arith.constant 0 : i32
    %c0_i32_0 = arith.constant 0 : i32
    %c0_i32_1 = arith.constant 0 : i32
    %c0_i32_2 = arith.constant 0 : i32
    return %c0_i32, %c0_i32_0, %c0_i32_1 : i32, i32, i32
  }
  func.func @transform_7(%arg0: i32, %arg1: memref<2x8xi32, #tpu.memory_space<smem>>, %arg2: memref<2x8xi32, #tpu.memory_space<smem>>, %arg3: memref<2x8xi32, #tpu.memory_space<smem>>) -> (i32, i32, i32) {
    %c0_i32 = arith.constant 0 : i32
    %c0_i32_0 = arith.constant 0 : i32
    %c0_i32_1 = arith.constant 0 : i32
    %c0_i32_2 = arith.constant 0 : i32
    return %c0_i32, %c0_i32_0, %c0_i32_1 : i32, i32, i32
  }
  func.func @transform_8(%arg0: i32, %arg1: memref<2x8xi32, #tpu.memory_space<smem>>, %arg2: memref<2x8xi32, #tpu.memory_space<smem>>, %arg3: memref<2x8xi32, #tpu.memory_space<smem>>) -> (i32, i32, i32) {
    %c0_i32 = arith.constant 0 : i32
    %c0_i32_0 = arith.constant 0 : i32
    %c0_i32_1 = arith.constant 0 : i32
    %c0_i32_2 = arith.constant 0 : i32
    return %c0_i32, %c0_i32_0, %c0_i32_1 : i32, i32, i32
  }
  func.func @transform_9(%arg0: i32, %arg1: memref<2x8xi32, #tpu.memory_space<smem>>, %arg2: memref<2x8xi32, #tpu.memory_space<smem>>, %arg3: memref<2x8xi32, #tpu.memory_space<smem>>) -> (i32, i32, i32) {
    %c0_i32 = arith.constant 0 : i32
    %c0_i32_0 = arith.constant 0 : i32
    %c0_i32_1 = arith.constant 0 : i32
    %c0_i32_2 = arith.constant 0 : i32
    return %c0_i32, %c0_i32_0, %c0_i32_1 : i32, i32, i32
  }
  func.func @transform_10(%arg0: i32, %arg1: memref<2x8xi32, #tpu.memory_space<smem>>, %arg2: memref<2x8xi32, #tpu.memory_space<smem>>, %arg3: memref<2x8xi32, #tpu.memory_space<smem>>) -> (i32, i32, i32) {
    %c0_i32 = arith.constant 0 : i32
    %c0_i32_0 = arith.constant 0 : i32
    %c0_i32_1 = arith.constant 0 : i32
    %c0_i32_2 = arith.constant 0 : i32
    return %c0_i32, %c0_i32_0, %c0_i32_1 : i32, i32, i32
  }
  func.func @transform_11(%arg0: i32, %arg1: memref<2x8xi32, #tpu.memory_space<smem>>, %arg2: memref<2x8xi32, #tpu.memory_space<smem>>, %arg3: memref<2x8xi32, #tpu.memory_space<smem>>) -> (i32, i32, i32) {
    %c0_i32 = arith.constant 0 : i32
    %c0_i32_0 = arith.constant 0 : i32
    %c0_i32_1 = arith.constant 0 : i32
    %c0_i32_2 = arith.constant 0 : i32
    return %c0_i32, %c0_i32_0, %c0_i32_1 : i32, i32, i32
  }
  func.func @transform_12(%arg0: i32, %arg1: memref<2x8xi32, #tpu.memory_space<smem>>, %arg2: memref<2x8xi32, #tpu.memory_space<smem>>, %arg3: memref<2x8xi32, #tpu.memory_space<smem>>) -> (i32, i32, i32) {
    %c0_i32 = arith.constant 0 : i32
    %c0_i32_0 = arith.constant 0 : i32
    %c0_i32_1 = arith.constant 0 : i32
    %c0_i32_2 = arith.constant 0 : i32
    return %c0_i32, %c0_i32_0, %c0_i32_1 : i32, i32, i32
  }
  func.func @transform_13(%arg0: i32, %arg1: memref<2x8xi32, #tpu.memory_space<smem>>, %arg2: memref<2x8xi32, #tpu.memory_space<smem>>, %arg3: memref<2x8xi32, #tpu.memory_space<smem>>) -> (i32, i32, i32) {
    %c0_i32 = arith.constant 0 : i32
    %c0_i32_0 = arith.constant 0 : i32
    %c0_i32_1 = arith.constant 0 : i32
    %c0_i32_2 = arith.constant 0 : i32
    return %c0_i32, %c0_i32_0, %c0_i32_1 : i32, i32, i32
  }
  func.func @transform_14(%arg0: i32, %arg1: memref<2x8xi32, #tpu.memory_space<smem>>, %arg2: memref<2x8xi32, #tpu.memory_space<smem>>, %arg3: memref<2x8xi32, #tpu.memory_space<smem>>) -> (i32, i32, i32) {
    %c0_i32 = arith.constant 0 : i32
    %c0_i32_0 = arith.constant 0 : i32
    %c0_i32_1 = arith.constant 0 : i32
    %c0_i32_2 = arith.constant 0 : i32
    return %c0_i32, %c0_i32_0, %c0_i32_1 : i32, i32, i32
  }
  func.func @transform_15(%arg0: i32, %arg1: memref<2x8xi32, #tpu.memory_space<smem>>, %arg2: memref<2x8xi32, #tpu.memory_space<smem>>, %arg3: memref<2x8xi32, #tpu.memory_space<smem>>) -> (i32, i32, i32) {
    %c0_i32 = arith.constant 0 : i32
    %c0_i32_0 = arith.constant 0 : i32
    %c0_i32_1 = arith.constant 0 : i32
    %c0_i32_2 = arith.constant 0 : i32
    return %c0_i32, %c0_i32_0, %c0_i32_1 : i32, i32, i32
  }
  func.func @transform_16(%arg0: i32, %arg1: memref<2x8xi32, #tpu.memory_space<smem>>, %arg2: memref<2x8xi32, #tpu.memory_space<smem>>, %arg3: memref<2x8xi32, #tpu.memory_space<smem>>) -> (i32, i32, i32) {
    %c0_i32 = arith.constant 0 : i32
    %c0_i32_0 = arith.constant 0 : i32
    %c0_i32_1 = arith.constant 0 : i32
    %c0_i32_2 = arith.constant 0 : i32
    return %c0_i32, %c0_i32_0, %c0_i32_1 : i32, i32, i32
  }
  func.func @transform_17(%arg0: i32, %arg1: memref<2x8xi32, #tpu.memory_space<smem>>, %arg2: memref<2x8xi32, #tpu.memory_space<smem>>, %arg3: memref<2x8xi32, #tpu.memory_space<smem>>) -> (i32, i32) {
    %c0_i32 = arith.constant 0 : i32
    %c0_i32_0 = arith.constant 0 : i32
    %c0_i32_1 = arith.constant 0 : i32
    return %c0_i32, %c0_i32_0 : i32, i32
  }
  func.func @transform_18(%arg0: i32, %arg1: memref<2x8xi32, #tpu.memory_space<smem>>, %arg2: memref<2x8xi32, #tpu.memory_space<smem>>, %arg3: memref<2x8xi32, #tpu.memory_space<smem>>) -> (i32, i32) {
    %c0_i32 = arith.constant 0 : i32
    %c0_i32_0 = arith.constant 0 : i32
    %c0_i32_1 = arith.constant 0 : i32
    return %c0_i32, %c0_i32_0 : i32, i32
  }
  func.func @transform_19(%arg0: i32, %arg1: memref<2x8xi32, #tpu.memory_space<smem>>, %arg2: memref<2x8xi32, #tpu.memory_space<smem>>, %arg3: memref<2x8xi32, #tpu.memory_space<smem>>) -> (i32, i32) {
    %c0_i32 = arith.constant 0 : i32
    %c0_i32_0 = arith.constant 0 : i32
    %c0_i32_1 = arith.constant 0 : i32
    return %c0_i32, %c0_i32_0 : i32, i32
  }
  func.func @transform_20(%arg0: i32, %arg1: memref<2x8xi32, #tpu.memory_space<smem>>, %arg2: memref<2x8xi32, #tpu.memory_space<smem>>, %arg3: memref<2x8xi32, #tpu.memory_space<smem>>) -> (i32, i32) {
    %c0_i32 = arith.constant 0 : i32
    %c0_i32_0 = arith.constant 0 : i32
    %c0_i32_1 = arith.constant 0 : i32
    return %c0_i32, %c0_i32_0 : i32, i32
  }
  func.func @transform_21(%arg0: i32, %arg1: memref<2x8xi32, #tpu.memory_space<smem>>, %arg2: memref<2x8xi32, #tpu.memory_space<smem>>, %arg3: memref<2x8xi32, #tpu.memory_space<smem>>) -> (i32, i32, i32) {
    %c0_i32 = arith.constant 0 : i32
    %c0_i32_0 = arith.constant 0 : i32
    %c0_i32_1 = arith.constant 0 : i32
    return %arg0, %c0_i32, %c0_i32_0 : i32, i32, i32
  }
}

</mosaic_0001>

<llo_original>
// kernel: bert_cl_forward.1
$region0: #{bert_cl_forward.1}
  #allocation0 [shape = 'u32[]', space=smem, size = 0x4, offset = 0x4, fixed_abs, tag = 'smem constant byte address 0x4 - core index']
  #allocation1 [shape = 'u32[72,128]{1,0:T(1,128)}', space=vmem, size = 0x9000, scoped, tag = 'internal scratch']
  #allocation2 [shape = 'f32[8,32]{1,0:T(8,128)}', space=vmem, size = 0x1000, scoped, tag = 'scratch operand']
  #allocation3 [shape = 's32[1]{0}', space=sflag, size = 0x4, scoped, tag = 'scoped memory for bert_cl_forward.1']
  #allocation4 [shape = 'u8[1024]{0}', space=smem, size = 0x400, scoped, tag = 'prefetched SMEM operand 0']
  #allocation5 [shape = 'u8[1024]{0}', space=smem, size = 0x400, scoped, tag = 'prefetched SMEM operand 1']
  #allocation6 [shape = 'u8[1024]{0}', space=smem, size = 0x400, scoped, tag = 'prefetched SMEM operand 2']
  %s0 = inlined_call_operand.vmem [shape: s32[2,8], index: 0, kind: input, shape index: {}]
  %s1 = inlined_call_operand.vmem [shape: s32[2,8], index: 1, kind: input, shape index: {}]
  %s2 = inlined_call_operand.vmem [shape: s32[2,8], index: 2, kind: input, shape index: {}]
  %s3 = inlined_call_operand.vmem [shape: f32[128,32], index: 3, kind: input, shape index: {}]
  %s4 = inlined_call_operand.vmem [shape: f32[32,32], index: 4, kind: input, shape index: {}]
  %s5 = inlined_call_operand.vmem [shape: f32[2,32], index: 5, kind: input, shape index: {}]
  %s6 = inlined_call_operand.vmem [shape: f32[1,32], index: 6, kind: input, shape index: {}]
  %s7 = inlined_call_operand.vmem [shape: f32[1,32], index: 7, kind: input, shape index: {}]
  %s8 = inlined_call_operand.vmem [shape: bf16[2,32,96], index: 8, kind: input, shape index: {}]
  %s9 = inlined_call_operand.vmem [shape: f32[2,1,96], index: 9, kind: input, shape index: {}]
  %s10 = inlined_call_operand.vmem [shape: bf16[2,32,32], index: 10, kind: input, shape index: {}]
  %s11 = inlined_call_operand.vmem [shape: f32[2,1,32], index: 11, kind: input, shape index: {}]
  %s12 = inlined_call_operand.vmem [shape: f32[2,1,32], index: 12, kind: input, shape index: {}]
  %s13 = inlined_call_operand.vmem [shape: f32[2,1,32], index: 13, kind: input, shape index: {}]
  %s14 = inlined_call_operand.vmem [shape: bf16[2,32,64], index: 14, kind: input, shape index: {}]
  %s15 = inlined_call_operand.vmem [shape: f32[2,1,64], index: 15, kind: input, shape index: {}]
  %s16 = inlined_call_operand.vmem [shape: bf16[2,64,32], index: 16, kind: input, shape index: {}]
  %s17 = inlined_call_operand.vmem [shape: f32[2,1,32], index: 17, kind: input, shape index: {}]
  %s18 = inlined_call_operand.vmem [shape: f32[2,1,32], index: 18, kind: input, shape index: {}]
  %s19 = inlined_call_operand.vmem [shape: f32[2,1,32], index: 19, kind: input, shape index: {}]
  %s20 = inlined_call_operand.vmem [shape: bf16[32,32], index: 20, kind: input, shape index: {}]
  %s21 = inlined_call_operand.vmem [shape: f32[1,32], index: 21, kind: input, shape index: {}]
  %s22 = inlined_call_operand.vmem [shape: bf16[32,3], index: 22, kind: input, shape index: {}]
  %s23 = inlined_call_operand.vmem [shape: f32[1,3], index: 23, kind: input, shape index: {}]
  %s24 = inlined_call_operand.hbm [shape: f32[2,1,3], index: 24, kind: output, shape index: {}]
  %s25 = sld [smem:[#allocation0]]
  $region117: #{bert_cl_forward.1} parent=0
    _
  %s27 = ssub.s32 1, %s25
  %s28 = scalar_select 0, %s27, %s25
  %s30 = sshll.u32 %s0, 4
  %s31 = int_to_ptr.vmem [resolvable:$true] %s30
  %33 = dma.vmem_to_smem %s31, 32, [#allocation4], [#allocation3]
  %s35 = sshll.u32 %s1, 4
  %s36 = int_to_ptr.vmem [resolvable:$true] %s35
  %38 = dma.vmem_to_smem %s36, 32, [#allocation5], [#allocation3]
  %s40 = sshll.u32 %s2, 4
  %s41 = int_to_ptr.vmem [resolvable:$true] %s40
  %43 = dma.vmem_to_smem %s41, 32, [#allocation6], [#allocation3]
  %45 = dma.done [#allocation3], 96
  %46 = sfence
  $region1: #{bert_cl_forward.1} parent=0
    #allocation7 [shape = 'u8[1024]{0}', space=vmem, size = 0x400, scoped, tag = 'output window, operand 0']
    #allocation8 [shape = 's32[2]{0}', space=sflag, size = 0x8, scoped, tag = 'scoped memory for bert_cl_forward.1']
    %47 = vsyncpa [#allocation8], 0
    %s48 = scalar_lea.sflag [#allocation8], 1
    %49 = vsyncpa %s48, 0
    loop: start=0, step=1, limit=4
    $region2: #{bert_cl_forward.1} parent=1 // loop_pre_header
      _
    $region3: #{bert_cl_forward.1} parent=1 // loop_header
      %s51 = sphi 0, %s55
      %p52 = scmp.ge.s32.totalorder %s51, 4
      %s59 = sphi 0, %s59
      %s61 = sphi 0, %s59
      %s62 = sphi 0, %s61
      %s76 = sphi 0, %s62
      %s80 = sphi 0, %s80
      %s82 = sphi 0, %s80
      %s83 = sphi 0, %s82
      %s97 = sphi 0, %s83
      %s101 = sphi 0, %s101
      %s103 = sphi 0, %s101
      %s104 = sphi 0, %s103
      %s118 = sphi 0, %s104
      %s122 = sphi 0, %s122
      %s124 = sphi 0, %s122
      %s125 = sphi 0, %s124
      %s139 = sphi 0, %s125
      %s143 = sphi 0, %s143
      %s145 = sphi 0, %s143
      %s146 = sphi 0, %s145
      %s160 = sphi 0, %s146
      %s164 = sphi 0, %s164
      %s166 = sphi 0, %s164
      %s167 = sphi 0, %s166
      %s181 = sphi 0, %s167
      %s185 = sphi 0, %s185
      %s187 = sphi 0, %s185
      %s188 = sphi 0, %s187
      %s202 = sphi 0, %s188
      %s206 = sphi 0, %s206
      %s208 = sphi 0, %s206
      %s209 = sphi 0, %s208
      %s223 = sphi 0, %s209
      %s227 = sphi 0, %s227
      %s229 = sphi 0, %s227
      %s230 = sphi 0, %s229
      %s244 = sphi 0, %s230
      %s248 = sphi 0, %s248
      %s250 = sphi 0, %s248
      %s251 = sphi 0, %s250
      %s265 = sphi 0, %s251
      %s269 = sphi 0, %s269
      %s271 = sphi 0, %s269
      %s272 = sphi 0, %s271
      %s286 = sphi 0, %s272
      %s290 = sphi 0, %s290
      %s292 = sphi 0, %s290
      %s293 = sphi 0, %s292
      %s307 = sphi 0, %s293
      %s311 = sphi 0, %s311
      %s313 = sphi 0, %s311
      %s314 = sphi 0, %s313
      %s328 = sphi 0, %s314
      %s332 = sphi 0, %s332
      %s334 = sphi 0, %s332
      %s335 = sphi 0, %s334
      %s349 = sphi 0, %s335
      %s353 = sphi 0, %s353
      %s355 = sphi 0, %s353
      %s356 = sphi 0, %s355
      %s370 = sphi 0, %s356
      %s374 = sphi 0, %s374
      %s376 = sphi 0, %s374
      %s377 = sphi 0, %s376
      %s391 = sphi 0, %s377
      %s395 = sphi 0, %s395
      %s397 = sphi 0, %s395
      %s398 = sphi 0, %s397
      %s412 = sphi 0, %s398
      %s416 = sphi 0, %s416
      %s418 = sphi 0, %s416
      %s419 = sphi 0, %s418
      %s433 = sphi 0, %s419
      %s437 = sphi 0, %s437
      %s439 = sphi 0, %s437
      %s440 = sphi 0, %s439
      %s454 = sphi 0, %s440
      %s458 = sphi 0, %s458
      %s460 = sphi 0, %s458
      %s461 = sphi 0, %s460
      %s475 = sphi 0, %s461
      %s479 = sphi 0, %s479
      %s481 = sphi 0, %s479
      %s482 = sphi 0, %s481
      %s496 = sphi 0, %s482
      %s502 = sphi 0, %s504
      %s505 = sphi 0, %s502
      %s506 = sphi 0, %s505
      %s522 = sphi 0, %s506
    $region4: #{bert_cl_forward.1} parent=1 // loop_header_branch
      %54 = sbr.rel (%p52) target = $region8
    $region5: #{bert_cl_forward.1} parent=1 // loop_body
      %s56 = ssub.s32 %s51, 1
      %s57 = ssub.s32 %s51, 2
      %s58 = sadd.s32 %s51, 1
      %s60 = sadd.s32 %s59, 1
      %p63 = scmp.eq.s32.totalorder %s51, 1
      %p64 = scmp.ne.s32.totalorder %s59, %s61
      %p65 = scmp.eq.s32.totalorder %s51, 0
      %p66 = por %p64, %p65
      %p67 = scmp.ne.s32.totalorder %s59, %s61
      %p68 = scmp.eq.s32.totalorder %s56, 1
      %p69 = por %p67, %p68
      %p70 = scmp.ne.s32.totalorder %s61, %s62
      %p71 = scmp.eq.s32.totalorder %s56, 0
      %p72 = por %p70, %p71
      %p73 = scmp.ne.s32.totalorder %s61, %s62
      %p74 = scmp.eq.s32.totalorder %s57, 1
      %p75 = por %p73, %p74
      %p77 = scmp.ne.s32.totalorder %s62, %s76
      %p78 = scmp.eq.s32.totalorder %s57, 0
      %p79 = por %p77, %p78
      %s81 = sadd.s32 %s80, 1
      %p84 = scmp.eq.s32.totalorder %s51, 1
      %p85 = scmp.ne.s32.totalorder %s80, %s82
      %p86 = scmp.eq.s32.totalorder %s51, 0
      %p87 = por %p85, %p86
      %p88 = scmp.ne.s32.totalorder %s80, %s82
      %p89 = scmp.eq.s32.totalorder %s56, 1
      %p90 = por %p88, %p89
      %p91 = scmp.ne.s32.totalorder %s82, %s83
      %p92 = scmp.eq.s32.totalorder %s56, 0
      %p93 = por %p91, %p92
      %p94 = scmp.ne.s32.totalorder %s82, %s83
      %p95 = scmp.eq.s32.totalorder %s57, 1
      %p96 = por %p94, %p95
      %p98 = scmp.ne.s32.totalorder %s83, %s97
      %p99 = scmp.eq.s32.totalorder %s57, 0
      %p100 = por %p98, %p99
      %s102 = sadd.s32 %s101, 1
      %p105 = scmp.eq.s32.totalorder %s51, 1
      %p106 = scmp.ne.s32.totalorder %s101, %s103
      %p107 = scmp.eq.s32.totalorder %s51, 0
      %p108 = por %p106, %p107
      %p109 = scmp.ne.s32.totalorder %s101, %s103
      %p110 = scmp.eq.s32.totalorder %s56, 1
      %p111 = por %p109, %p110
      %p112 = scmp.ne.s32.totalorder %s103, %s104
      %p113 = scmp.eq.s32.totalorder %s56, 0
      %p114 = por %p112, %p113
      %p115 = scmp.ne.s32.totalorder %s103, %s104
      %p116 = scmp.eq.s32.totalorder %s57, 1
      %p117 = por %p115, %p116
      %p119 = scmp.ne.s32.totalorder %s104, %s118
      %p120 = scmp.eq.s32.totalorder %s57, 0
      %p121 = por %p119, %p120
      %s123 = sadd.s32 %s122, 1
      %p126 = scmp.eq.s32.totalorder %s51, 1
      %p127 = scmp.ne.s32.totalorder %s122, %s124
      %p128 = scmp.eq.s32.totalorder %s51, 0
      %p129 = por %p127, %p128
      %p130 = scmp.ne.s32.totalorder %s122, %s124
      %p131 = scmp.eq.s32.totalorder %s56, 1
      %p132 = por %p130, %p131
      %p133 = scmp.ne.s32.totalorder %s124, %s125
      %p134 = scmp.eq.s32.totalorder %s56, 0
      %p135 = por %p133, %p134
      %p136 = scmp.ne.s32.totalorder %s124, %s125
      %p137 = scmp.eq.s32.totalorder %s57, 1
      %p138 = por %p136, %p137
      %p140 = scmp.ne.s32.totalorder %s125, %s139
      %p141 = scmp.eq.s32.totalorder %s57, 0
      %p142 = por %p140, %p141
      %s144 = sadd.s32 %s143, 1
      %p147 = scmp.eq.s32.totalorder %s51, 1
      %p148 = scmp.ne.s32.totalorder %s143, %s145
      %p149 = scmp.eq.s32.totalorder %s51, 0
      %p150 = por %p148, %p149
      %p151 = scmp.ne.s32.totalorder %s143, %s145
      %p152 = scmp.eq.s32.totalorder %s56, 1
      %p153 = por %p151, %p152
      %p154 = scmp.ne.s32.totalorder %s145, %s146
      %p155 = scmp.eq.s32.totalorder %s56, 0
      %p156 = por %p154, %p155
      %p157 = scmp.ne.s32.totalorder %s145, %s146
      %p158 = scmp.eq.s32.totalorder %s57, 1
      %p159 = por %p157, %p158
      %p161 = scmp.ne.s32.totalorder %s146, %s160
      %p162 = scmp.eq.s32.totalorder %s57, 0
      %p163 = por %p161, %p162
      %s165 = sadd.s32 %s164, 1
      %p168 = scmp.eq.s32.totalorder %s51, 1
      %p169 = scmp.ne.s32.totalorder %s164, %s166
      %p170 = scmp.eq.s32.totalorder %s51, 0
      %p171 = por %p169, %p170
      %p172 = scmp.ne.s32.totalorder %s164, %s166
      %p173 = scmp.eq.s32.totalorder %s56, 1
      %p174 = por %p172, %p173
      %p175 = scmp.ne.s32.totalorder %s166, %s167
      %p176 = scmp.eq.s32.totalorder %s56, 0
      %p177 = por %p175, %p176
      %p178 = scmp.ne.s32.totalorder %s166, %s167
      %p179 = scmp.eq.s32.totalorder %s57, 1
      %p180 = por %p178, %p179
      %p182 = scmp.ne.s32.totalorder %s167, %s181
      %p183 = scmp.eq.s32.totalorder %s57, 0
      %p184 = por %p182, %p183
      %s186 = sadd.s32 %s185, 1
      %p189 = scmp.eq.s32.totalorder %s51, 1
      %p190 = scmp.ne.s32.totalorder %s185, %s187
      %p191 = scmp.eq.s32.totalorder %s51, 0
      %p192 = por %p190, %p191
      %p193 = scmp.ne.s32.totalorder %s185, %s187
      %p194 = scmp.eq.s32.totalorder %s56, 1
      %p195 = por %p193, %p194
      %p196 = scmp.ne.s32.totalorder %s187, %s188
      %p197 = scmp.eq.s32.totalorder %s56, 0
      %p198 = por %p196, %p197
      %p199 = scmp.ne.s32.totalorder %s187, %s188
      %p200 = scmp.eq.s32.totalorder %s57, 1
      %p201 = por %p199, %p200
      %p203 = scmp.ne.s32.totalorder %s188, %s202
      %p204 = scmp.eq.s32.totalorder %s57, 0
      %p205 = por %p203, %p204
      %s207 = sadd.s32 %s206, 1
      %p210 = scmp.eq.s32.totalorder %s51, 1
      %p211 = scmp.ne.s32.totalorder %s206, %s208
      %p212 = scmp.eq.s32.totalorder %s51, 0
      %p213 = por %p211, %p212
      %p214 = scmp.ne.s32.totalorder %s206, %s208
      %p215 = scmp.eq.s32.totalorder %s56, 1
      %p216 = por %p214, %p215
      %p217 = scmp.ne.s32.totalorder %s208, %s209
      %p218 = scmp.eq.s32.totalorder %s56, 0
      %p219 = por %p217, %p218
      %p220 = scmp.ne.s32.totalorder %s208, %s209
      %p221 = scmp.eq.s32.totalorder %s57, 1
      %p222 = por %p220, %p221
      %p224 = scmp.ne.s32.totalorder %s209, %s223
      %p225 = scmp.eq.s32.totalorder %s57, 0
      %p226 = por %p224, %p225
      %s228 = sadd.s32 %s227, 1
      %p231 = scmp.eq.s32.totalorder %s51, 1
      %p232 = scmp.ne.s32.totalorder %s227, %s229
      %p233 = scmp.eq.s32.totalorder %s51, 0
      %p234 = por %p232, %p233
      %p235 = scmp.ne.s32.totalorder %s227, %s229
      %p236 = scmp.eq.s32.totalorder %s56, 1
      %p237 = por %p235, %p236
      %p238 = scmp.ne.s32.totalorder %s229, %s230
      %p239 = scmp.eq.s32.totalorder %s56, 0
      %p240 = por %p238, %p239
      %p241 = scmp.ne.s32.totalorder %s229, %s230
      %p242 = scmp.eq.s32.totalorder %s57, 1
      %p243 = por %p241, %p242
      %p245 = scmp.ne.s32.totalorder %s230, %s244
      %p246 = scmp.eq.s32.totalorder %s57, 0
      %p247 = por %p245, %p246
      %s249 = sadd.s32 %s248, 1
      %p252 = scmp.eq.s32.totalorder %s51, 1
      %p253 = scmp.ne.s32.totalorder %s248, %s250
      %p254 = scmp.eq.s32.totalorder %s51, 0
      %p255 = por %p253, %p254
      %p256 = scmp.ne.s32.totalorder %s248, %s250
      %p257 = scmp.eq.s32.totalorder %s56, 1
      %p258 = por %p256, %p257
      %p259 = scmp.ne.s32.totalorder %s250, %s251
      %p260 = scmp.eq.s32.totalorder %s56, 0
      %p261 = por %p259, %p260
      %p262 = scmp.ne.s32.totalorder %s250, %s251
      %p263 = scmp.eq.s32.totalorder %s57, 1
      %p264 = por %p262, %p263
      %p266 = scmp.ne.s32.totalorder %s251, %s265
      %p267 = scmp.eq.s32.totalorder %s57, 0
      %p268 = por %p266, %p267
      %s270 = sadd.s32 %s269, 1
      %p273 = scmp.eq.s32.totalorder %s51, 1
      %p274 = scmp.ne.s32.totalorder %s269, %s271
      %p275 = scmp.eq.s32.totalorder %s51, 0
      %p276 = por %p274, %p275
      %p277 = scmp.ne.s32.totalorder %s269, %s271
      %p278 = scmp.eq.s32.totalorder %s56, 1
      %p279 = por %p277, %p278
      %p280 = scmp.ne.s32.totalorder %s271, %s272
      %p281 = scmp.eq.s32.totalorder %s56, 0
      %p282 = por %p280, %p281
      %p283 = scmp.ne.s32.totalorder %s271, %s272
      %p284 = scmp.eq.s32.totalorder %s57, 1
      %p285 = por %p283, %p284
      %p287 = scmp.ne.s32.totalorder %s272, %s286
      %p288 = scmp.eq.s32.totalorder %s57, 0
      %p289 = por %p287, %p288
      %s291 = sadd.s32 %s290, 1
      %p294 = scmp.eq.s32.totalorder %s51, 1
      %p295 = scmp.ne.s32.totalorder %s290, %s292
      %p296 = scmp.eq.s32.totalorder %s51, 0
      %p297 = por %p295, %p296
      %p298 = scmp.ne.s32.totalorder %s290, %s292
      %p299 = scmp.eq.s32.totalorder %s56, 1
      %p300 = por %p298, %p299
      %p301 = scmp.ne.s32.totalorder %s292, %s293
      %p302 = scmp.eq.s32.totalorder %s56, 0
      %p303 = por %p301, %p302
      %p304 = scmp.ne.s32.totalorder %s292, %s293
      %p305 = scmp.eq.s32.totalorder %s57, 1
      %p306 = por %p304, %p305
      %p308 = scmp.ne.s32.totalorder %s293, %s307
      %p309 = scmp.eq.s32.totalorder %s57, 0
      %p310 = por %p308, %p309
      %s312 = sadd.s32 %s311, 1
      %p315 = scmp.eq.s32.totalorder %s51, 1
      %p316 = scmp.ne.s32.totalorder %s311, %s313
      %p317 = scmp.eq.s32.totalorder %s51, 0
      %p318 = por %p316, %p317
      %p319 = scmp.ne.s32.totalorder %s311, %s313
      %p320 = scmp.eq.s32.totalorder %s56, 1
      %p321 = por %p319, %p320
      %p322 = scmp.ne.s32.totalorder %s313, %s314
      %p323 = scmp.eq.s32.totalorder %s56, 0
      %p324 = por %p322, %p323
      %p325 = scmp.ne.s32.totalorder %s313, %s314
      %p326 = scmp.eq.s32.totalorder %s57, 1
      %p327 = por %p325, %p326
      %p329 = scmp.ne.s32.totalorder %s314, %s328
      %p330 = scmp.eq.s32.totalorder %s57, 0
      %p331 = por %p329, %p330
      %s333 = sadd.s32 %s332, 1
      %p336 = scmp.eq.s32.totalorder %s51, 1
      %p337 = scmp.ne.s32.totalorder %s332, %s334
      %p338 = scmp.eq.s32.totalorder %s51, 0
      %p339 = por %p337, %p338
      %p340 = scmp.ne.s32.totalorder %s332, %s334
      %p341 = scmp.eq.s32.totalorder %s56, 1
      %p342 = por %p340, %p341
      %p343 = scmp.ne.s32.totalorder %s334, %s335
      %p344 = scmp.eq.s32.totalorder %s56, 0
      %p345 = por %p343, %p344
      %p346 = scmp.ne.s32.totalorder %s334, %s335
      %p347 = scmp.eq.s32.totalorder %s57, 1
      %p348 = por %p346, %p347
      %p350 = scmp.ne.s32.totalorder %s335, %s349
      %p351 = scmp.eq.s32.totalorder %s57, 0
      %p352 = por %p350, %p351
      %s354 = sadd.s32 %s353, 1
      %p357 = scmp.eq.s32.totalorder %s51, 1
      %p358 = scmp.ne.s32.totalorder %s353, %s355
      %p359 = scmp.eq.s32.totalorder %s51, 0
      %p360 = por %p358, %p359
      %p361 = scmp.ne.s32.totalorder %s353, %s355
      %p362 = scmp.eq.s32.totalorder %s56, 1
      %p363 = por %p361, %p362
      %p364 = scmp.ne.s32.totalorder %s355, %s356
      %p365 = scmp.eq.s32.totalorder %s56, 0
      %p366 = por %p364, %p365
      %p367 = scmp.ne.s32.totalorder %s355, %s356
      %p368 = scmp.eq.s32.totalorder %s57, 1
      %p369 = por %p367, %p368
      %p371 = scmp.ne.s32.totalorder %s356, %s370
      %p372 = scmp.eq.s32.totalorder %s57, 0
      %p373 = por %p371, %p372
      %s375 = sadd.s32 %s374, 1
      %p378 = scmp.eq.s32.totalorder %s51, 1
      %p379 = scmp.ne.s32.totalorder %s374, %s376
      %p380 = scmp.eq.s32.totalorder %s51, 0
      %p381 = por %p379, %p380
      %p382 = scmp.ne.s32.totalorder %s374, %s376
      %p383 = scmp.eq.s32.totalorder %s56, 1
      %p384 = por %p382, %p383
      %p385 = scmp.ne.s32.totalorder %s376, %s377
      %p386 = scmp.eq.s32.totalorder %s56, 0
      %p387 = por %p385, %p386
      %p388 = scmp.ne.s32.totalorder %s376, %s377
      %p389 = scmp.eq.s32.totalorder %s57, 1
      %p390 = por %p388, %p389
      %p392 = scmp.ne.s32.totalorder %s377, %s391
      %p393 = scmp.eq.s32.totalorder %s57, 0
      %p394 = por %p392, %p393
      %s396 = sadd.s32 %s395, 1
      %p399 = scmp.eq.s32.totalorder %s51, 1
      %p400 = scmp.ne.s32.totalorder %s395, %s397
      %p401 = scmp.eq.s32.totalorder %s51, 0
      %p402 = por %p400, %p401
      %p403 = scmp.ne.s32.totalorder %s395, %s397
      %p404 = scmp.eq.s32.totalorder %s56, 1
      %p405 = por %p403, %p404
      %p406 = scmp.ne.s32.totalorder %s397, %s398
      %p407 = scmp.eq.s32.totalorder %s56, 0
      %p408 = por %p406, %p407
      %p409 = scmp.ne.s32.totalorder %s397, %s398
      %p410 = scmp.eq.s32.totalorder %s57, 1
      %p411 = por %p409, %p410
      %p413 = scmp.ne.s32.totalorder %s398, %s412
      %p414 = scmp.eq.s32.totalorder %s57, 0
      %p415 = por %p413, %p414
      %s417 = sadd.s32 %s416, 1
      %p420 = scmp.eq.s32.totalorder %s51, 1
      %p421 = scmp.ne.s32.totalorder %s416, %s418
      %p422 = scmp.eq.s32.totalorder %s51, 0
      %p423 = por %p421, %p422
      %p424 = scmp.ne.s32.totalorder %s416, %s418
      %p425 = scmp.eq.s32.totalorder %s56, 1
      %p426 = por %p424, %p425
      %p427 = scmp.ne.s32.totalorder %s418, %s419
      %p428 = scmp.eq.s32.totalorder %s56, 0
      %p429 = por %p427, %p428
      %p430 = scmp.ne.s32.totalorder %s418, %s419
      %p431 = scmp.eq.s32.totalorder %s57, 1
      %p432 = por %p430, %p431
      %p434 = scmp.ne.s32.totalorder %s419, %s433
      %p435 = scmp.eq.s32.totalorder %s57, 0
      %p436 = por %p434, %p435
      %s438 = sadd.s32 %s437, 1
      %p441 = scmp.eq.s32.totalorder %s51, 1
      %p442 = scmp.ne.s32.totalorder %s437, %s439
      %p443 = scmp.eq.s32.totalorder %s51, 0
      %p444 = por %p442, %p443
      %p445 = scmp.ne.s32.totalorder %s437, %s439
      %p446 = scmp.eq.s32.totalorder %s56, 1
      %p447 = por %p445, %p446
      %p448 = scmp.ne.s32.totalorder %s439, %s440
      %p449 = scmp.eq.s32.totalorder %s56, 0
      %p450 = por %p448, %p449
      %p451 = scmp.ne.s32.totalorder %s439, %s440
      %p452 = scmp.eq.s32.totalorder %s57, 1
      %p453 = por %p451, %p452
      %p455 = scmp.ne.s32.totalorder %s440, %s454
      %p456 = scmp.eq.s32.totalorder %s57, 0
      %p457 = por %p455, %p456
      %s459 = sadd.s32 %s458, 1
      %p462 = scmp.eq.s32.totalorder %s51, 1
      %p463 = scmp.ne.s32.totalorder %s458, %s460
      %p464 = scmp.eq.s32.totalorder %s51, 0
      %p465 = por %p463, %p464
      %p466 = scmp.ne.s32.totalorder %s458, %s460
      %p467 = scmp.eq.s32.totalorder %s56, 1
      %p468 = por %p466, %p467
      %p469 = scmp.ne.s32.totalorder %s460, %s461
      %p470 = scmp.eq.s32.totalorder %s56, 0
      %p471 = por %p469, %p470
      %p472 = scmp.ne.s32.totalorder %s460, %s461
      %p473 = scmp.eq.s32.totalorder %s57, 1
      %p474 = por %p472, %p473
      %p476 = scmp.ne.s32.totalorder %s461, %s475
      %p477 = scmp.eq.s32.totalorder %s57, 0
      %p478 = por %p476, %p477
      %s480 = sadd.s32 %s479, 1
      %p483 = scmp.eq.s32.totalorder %s51, 1
      %p484 = scmp.ne.s32.totalorder %s479, %s481
      %p485 = scmp.eq.s32.totalorder %s51, 0
      %p486 = por %p484, %p485
      %p487 = scmp.ne.s32.totalorder %s479, %s481
      %p488 = scmp.eq.s32.totalorder %s56, 1
      %p489 = por %p487, %p488
      %p490 = scmp.ne.s32.totalorder %s481, %s482
      %p491 = scmp.eq.s32.totalorder %s56, 0
      %p492 = por %p490, %p491
      %p493 = scmp.ne.s32.totalorder %s481, %s482
      %p494 = scmp.eq.s32.totalorder %s57, 1
      %p495 = por %p493, %p494
      %p497 = scmp.ne.s32.totalorder %s482, %s496
      %p498 = scmp.eq.s32.totalorder %s57, 0
      %p499 = por %p497, %p498
      %s500 = ssub.s32 %s51, %s58
      %p501 = scmp.eq.s32.totalorder %s500, 0
      %s503 = sadd.s32 %s502, 1
      %s504 = scalar_select %p501, %s502, %s503
      %p507 = pneg %p501
      %p508 = scmp.eq.s32.totalorder %s51, 1
      %p509 = por %p507, %p508
      %p510 = scmp.ne.s32.totalorder %s502, %s505
      %p511 = scmp.eq.s32.totalorder %s51, 0
      %p512 = por %p510, %p511
      %p513 = scmp.ne.s32.totalorder %s502, %s505
      %p514 = scmp.eq.s32.totalorder %s56, 1
      %p515 = por %p513, %p514
      %p516 = scmp.ne.s32.totalorder %s505, %s506
      %p517 = scmp.eq.s32.totalorder %s56, 0
      %p518 = por %p516, %p517
      %p519 = scmp.ne.s32.totalorder %s505, %s506
      %p520 = scmp.eq.s32.totalorder %s57, 1
      %p521 = por %p519, %p520
      %p523 = scmp.ne.s32.totalorder %s506, %s522
      %p524 = scmp.eq.s32.totalorder %s57, 0
      %p525 = por %p523, %p524
      %p526 = scmp.le.s32.totalorder 1, %s51
      %p527 = scmp.lt.s32.totalorder %s51, 3
      %p528 = pnand %p526, %p527
      %p529 = pneg %p528
      // Predicated region
      $region9: #{bert_cl_forward.1} parent=5 // pred_check
        _
      $region10: #{bert_cl_forward.1} parent=5 // pred_check_branch
        %531 = sbr.rel (%p528) target = $region12
      $region11: #{bert_cl_forward.1} parent=5 // pred_region
        %s532 = ssub.s32 %s51, 1
        // Predicated region
        $region13: #{bert_cl_forward.1} parent=11 // pred_check
          %p533 = pneg %p72
        $region14: #{bert_cl_forward.1} parent=11 // pred_check_branch
          %535 = sbr.rel (%p533) target = $region16
        $region15: #{bert_cl_forward.1} parent=11 // pred_region
          _
        $region16: #{bert_cl_forward.1} parent=11 // pred_fallthru
          _
        // Predicated region
        $region17: #{bert_cl_forward.1} parent=11 // pred_check
          %p536 = pneg %p93
        $region18: #{bert_cl_forward.1} parent=11 // pred_check_branch
          %538 = sbr.rel (%p536) target = $region20
        $region19: #{bert_cl_forward.1} parent=11 // pred_region
          _
        $region20: #{bert_cl_forward.1} parent=11 // pred_fallthru
          _
        // Predicated region
        $region21: #{bert_cl_forward.1} parent=11 // pred_check
          %p539 = pneg %p114
        $region22: #{bert_cl_forward.1} parent=11 // pred_check_branch
          %541 = sbr.rel (%p539) target = $region24
        $region23: #{bert_cl_forward.1} parent=11 // pred_region
          _
        $region24: #{bert_cl_forward.1} parent=11 // pred_fallthru
          _
        // Predicated region
        $region25: #{bert_cl_forward.1} parent=11 // pred_check
          %p542 = pneg %p135
        $region26: #{bert_cl_forward.1} parent=11 // pred_check_branch
          %544 = sbr.rel (%p542) target = $region28
        $region27: #{bert_cl_forward.1} parent=11 // pred_region
          _
        $region28: #{bert_cl_forward.1} parent=11 // pred_fallthru
          _
        // Predicated region
        $region29: #{bert_cl_forward.1} parent=11 // pred_check
          %p545 = pneg %p156
        $region30: #{bert_cl_forward.1} parent=11 // pred_check_branch
          %547 = sbr.rel (%p545) target = $region32
        $region31: #{bert_cl_forward.1} parent=11 // pred_region
          _
        $region32: #{bert_cl_forward.1} parent=11 // pred_fallthru
          _
        // Predicated region
        $region33: #{bert_cl_forward.1} parent=11 // pred_check
          %p548 = pneg %p177
        $region34: #{bert_cl_forward.1} parent=11 // pred_check_branch
          %550 = sbr.rel (%p548) target = $region36
        $region35: #{bert_cl_forward.1} parent=11 // pred_region
          _
        $region36: #{bert_cl_forward.1} parent=11 // pred_fallthru
          _
        // Predicated region
        $region37: #{bert_cl_forward.1} parent=11 // pred_check
          %p551 = pneg %p198
        $region38: #{bert_cl_forward.1} parent=11 // pred_check_branch
          %553 = sbr.rel (%p551) target = $region40
        $region39: #{bert_cl_forward.1} parent=11 // pred_region
          _
        $region40: #{bert_cl_forward.1} parent=11 // pred_fallthru
          _
        // Predicated region
        $region41: #{bert_cl_forward.1} parent=11 // pred_check
          %p554 = pneg %p219
        $region42: #{bert_cl_forward.1} parent=11 // pred_check_branch
          %556 = sbr.rel (%p554) target = $region44
        $region43: #{bert_cl_forward.1} parent=11 // pred_region
          _
        $region44: #{bert_cl_forward.1} parent=11 // pred_fallthru
          _
        // Predicated region
        $region45: #{bert_cl_forward.1} parent=11 // pred_check
          %p557 = pneg %p240
        $region46: #{bert_cl_forward.1} parent=11 // pred_check_branch
          %559 = sbr.rel (%p557) target = $region48
        $region47: #{bert_cl_forward.1} parent=11 // pred_region
          _
        $region48: #{bert_cl_forward.1} parent=11 // pred_fallthru
          _
        // Predicated region
        $region49: #{bert_cl_forward.1} parent=11 // pred_check
          %p560 = pneg %p261
        $region50: #{bert_cl_forward.1} parent=11 // pred_check_branch
          %562 = sbr.rel (%p560) target = $region52
        $region51: #{bert_cl_forward.1} parent=11 // pred_region
          _
        $region52: #{bert_cl_forward.1} parent=11 // pred_fallthru
          _
        // Predicated region
        $region53: #{bert_cl_forward.1} parent=11 // pred_check
          %p563 = pneg %p282
        $region54: #{bert_cl_forward.1} parent=11 // pred_check_branch
          %565 = sbr.rel (%p563) target = $region56
        $region55: #{bert_cl_forward.1} parent=11 // pred_region
          _
        $region56: #{bert_cl_forward.1} parent=11 // pred_fallthru
          _
        // Predicated region
        $region57: #{bert_cl_forward.1} parent=11 // pred_check
          %p566 = pneg %p303
        $region58: #{bert_cl_forward.1} parent=11 // pred_check_branch
          %568 = sbr.rel (%p566) target = $region60
        $region59: #{bert_cl_forward.1} parent=11 // pred_region
          _
        $region60: #{bert_cl_forward.1} parent=11 // pred_fallthru
          _
        // Predicated region
        $region61: #{bert_cl_forward.1} parent=11 // pred_check
          %p569 = pneg %p324
        $region62: #{bert_cl_forward.1} parent=11 // pred_check_branch
          %571 = sbr.rel (%p569) target = $region64
        $region63: #{bert_cl_forward.1} parent=11 // pred_region
          _
        $region64: #{bert_cl_forward.1} parent=11 // pred_fallthru
          _
        // Predicated region
        $region65: #{bert_cl_forward.1} parent=11 // pred_check
          %p572 = pneg %p345
        $region66: #{bert_cl_forward.1} parent=11 // pred_check_branch
          %574 = sbr.rel (%p572) target = $region68
        $region67: #{bert_cl_forward.1} parent=11 // pred_region
          _
        $region68: #{bert_cl_forward.1} parent=11 // pred_fallthru
          _
        // Predicated region
        $region69: #{bert_cl_forward.1} parent=11 // pred_check
          %p575 = pneg %p366
        $region70: #{bert_cl_forward.1} parent=11 // pred_check_branch
          %577 = sbr.rel (%p575) target = $region72
        $region71: #{bert_cl_forward.1} parent=11 // pred_region
          _
        $region72: #{bert_cl_forward.1} parent=11 // pred_fallthru
          _
        // Predicated region
        $region73: #{bert_cl_forward.1} parent=11 // pred_check
          %p578 = pneg %p387
        $region74: #{bert_cl_forward.1} parent=11 // pred_check_branch
          %580 = sbr.rel (%p578) target = $region76
        $region75: #{bert_cl_forward.1} parent=11 // pred_region
          _
        $region76: #{bert_cl_forward.1} parent=11 // pred_fallthru
          _
        // Predicated region
        $region77: #{bert_cl_forward.1} parent=11 // pred_check
          %p581 = pneg %p408
        $region78: #{bert_cl_forward.1} parent=11 // pred_check_branch
          %583 = sbr.rel (%p581) target = $region80
        $region79: #{bert_cl_forward.1} parent=11 // pred_region
          _
        $region80: #{bert_cl_forward.1} parent=11 // pred_fallthru
          _
        // Predicated region
        $region81: #{bert_cl_forward.1} parent=11 // pred_check
          %p584 = pneg %p429
        $region82: #{bert_cl_forward.1} parent=11 // pred_check_branch
          %586 = sbr.rel (%p584) target = $region84
        $region83: #{bert_cl_forward.1} parent=11 // pred_region
          _
        $region84: #{bert_cl_forward.1} parent=11 // pred_fallthru
          _
        // Predicated region
        $region85: #{bert_cl_forward.1} parent=11 // pred_check
          %p587 = pneg %p450
        $region86: #{bert_cl_forward.1} parent=11 // pred_check_branch
          %589 = sbr.rel (%p587) target = $region88
        $region87: #{bert_cl_forward.1} parent=11 // pred_region
          _
        $region88: #{bert_cl_forward.1} parent=11 // pred_fallthru
          _
        // Predicated region
        $region89: #{bert_cl_forward.1} parent=11 // pred_check
          %p590 = pneg %p471
        $region90: #{bert_cl_forward.1} parent=11 // pred_check_branch
          %592 = sbr.rel (%p590) target = $region92
        $region91: #{bert_cl_forward.1} parent=11 // pred_region
          _
        $region92: #{bert_cl_forward.1} parent=11 // pred_fallthru
          _
        // Predicated region
        $region93: #{bert_cl_forward.1} parent=11 // pred_check
          %p593 = pneg %p492
        $region94: #{bert_cl_forward.1} parent=11 // pred_check_branch
          %595 = sbr.rel (%p593) target = $region96
        $region95: #{bert_cl_forward.1} parent=11 // pred_region
          _
        $region96: #{bert_cl_forward.1} parent=11 // pred_fallthru
          _
      $region12: #{bert_cl_forward.1} parent=5 // pred_fallthru
        _
      %p596 = scmp.lt.s32.totalorder %s51, 2
      // Predicated region
      $region97: #{bert_cl_forward.1} parent=5 // pred_check
        %p597 = pneg %p596
      $region98: #{bert_cl_forward.1} parent=5 // pred_check_branch
        %599 = sbr.rel (%p597) target = $region100
      $region99: #{bert_cl_forward.1} parent=5 // pred_region
        _
      $region100: #{bert_cl_forward.1} parent=5 // pred_fallthru
        _
      %p600 = scmp.le.s32.totalorder 1, %s51
      %p601 = scmp.lt.s32.totalorder %s51, 3
      %p602 = pnand %p600, %p601
      %p603 = pneg %p602
      // Predicated region
      $region101: #{bert_cl_forward.1} parent=5 // pred_check
        _
      $region102: #{bert_cl_forward.1} parent=5 // pred_check_branch
        %605 = sbr.rel (%p602) target = $region104
      $region103: #{bert_cl_forward.1} parent=5 // pred_region
        %s606 = ssub.s32 %s51, 1
        %p607 = pneg %p72
        %p608 = pneg %p69
        %p609 = pneg %p93
        %p610 = pneg %p90
        %p611 = pneg %p114
        %p612 = pneg %p111
        %p613 = pneg %p135
        %p614 = pneg %p132
        %p615 = pneg %p156
        %p616 = pneg %p153
        %p617 = pneg %p177
        %p618 = pneg %p174
        %p619 = pneg %p198
        %p620 = pneg %p195
        %p621 = pneg %p219
        %p622 = pneg %p216
        %p623 = pneg %p240
        %p624 = pneg %p237
        %p625 = pneg %p261
        %p626 = pneg %p258
        %p627 = pneg %p282
        %p628 = pneg %p279
        %p629 = pneg %p303
        %p630 = pneg %p300
        %p631 = pneg %p324
        %p632 = pneg %p321
        %p633 = pneg %p345
        %p634 = pneg %p342
        %p635 = pneg %p366
        %p636 = pneg %p363
        %p637 = pneg %p387
        %p638 = pneg %p384
        %p639 = pneg %p408
        %p640 = pneg %p405
        %p641 = pneg %p429
        %p642 = pneg %p426
        %p643 = pneg %p450
        %p644 = pneg %p447
        %p645 = pneg %p471
        %p646 = pneg %p468
        %p647 = pneg %p492
        %p648 = pneg %p489
        %p649 = pneg %p518
        %p650 = pneg %p515
        %s651 = sand.u32 %s505, 1
        %s652 = scalar_lea.sflag [#allocation8], %s651
        %s653 = sand.u32 %s505, 1
        %s654 = scalar_lea.vmem [#allocation7], %s653
        %s656 = smul.u32 %s56, 128
        %s657 = sld [smem:[#allocation4 + %s656]]
        %s658 = sld [smem:[#allocation5 + %s656]]
        %s659 = scalar_lea.vmem %s3, %s657
        %v660 = vld [vmem:[%s659] sm:$0x1]
        %s661 = scalar_lea.vmem %s5, %s658
        %v662 = vld [vmem:[%s661] sm:$0x1]
        %v663 = vadd.f32 %v660, %v662
        %v664 = vld [vmem:[%s4] sm:$0x1]
        %v665 = vadd.f32 %v663, %v664
        %vm666 = vcmask 253952
        %667 = vst.msk [vmem:[#allocation2] sm:$0x1] %vm666, %v665
        %s668 = sadd.s32 %s656, 1
        %s669 = sld [smem:[#allocation4 + %s668]]
        %s670 = sld [smem:[#allocation5 + %s668]]
        %s671 = scalar_lea.vmem %s3, %s669
        %v672 = vld [vmem:[%s671] sm:$0x1]
        %s673 = scalar_lea.vmem %s5, %s670
        %v674 = vld [vmem:[%s673] sm:$0x1]
        %v675 = vadd.f32 %v672, %v674
        %v676 = vld [vmem:[%s4 + $0x1] sm:$0x1]
        %v677 = vadd.f32 %v675, %v676
        %678 = vst.msk [vmem:[#allocation2 + $0x1] sm:$0x1] %vm666, %v677
        %s679 = sadd.s32 %s656, 2
        %s680 = sld [smem:[#allocation4 + %s679]]
        %s681 = sld [smem:[#allocation5 + %s679]]
        %s682 = scalar_lea.vmem %s3, %s680
        %v683 = vld [vmem:[%s682] sm:$0x1]
        %s684 = scalar_lea.vmem %s5, %s681
        %v685 = vld [vmem:[%s684] sm:$0x1]
        %v686 = vadd.f32 %v683, %v685
        %v687 = vld [vmem:[%s4 + $0x2] sm:$0x1]
        %v688 = vadd.f32 %v686, %v687
        %689 = vst.msk [vmem:[#allocation2 + $0x2] sm:$0x1] %vm666, %v688
        %s690 = sadd.s32 %s656, 3
        %s691 = sld [smem:[#allocation4 + %s690]]
        %s692 = sld [smem:[#allocation5 + %s690]]
        %s693 = scalar_lea.vmem %s3, %s691
        %v694 = vld [vmem:[%s693] sm:$0x1]
        %s695 = scalar_lea.vmem %s5, %s692
        %v696 = vld [vmem:[%s695] sm:$0x1]
        %v697 = vadd.f32 %v694, %v696
        %v698 = vld [vmem:[%s4 + $0x3] sm:$0x1]
        %v699 = vadd.f32 %v697, %v698
        %700 = vst.msk [vmem:[#allocation2 + $0x3] sm:$0x1] %vm666, %v699
        %s701 = sadd.s32 %s656, 4
        %s702 = sld [smem:[#allocation4 + %s701]]
        %s703 = sld [smem:[#allocation5 + %s701]]
        %s704 = scalar_lea.vmem %s3, %s702
        %v705 = vld [vmem:[%s704] sm:$0x1]
        %s706 = scalar_lea.vmem %s5, %s703
        %v707 = vld [vmem:[%s706] sm:$0x1]
        %v708 = vadd.f32 %v705, %v707
        %v709 = vld [vmem:[%s4 + $0x4] sm:$0x1]
        %v710 = vadd.f32 %v708, %v709
        %711 = vst.msk [vmem:[#allocation2 + $0x4] sm:$0x1] %vm666, %v710
        %s712 = sadd.s32 %s656, 5
        %s713 = sld [smem:[#allocation4 + %s712]]
        %s714 = sld [smem:[#allocation5 + %s712]]
        %s715 = scalar_lea.vmem %s3, %s713
        %v716 = vld [vmem:[%s715] sm:$0x1]
        %s717 = scalar_lea.vmem %s5, %s714
        %v718 = vld [vmem:[%s717] sm:$0x1]
        %v719 = vadd.f32 %v716, %v718
        %v720 = vld [vmem:[%s4 + $0x5] sm:$0x1]
        %v721 = vadd.f32 %v719, %v720
        %722 = vst.msk [vmem:[#allocation2 + $0x5] sm:$0x1] %vm666, %v721
        %s723 = sadd.s32 %s656, 6
        %s724 = sld [smem:[#allocation4 + %s723]]
        %s725 = sld [smem:[#allocation5 + %s723]]
        %s726 = scalar_lea.vmem %s3, %s724
        %v727 = vld [vmem:[%s726] sm:$0x1]
        %s728 = scalar_lea.vmem %s5, %s725
        %v729 = vld [vmem:[%s728] sm:$0x1]
        %v730 = vadd.f32 %v727, %v729
        %v731 = vld [vmem:[%s4 + $0x6] sm:$0x1]
        %v732 = vadd.f32 %v730, %v731
        %733 = vst.msk [vmem:[#allocation2 + $0x6] sm:$0x1] %vm666, %v732
        %s734 = sadd.s32 %s656, 7
        %s735 = sld [smem:[#allocation4 + %s734]]
        %s736 = sld [smem:[#allocation5 + %s734]]
        %s737 = scalar_lea.vmem %s3, %s735
        %v738 = vld [vmem:[%s737] sm:$0x1]
        %s739 = scalar_lea.vmem %s5, %s736
        %v740 = vld [vmem:[%s739] sm:$0x1]
        %v741 = vadd.f32 %v738, %v740
        %v742 = vld [vmem:[%s4 + $0x7] sm:$0x1]
        %v743 = vadd.f32 %v741, %v742
        %744 = vst.msk [vmem:[#allocation2 + $0x7] sm:$0x1] %vm666, %v743
        %v745 = vld [vmem:[#allocation2] sm:$0xff]
        %v746 = vld [vmem:[%s6] sm:$0x1]
        %v747 = vld [vmem:[%s7] sm:$0x1]
        %vm748 = vcmask 261120
        %v749 = vsel %vm748, %v745, 0.0
        %750 = vadd.xlane.f32.xlu0 %v749
        %v751 = vpop.xlane.xlu0 %750
        %v752 = vrcp.pop 32.0
        %v753 = vmul.f32 32.0, %v752
        %v754 = vsub.f32 1.0, %v753
        %v755 = vmul.f32 %v752, %v754
        %v756 = vadd.f32 %v752, %v755
        %vm757 = vweird.f32 %v752
        %v758 = vsel %vm757, %v752, %v756
        %v759 = vmul.f32 %v751, %v758
        %v760 = vsub.f32 %v745, %v759
        %v761 = vmul.f32 %v760, %v760
        %v762 = vsel %vm748, %v761, 0.0
        %763 = vadd.xlane.f32.xlu0 %v762
        %v764 = vpop.xlane.xlu0 %763
        %v765 = vmul.f32 %v764, %v758
        %v766 = vadd.f32 %v765, 1e-12
        %v767 = vrsqrt.pop %v766
        %v768 = vmul.f32 %v767, %v766
        %v769 = vmul.f32 %v768, %v767
        %v770 = vmul.f32 0.5, %v769
        %v771 = vsub.f32 1.5, %v770
        %v772 = vmul.f32 %v767, %v771
        %vm773 = vweird.f32 %v766
        %vm774 = vweird.f32 %v767
        %vm775 = vmor %vm773, %vm774
        %v776 = vsel %vm775, %v767, %v772
        %v777 = vmul.f32 %v760, %v776
        %v779 = vperm.slane %v746, 0
        %v781 = vmul.f32 %v777, %v779
        %v783 = vperm.slane %v747, 0
        %v785 = vadd.f32 %v781, %v783
        %v786 = vlaneseq
        %v787 = vand.u32 %v786, 127
        %s788 = sld [smem:[#allocation6 + %s656]]
        %s789 = scvt.s32.f32 %s788
        %s790 = ssub.f32 1.0, %s789
        %s791 = smul.f32 %s790, -10000.0
        %vm792 = vcmp.eq.s32.totalorder %v787, 0
        %v793 = vstv %s791
        %v794 = vsel %vm792, %v793, 0.0
        %s795 = sld [smem:[#allocation6 + %s668]]
        %s796 = scvt.s32.f32 %s795
        %s797 = ssub.f32 1.0, %s796
        %s798 = smul.f32 %s797, -10000.0
        %vm799 = vcmp.eq.s32.totalorder %v787, 1
        %v800 = vstv %s798
        %v801 = vsel %vm799, %v800, %v794
        %s802 = sld [smem:[#allocation6 + %s679]]
        %s803 = scvt.s32.f32 %s802
        %s804 = ssub.f32 1.0, %s803
        %s805 = smul.f32 %s804, -10000.0
        %vm806 = vcmp.eq.s32.totalorder %v787, 2
        %v807 = vstv %s805
        %v808 = vsel %vm806, %v807, %v801
        %s809 = sld [smem:[#allocation6 + %s690]]
        %s810 = scvt.s32.f32 %s809
        %s811 = ssub.f32 1.0, %s810
        %s812 = smul.f32 %s811, -10000.0
        %vm813 = vcmp.eq.s32.totalorder %v787, 3
        %v814 = vstv %s812
        %v815 = vsel %vm813, %v814, %v808
        %s816 = sld [smem:[#allocation6 + %s701]]
        %s817 = scvt.s32.f32 %s816
        %s818 = ssub.f32 1.0, %s817
        %s819 = smul.f32 %s818, -10000.0
        %vm820 = vcmp.eq.s32.totalorder %v787, 4
        %v821 = vstv %s819
        %v822 = vsel %vm820, %v821, %v815
        %s823 = sld [smem:[#allocation6 + %s712]]
        %s824 = scvt.s32.f32 %s823
        %s825 = ssub.f32 1.0, %s824
        %s826 = smul.f32 %s825, -10000.0
        %vm827 = vcmp.eq.s32.totalorder %v787, 5
        %v828 = vstv %s826
        %v829 = vsel %vm827, %v828, %v822
        %s830 = sld [smem:[#allocation6 + %s723]]
        %s831 = scvt.s32.f32 %s830
        %s832 = ssub.f32 1.0, %s831
        %s833 = smul.f32 %s832, -10000.0
        %vm834 = vcmp.eq.s32.totalorder %v787, 6
        %v835 = vstv %s833
        %v836 = vsel %vm834, %v835, %v829
        %s837 = sld [smem:[#allocation6 + %s734]]
        %s838 = scvt.s32.f32 %s837
        %s839 = ssub.f32 1.0, %s838
        %s840 = smul.f32 %s839, -10000.0
        %vm841 = vcmp.eq.s32.totalorder %v787, 7
        %v842 = vstv %s840
        %v843 = vsel %vm841, %v842, %v836
        %v844 = vpack.c.bf16 %v785, %v785
        %v845 = vld [vmem:[%s8] sm:$0xf]
        %v846 = vld [vmem:[%s8 + $0x4] sm:$0xf]
        %v847 = vld [vmem:[%s8 + $0x8] sm:$0xf]
        %v848 = vld [vmem:[%s8 + $0xc] sm:$0xf]
        %v849 = vld [vmem:[%s9] sm:$0x1]
        %v851 = vperm.slane %v849, 0
        %v857 = vunpack.c.l.b16 %v845
        %v858 = vunpack.c.l.b16 %v846
        %v859 = vunpack.c.l.b16 %v847
        %v860 = vunpack.c.l.b16 %v848
        %v861 = vpack.c.b16 %v858, %v857
        %v862 = vpack.c.b16 %v860, %v859
        %v866 = vsel %vm748, %v844, 0
        %868 = vmatpush.bf16.msra.mxu0 0
        %869 = vmatpush.bf16.msra.mxu0 0
        %870 = vmatpush.bf16.msra.mxu0 0
        %871 = vmatpush.bf16.msra.mxu0 0
        %872 = vmatpush.bf16.msra.mxu0 0
        %873 = vmatpush.bf16.msra.mxu0 0
        %874 = vmatpush.bf16.msra.mxu0 %v862
        %875 = vmatpush.bf16.msra.mxu0 %v861
        %876 = vmatmul.bf16.gmra.mxu0 %v866
        %v877 = vpop.f32.mrf.mxu0
        %v878 = vadd.f32 %v851, %v877
        %v879 = vpop.f32.mrf.mxu0
        %880 = vdwg.mxu0
        %v881 = vpack.c.bf16 %v878, %v878
        %v883 = vunpack.c.l.b16 %v881
        %v884 = vpack.c.b16 %v883, %v883
        %885 = vrot.lane.b32.xlu0 %v884, 96
        %v886 = vpop.permute.xlu0 %885
        %vm887 = vcmask 64512
        %v889 = vsel %vm887, %v881, 0
        %v892 = vsel %vm887, %v886, 0
        %894 = vmatpush.bf16.xpose.msra.mxu0 0
        %895 = vmatpush.bf16.xpose.msra.mxu0 0
        %896 = vmatpush.bf16.xpose.msra.mxu0 0
        %897 = vmatpush.bf16.xpose.msra.mxu0 0
        %898 = vmatpush.bf16.xpose.msra.mxu0 0
        %899 = vmatpush.bf16.xpose.msra.mxu0 0
        %900 = vmatpush.bf16.xpose.msra.mxu0 0
        %901 = vmatpush.bf16.xpose.msra.mxu0 %v892
        %902 = vmatmul.bf16.gmra.mxu0 %v889
        %v903 = vpop.f32.mrf.mxu0
        %v904 = vadd.f32 0.0, %v903
        %v905 = vpop.f32.mrf.mxu0
        %906 = vdwg.mxu0
        %v907 = vmul.f32 %v904, 0.35355338
        %v908 = vadd.f32 %v907, %v843
        %v909 = vsel %vm887, %v908, -inf
        %910 = vmax.xlane.f32.xlu0 %v909
        %v911 = vpop.xlane.xlu0 %910
        %v912 = vsub.f32 %v908, %v911
        %v913 = vmul.f32 %v912, 1.442695
        %v914 = vpow.pop %v913
        %v915 = vsel %vm887, %v914, 0.0
        %916 = vadd.xlane.f32.xlu0 %v915
        %v917 = vpop.xlane.xlu0 %916
        %v918 = vrcp.pop %v917
        %v919 = vmul.f32 %v917, %v918
        %v920 = vsub.f32 1.0, %v919
        %v921 = vmul.f32 %v918, %v920
        %v922 = vadd.f32 %v918, %v921
        %vm923 = vweird.f32 %v917
        %vm924 = vweird.f32 %v918
        %vm925 = vmor %vm923, %vm924
        %v926 = vsel %vm925, %v918, %v922
        %v927 = vand.u32 2147483647, %v917
        %vm928 = vcmp.eq.f32.partialorder %v927, 8.507059e+37
        %v929 = vand.u32 %v917, 2147483648
        %v930 = vor.u32 1.1754944e-38, %v929
        %v931 = vsel %vm928, %v930, %v926
        %v932 = vmul.f32 %v914, %v931
        %v933 = vpack.c.bf16 %v932, %v932
        %934 = vrot.lane.b32.xlu0 %v884, 64
        %v935 = vpop.permute.xlu0 %934
        %v937 = vsel %vm887, %v933, 0
        %vm939 = vcmask 1043456
        %v941 = vsel %vm939, %v935, 0
        %943 = vmatpush.bf16.msra.mxu0 0
        %944 = vmatpush.bf16.msra.mxu0 0
        %945 = vmatpush.bf16.msra.mxu0 0
        %946 = vmatpush.bf16.msra.mxu0 0
        %947 = vmatpush.bf16.msra.mxu0 0
        %948 = vmatpush.bf16.msra.mxu0 0
        %949 = vmatpush.bf16.msra.mxu0 0
        %950 = vmatpush.bf16.msra.mxu0 %v941
        %951 = vmatmul.bf16.gmra.mxu0 %v937
        %v952 = vpop.f32.mrf.mxu0
        %v953 = vadd.f32 0.0, %v952
        %v954 = vpop.f32.mrf.mxu0
        %955 = vdwg.mxu0
        %956 = vrot.lane.b32.xlu0 %v884, 120
        %v957 = vpop.permute.xlu0 %956
        %958 = vrot.lane.b32.xlu0 %v884, 88
        %v959 = vpop.permute.xlu0 %958
        %v961 = vsel %vm887, %v957, 0
        %v964 = vsel %vm887, %v959, 0
        %966 = vmatpush.bf16.xpose.msra.mxu0 0
        %967 = vmatpush.bf16.xpose.msra.mxu0 0
        %968 = vmatpush.bf16.xpose.msra.mxu0 0
        %969 = vmatpush.bf16.xpose.msra.mxu0 0
        %970 = vmatpush.bf16.xpose.msra.mxu0 0
        %971 = vmatpush.bf16.xpose.msra.mxu0 0
        %972 = vmatpush.bf16.xpose.msra.mxu0 0
        %973 = vmatpush.bf16.xpose.msra.mxu0 %v964
        %974 = vmatmul.bf16.gmra.mxu0 %v961
        %v975 = vpop.f32.mrf.mxu0
        %v976 = vadd.f32 0.0, %v975
        %v977 = vpop.f32.mrf.mxu0
        %978 = vdwg.mxu0
        %v979 = vmul.f32 %v976, 0.35355338
        %v980 = vadd.f32 %v979, %v843
        %v981 = vsel %vm887, %v980, -inf
        %982 = vmax.xlane.f32.xlu0 %v981
        %v983 = vpop.xlane.xlu0 %982
        %v984 = vsub.f32 %v980, %v983
        %v985 = vmul.f32 %v984, 1.442695
        %v986 = vpow.pop %v985
        %v987 = vsel %vm887, %v986, 0.0
        %988 = vadd.xlane.f32.xlu0 %v987
        %v989 = vpop.xlane.xlu0 %988
        %v990 = vrcp.pop %v989
        %v991 = vmul.f32 %v989, %v990
        %v992 = vsub.f32 1.0, %v991
        %v993 = vmul.f32 %v990, %v992
        %v994 = vadd.f32 %v990, %v993
        %vm995 = vweird.f32 %v989
        %vm996 = vweird.f32 %v990
        %vm997 = vmor %vm995, %vm996
        %v998 = vsel %vm997, %v990, %v994
        %v999 = vand.u32 2147483647, %v989
        %vm1000 = vcmp.eq.f32.partialorder %v999, 8.507059e+37
        %v1001 = vand.u32 %v989, 2147483648
        %v1002 = vor.u32 1.1754944e-38, %v1001
        %v1003 = vsel %vm1000, %v1002, %v998
        %v1004 = vmul.f32 %v986, %v1003
        %v1005 = vpack.c.bf16 %v1004, %v1004
        %1006 = vrot.lane.b32.xlu0 %v884, 56
        %v1007 = vpop.permute.xlu0 %1006
        %v1009 = vsel %vm887, %v1005, 0
        %v1012 = vsel %vm939, %v1007, 0
        %1014 = vmatpush.bf16.msra.mxu0 0
        %1015 = vmatpush.bf16.msra.mxu0 0
        %1016 = vmatpush.bf16.msra.mxu0 0
        %1017 = vmatpush.bf16.msra.mxu0 0
        %1018 = vmatpush.bf16.msra.mxu0 0
        %1019 = vmatpush.bf16.msra.mxu0 0
        %1020 = vmatpush.bf16.msra.mxu0 0
        %1021 = vmatpush.bf16.msra.mxu0 %v1012
        %1022 = vmatmul.bf16.gmra.mxu0 %v1009
        %v1023 = vpop.f32.mrf.mxu0
        %v1024 = vadd.f32 0.0, %v1023
        %v1025 = vpop.f32.mrf.mxu0
        %1026 = vdwg.mxu0
        %1027 = vrot.lane.b32.xlu0 %v884, 112
        %v1028 = vpop.permute.xlu0 %1027
        %1029 = vrot.lane.b32.xlu0 %v884, 80
        %v1030 = vpop.permute.xlu0 %1029
        %v1032 = vsel %vm887, %v1028, 0
        %v1035 = vsel %vm887, %v1030, 0
        %1037 = vmatpush.bf16.xpose.msra.mxu0 0
        %1038 = vmatpush.bf16.xpose.msra.mxu0 0
        %1039 = vmatpush.bf16.xpose.msra.mxu0 0
        %1040 = vmatpush.bf16.xpose.msra.mxu0 0
        %1041 = vmatpush.bf16.xpose.msra.mxu0 0
        %1042 = vmatpush.bf16.xpose.msra.mxu0 0
        %1043 = vmatpush.bf16.xpose.msra.mxu0 0
        %1044 = vmatpush.bf16.xpose.msra.mxu0 %v1035
        %1045 = vmatmul.bf16.gmra.mxu0 %v1032
        %v1046 = vpop.f32.mrf.mxu0
        %v1047 = vadd.f32 0.0, %v1046
        %v1048 = vpop.f32.mrf.mxu0
        %1049 = vdwg.mxu0
        %v1050 = vmul.f32 %v1047, 0.35355338
        %v1051 = vadd.f32 %v1050, %v843
        %v1052 = vsel %vm887, %v1051, -inf
        %1053 = vmax.xlane.f32.xlu0 %v1052
        %v1054 = vpop.xlane.xlu0 %1053
        %v1055 = vsub.f32 %v1051, %v1054
        %v1056 = vmul.f32 %v1055, 1.442695
        %v1057 = vpow.pop %v1056
        %v1058 = vsel %vm887, %v1057, 0.0
        %1059 = vadd.xlane.f32.xlu0 %v1058
        %v1060 = vpop.xlane.xlu0 %1059
        %v1061 = vrcp.pop %v1060
        %v1062 = vmul.f32 %v1060, %v1061
        %v1063 = vsub.f32 1.0, %v1062
        %v1064 = vmul.f32 %v1061, %v1063
        %v1065 = vadd.f32 %v1061, %v1064
        %vm1066 = vweird.f32 %v1060
        %vm1067 = vweird.f32 %v1061
        %vm1068 = vmor %vm1066, %vm1067
        %v1069 = vsel %vm1068, %v1061, %v1065
        %v1070 = vand.u32 2147483647, %v1060
        %vm1071 = vcmp.eq.f32.partialorder %v1070, 8.507059e+37
        %v1072 = vand.u32 %v1060, 2147483648
        %v1073 = vor.u32 1.1754944e-38, %v1072
        %v1074 = vsel %vm1071, %v1073, %v1069
        %v1075 = vmul.f32 %v1057, %v1074
        %v1076 = vpack.c.bf16 %v1075, %v1075
        %1077 = vrot.lane.b32.xlu0 %v884, 48
        %v1078 = vpop.permute.xlu0 %1077
        %v1080 = vsel %vm887, %v1076, 0
        %v1083 = vsel %vm939, %v1078, 0
        %1085 = vmatpush.bf16.msra.mxu0 0
        %1086 = vmatpush.bf16.msra.mxu0 0
        %1087 = vmatpush.bf16.msra.mxu0 0
        %1088 = vmatpush.bf16.msra.mxu0 0
        %1089 = vmatpush.bf16.msra.mxu0 0
        %1090 = vmatpush.bf16.msra.mxu0 0
        %1091 = vmatpush.bf16.msra.mxu0 0
        %1092 = vmatpush.bf16.msra.mxu0 %v1083
        %1093 = vmatmul.bf16.gmra.mxu0 %v1080
        %v1094 = vpop.f32.mrf.mxu0
        %v1095 = vadd.f32 0.0, %v1094
        %v1096 = vpop.f32.mrf.mxu0
        %1097 = vdwg.mxu0
        %1098 = vrot.lane.b32.xlu0 %v884, 104
        %v1099 = vpop.permute.xlu0 %1098
        %1100 = vrot.lane.b32.xlu0 %v884, 72
        %v1101 = vpop.permute.xlu0 %1100
        %v1103 = vsel %vm887, %v1099, 0
        %v1106 = vsel %vm887, %v1101, 0
        %1108 = vmatpush.bf16.xpose.msra.mxu0 0
        %1109 = vmatpush.bf16.xpose.msra.mxu0 0
        %1110 = vmatpush.bf16.xpose.msra.mxu0 0
        %1111 = vmatpush.bf16.xpose.msra.mxu0 0
        %1112 = vmatpush.bf16.xpose.msra.mxu0 0
        %1113 = vmatpush.bf16.xpose.msra.mxu0 0
        %1114 = vmatpush.bf16.xpose.msra.mxu0 0
        %1115 = vmatpush.bf16.xpose.msra.mxu0 %v1106
        %1116 = vmatmul.bf16.gmra.mxu0 %v1103
        %v1117 = vpop.f32.mrf.mxu0
        %v1118 = vadd.f32 0.0, %v1117
        %v1119 = vpop.f32.mrf.mxu0
        %1120 = vdwg.mxu0
        %v1121 = vmul.f32 %v1118, 0.35355338
        %v1122 = vadd.f32 %v1121, %v843
        %v1123 = vsel %vm887, %v1122, -inf
        %1124 = vmax.xlane.f32.xlu0 %v1123
        %v1125 = vpop.xlane.xlu0 %1124
        %v1126 = vsub.f32 %v1122, %v1125
        %v1127 = vmul.f32 %v1126, 1.442695
        %v1128 = vpow.pop %v1127
        %v1129 = vsel %vm887, %v1128, 0.0
        %1130 = vadd.xlane.f32.xlu0 %v1129
        %v1131 = vpop.xlane.xlu0 %1130
        %v1132 = vrcp.pop %v1131
        %v1133 = vmul.f32 %v1131, %v1132
        %v1134 = vsub.f32 1.0, %v1133
        %v1135 = vmul.f32 %v1132, %v1134
        %v1136 = vadd.f32 %v1132, %v1135
        %vm1137 = vweird.f32 %v1131
        %vm1138 = vweird.f32 %v1132
        %vm1139 = vmor %vm1137, %vm1138
        %v1140 = vsel %vm1139, %v1132, %v1136
        %v1141 = vand.u32 2147483647, %v1131
        %vm1142 = vcmp.eq.f32.partialorder %v1141, 8.507059e+37
        %v1143 = vand.u32 %v1131, 2147483648
        %v1144 = vor.u32 1.1754944e-38, %v1143
        %v1145 = vsel %vm1142, %v1144, %v1140
        %v1146 = vmul.f32 %v1128, %v1145
        %v1147 = vpack.c.bf16 %v1146, %v1146
        %1148 = vrot.lane.b32.xlu0 %v884, 40
        %v1149 = vpop.permute.xlu0 %1148
        %v1151 = vsel %vm887, %v1147, 0
        %v1154 = vsel %vm939, %v1149, 0
        %1156 = vmatpush.bf16.msra.mxu0 0
        %1157 = vmatpush.bf16.msra.mxu0 0
        %1158 = vmatpush.bf16.msra.mxu0 0
        %1159 = vmatpush.bf16.msra.mxu0 0
        %1160 = vmatpush.bf16.msra.mxu0 0
        %1161 = vmatpush.bf16.msra.mxu0 0
        %1162 = vmatpush.bf16.msra.mxu0 0
        %1163 = vmatpush.bf16.msra.mxu0 %v1154
        %1164 = vmatmul.bf16.gmra.mxu0 %v1151
        %v1165 = vpop.f32.mrf.mxu0
        %v1166 = vadd.f32 0.0, %v1165
        %v1167 = vpop.f32.mrf.mxu0
        %1168 = vdwg.mxu0
        %1170 = vrot.lane.b32.xlu0 %v1024, 8
        %v1171 = vpop.permute.xlu0 %1170
        %1174 = vrot.lane.b32.xlu0 %v1095, 16
        %v1175 = vpop.permute.xlu0 %1174
        %1178 = vrot.lane.b32.xlu0 %v1166, 24
        %v1179 = vpop.permute.xlu0 %1178
        %v1181 = vsel %vm887, %v953, %v1171
        %vm1182 = vcmask 130048
        %v1183 = vsel %vm1182, %v1181, %v1175
        %vm1184 = vcmask 195584
        %v1185 = vsel %vm1184, %v1183, %v1179
        %v1186 = vpack.c.bf16 %v1185, %v1185
        %v1187 = vld [vmem:[%s10] sm:$0xf]
        %v1188 = vld [vmem:[%s10 + $0x4] sm:$0xf]
        %v1189 = vld [vmem:[%s10 + $0x8] sm:$0xf]
        %v1190 = vld [vmem:[%s10 + $0xc] sm:$0xf]
        %v1191 = vld [vmem:[%s11] sm:$0x1]
        %v1193 = vperm.slane %v1191, 0
        %v1199 = vunpack.c.l.b16 %v1187
        %v1200 = vunpack.c.l.b16 %v1188
        %v1201 = vunpack.c.l.b16 %v1189
        %v1202 = vunpack.c.l.b16 %v1190
        %v1203 = vpack.c.b16 %v1200, %v1199
        %v1204 = vpack.c.b16 %v1202, %v1201
        %v1208 = vsel %vm748, %v1186, 0
        %1210 = vmatpush.bf16.msra.mxu0 0
        %1211 = vmatpush.bf16.msra.mxu0 0
        %1212 = vmatpush.bf16.msra.mxu0 0
        %1213 = vmatpush.bf16.msra.mxu0 0
        %1214 = vmatpush.bf16.msra.mxu0 0
        %1215 = vmatpush.bf16.msra.mxu0 0
        %1216 = vmatpush.bf16.msra.mxu0 %v1204
        %1217 = vmatpush.bf16.msra.mxu0 %v1203
        %1218 = vmatmul.bf16.gmra.mxu0 %v1208
        %v1219 = vpop.f32.mrf.mxu0
        %v1220 = vadd.f32 %v1193, %v1219
        %v1221 = vpop.f32.mrf.mxu0
        %1222 = vdwg.mxu0
        %v1223 = vadd.f32 %v1220, %v785
        %v1224 = vld [vmem:[%s12] sm:$0x1]
        %v1225 = vld [vmem:[%s13] sm:$0x1]
        %v1226 = vsel %vm748, %v1223, 0.0
        %1227 = vadd.xlane.f32.xlu0 %v1226
        %v1228 = vpop.xlane.xlu0 %1227
        %v1229 = vmul.f32 %v1228, %v758
        %v1230 = vsub.f32 %v1223, %v1229
        %v1231 = vmul.f32 %v1230, %v1230
        %v1232 = vsel %vm748, %v1231, 0.0
        %1233 = vadd.xlane.f32.xlu0 %v1232
        %v1234 = vpop.xlane.xlu0 %1233
        %v1235 = vmul.f32 %v1234, %v758
        %v1236 = vadd.f32 %v1235, 1e-12
        %v1237 = vrsqrt.pop %v1236
        %v1238 = vmul.f32 %v1237, %v1236
        %v1239 = vmul.f32 %v1238, %v1237
        %v1240 = vmul.f32 0.5, %v1239
        %v1241 = vsub.f32 1.5, %v1240
        %v1242 = vmul.f32 %v1237, %v1241
        %vm1243 = vweird.f32 %v1236
        %vm1244 = vweird.f32 %v1237
        %vm1245 = vmor %vm1243, %vm1244
        %v1246 = vsel %vm1245, %v1237, %v1242
        %v1247 = vmul.f32 %v1230, %v1246
        %v1249 = vperm.slane %v1224, 0
        %v1251 = vmul.f32 %v1247, %v1249
        %v1253 = vperm.slane %v1225, 0
        %v1255 = vadd.f32 %v1251, %v1253
        %v1256 = vpack.c.bf16 %v1255, %v1255
        %v1257 = vld [vmem:[%s14] sm:$0xf]
        %v1258 = vld [vmem:[%s14 + $0x4] sm:$0xf]
        %v1259 = vld [vmem:[%s14 + $0x8] sm:$0xf]
        %v1260 = vld [vmem:[%s14 + $0xc] sm:$0xf]
        %v1261 = vld [vmem:[%s15] sm:$0x1]
        %v1263 = vperm.slane %v1261, 0
        %v1269 = vunpack.c.l.b16 %v1257
        %v1270 = vunpack.c.l.b16 %v1258
        %v1271 = vunpack.c.l.b16 %v1259
        %v1272 = vunpack.c.l.b16 %v1260
        %v1273 = vpack.c.b16 %v1270, %v1269
        %v1274 = vpack.c.b16 %v1272, %v1271
        %v1278 = vsel %vm748, %v1256, 0
        %1280 = vmatpush.bf16.msra.mxu0 0
        %1281 = vmatpush.bf16.msra.mxu0 0
        %1282 = vmatpush.bf16.msra.mxu0 0
        %1283 = vmatpush.bf16.msra.mxu0 0
        %1284 = vmatpush.bf16.msra.mxu0 0
        %1285 = vmatpush.bf16.msra.mxu0 0
        %1286 = vmatpush.bf16.msra.mxu0 %v1274
        %1287 = vmatpush.bf16.msra.mxu0 %v1273
        %1288 = vmatmul.bf16.gmra.mxu0 %v1278
        %v1289 = vpop.f32.mrf.mxu0
        %v1290 = vadd.f32 %v1263, %v1289
        %v1291 = vpop.f32.mrf.mxu0
        %1292 = vdwg.mxu0
        %v1293 = vmul.f32 %v1290, 0.5
        %v1294 = vmul.f32 %v1290, 0.70710677
        %v1295 = vmul.f32 %v1294, %v1294
        %v1296 = vmin.f32 16.0, %v1295
        %v1297 = vmul.f32 %v1296, 2.1237322e-06
        %v1298 = vadd.f32 %v1297, 0.00028619796
        %v1299 = vmul.f32 %v1296, %v1298
        %v1300 = vadd.f32 %v1299, 0.0036580483
        %v1301 = vmul.f32 %v1296, %v1300
        %v1302 = vadd.f32 %v1301, 0.05243302
        %v1303 = vmul.f32 %v1296, %v1302
        %v1304 = vadd.f32 %v1303, 0.18741608
        %v1305 = vmul.f32 %v1296, %v1304
        %v1306 = vadd.f32 %v1305, 1.1283791
        %v1307 = vmul.f32 %v1294, %v1306
        %v1308 = vmul.f32 %v1296, 3.8918573e-05
        %v1309 = vadd.f32 %v1308, 0.001143296
        %v1310 = vmul.f32 %v1296, %v1309
        %v1311 = vadd.f32 %v1310, 0.014752088
        %v1312 = vmul.f32 %v1296, %v1311
        %v1313 = vadd.f32 %v1312, 0.112945676
        %v1314 = vmul.f32 %v1296, %v1313
        %v1315 = vadd.f32 %v1314, 0.4994258
        %v1316 = vmul.f32 %v1296, %v1315
        %v1317 = vadd.f32 %v1316, 1.0
        %v1318 = vrcp.pop %v1317
        %v1319 = vmul.f32 %v1317, %v1318
        %v1320 = vsub.f32 1.0, %v1319
        %v1321 = vmul.f32 %v1318, %v1320
        %v1322 = vadd.f32 %v1318, %v1321
        %vm1323 = vweird.f32 %v1317
        %vm1324 = vweird.f32 %v1318
        %vm1325 = vmor %vm1323, %vm1324
        %v1326 = vsel %vm1325, %v1318, %v1322
        %v1327 = vand.u32 2147483647, %v1317
        %vm1328 = vcmp.eq.f32.partialorder %v1327, 8.507059e+37
        %v1329 = vand.u32 %v1317, 2147483648
        %v1330 = vor.u32 1.1754944e-38, %v1329
        %v1331 = vsel %vm1328, %v1330, %v1326
        %v1332 = vmul.f32 %v1307, %v1331
        %v1333 = vmin.f32 %v1332, 1.0
        %v1334 = vmax.f32 %v1333, -1.0
        %v1335 = vadd.f32 %v1334, 1.0
        %v1336 = vmul.f32 %v1293, %v1335
        %v1337 = vpack.c.bf16 %v1336, %v1336
        %v1338 = vld [vmem:[%s16] sm:$0xf]
        %v1339 = vld [vmem:[%s16 + $0x4] sm:$0xf]
        %v1340 = vld [vmem:[%s16 + $0x8] sm:$0xf]
        %v1341 = vld [vmem:[%s16 + $0xc] sm:$0xf]
        %v1342 = vld [vmem:[%s16 + $0x10] sm:$0xf]
        %v1343 = vld [vmem:[%s16 + $0x14] sm:$0xf]
        %v1344 = vld [vmem:[%s16 + $0x18] sm:$0xf]
        %v1345 = vld [vmem:[%s16 + $0x1c] sm:$0xf]
        %v1346 = vld [vmem:[%s17] sm:$0x1]
        %v1348 = vperm.slane %v1346, 0
        %v1358 = vunpack.c.l.b16 %v1338
        %v1359 = vunpack.c.l.b16 %v1339
        %v1360 = vunpack.c.l.b16 %v1340
        %v1361 = vunpack.c.l.b16 %v1341
        %v1362 = vunpack.c.l.b16 %v1342
        %v1363 = vunpack.c.l.b16 %v1343
        %v1364 = vunpack.c.l.b16 %v1344
        %v1365 = vunpack.c.l.b16 %v1345
        %v1366 = vpack.c.b16 %v1359, %v1358
        %v1367 = vpack.c.b16 %v1361, %v1360
        %v1368 = vpack.c.b16 %v1363, %v1362
        %v1369 = vpack.c.b16 %v1365, %v1364
        %vm1374 = vcmask 523264
        %v1376 = vsel %vm1374, %v1337, 0
        %1378 = vmatpush.bf16.msra.mxu0 0
        %1379 = vmatpush.bf16.msra.mxu0 0
        %1380 = vmatpush.bf16.msra.mxu0 0
        %1381 = vmatpush.bf16.msra.mxu0 0
        %1382 = vmatpush.bf16.msra.mxu0 %v1369
        %1383 = vmatpush.bf16.msra.mxu0 %v1368
        %1384 = vmatpush.bf16.msra.mxu0 %v1367
        %1385 = vmatpush.bf16.msra.mxu0 %v1366
        %1386 = vmatmul.bf16.gmra.mxu0 %v1376
        %v1387 = vpop.f32.mrf.mxu0
        %v1388 = vadd.f32 %v1348, %v1387
        %v1389 = vpop.f32.mrf.mxu0
        %1390 = vdwg.mxu0
        %v1391 = vadd.f32 %v1388, %v1255
        %v1392 = vld [vmem:[%s18] sm:$0x1]
        %v1393 = vld [vmem:[%s19] sm:$0x1]
        %v1394 = vsel %vm748, %v1391, 0.0
        %1395 = vadd.xlane.f32.xlu0 %v1394
        %v1396 = vpop.xlane.xlu0 %1395
        %v1397 = vmul.f32 %v1396, %v758
        %v1398 = vsub.f32 %v1391, %v1397
        %v1399 = vmul.f32 %v1398, %v1398
        %v1400 = vsel %vm748, %v1399, 0.0
        %1401 = vadd.xlane.f32.xlu0 %v1400
        %v1402 = vpop.xlane.xlu0 %1401
        %v1403 = vmul.f32 %v1402, %v758
        %v1404 = vadd.f32 %v1403, 1e-12
        %v1405 = vrsqrt.pop %v1404
        %v1406 = vmul.f32 %v1405, %v1404
        %v1407 = vmul.f32 %v1406, %v1405
        %v1408 = vmul.f32 0.5, %v1407
        %v1409 = vsub.f32 1.5, %v1408
        %v1410 = vmul.f32 %v1405, %v1409
        %vm1411 = vweird.f32 %v1404
        %vm1412 = vweird.f32 %v1405
        %vm1413 = vmor %vm1411, %vm1412
        %v1414 = vsel %vm1413, %v1405, %v1410
        %v1415 = vmul.f32 %v1398, %v1414
        %v1417 = vperm.slane %v1392, 0
        %v1419 = vmul.f32 %v1415, %v1417
        %v1421 = vperm.slane %v1393, 0
        %v1423 = vadd.f32 %v1419, %v1421
        %v1424 = vpack.c.bf16 %v1423, %v1423
        %s1425 = scalar_lea.vmem %s8, 16
        %v1426 = vld [vmem:[%s1425] sm:$0xf]
        %v1427 = vld [vmem:[%s1425 + $0x4] sm:$0xf]
        %v1428 = vld [vmem:[%s1425 + $0x8] sm:$0xf]
        %v1429 = vld [vmem:[%s1425 + $0xc] sm:$0xf]
        %s1430 = scalar_lea.vmem %s9, 1
        %v1431 = vld [vmem:[%s1430] sm:$0x1]
        %v1433 = vperm.slane %v1431, 0
        %v1439 = vunpack.c.l.b16 %v1426
        %v1440 = vunpack.c.l.b16 %v1427
        %v1441 = vunpack.c.l.b16 %v1428
        %v1442 = vunpack.c.l.b16 %v1429
        %v1443 = vpack.c.b16 %v1440, %v1439
        %v1444 = vpack.c.b16 %v1442, %v1441
        %v1448 = vsel %vm748, %v1424, 0
        %1450 = vmatpush.bf16.msra.mxu0 0
        %1451 = vmatpush.bf16.msra.mxu0 0
        %1452 = vmatpush.bf16.msra.mxu0 0
        %1453 = vmatpush.bf16.msra.mxu0 0
        %1454 = vmatpush.bf16.msra.mxu0 0
        %1455 = vmatpush.bf16.msra.mxu0 0
        %1456 = vmatpush.bf16.msra.mxu0 %v1444
        %1457 = vmatpush.bf16.msra.mxu0 %v1443
        %1458 = vmatmul.bf16.gmra.mxu0 %v1448
        %v1459 = vpop.f32.mrf.mxu0
        %v1460 = vadd.f32 %v1433, %v1459
        %v1461 = vpop.f32.mrf.mxu0
        %1462 = vdwg.mxu0
        %v1463 = vpack.c.bf16 %v1460, %v1460
        %v1465 = vunpack.c.l.b16 %v1463
        %v1466 = vpack.c.b16 %v1465, %v1465
        %1467 = vrot.lane.b32.xlu0 %v1466, 96
        %v1468 = vpop.permute.xlu0 %1467
        %v1470 = vsel %vm887, %v1463, 0
        %v1473 = vsel %vm887, %v1468, 0
        %1475 = vmatpush.bf16.xpose.msra.mxu0 0
        %1476 = vmatpush.bf16.xpose.msra.mxu0 0
        %1477 = vmatpush.bf16.xpose.msra.mxu0 0
        %1478 = vmatpush.bf16.xpose.msra.mxu0 0
        %1479 = vmatpush.bf16.xpose.msra.mxu0 0
        %1480 = vmatpush.bf16.xpose.msra.mxu0 0
        %1481 = vmatpush.bf16.xpose.msra.mxu0 0
        %1482 = vmatpush.bf16.xpose.msra.mxu0 %v1473
        %1483 = vmatmul.bf16.gmra.mxu0 %v1470
        %v1484 = vpop.f32.mrf.mxu0
        %v1485 = vadd.f32 0.0, %v1484
        %v1486 = vpop.f32.mrf.mxu0
        %1487 = vdwg.mxu0
        %v1488 = vmul.f32 %v1485, 0.35355338
        %v1489 = vadd.f32 %v1488, %v843
        %v1490 = vsel %vm887, %v1489, -inf
        %1491 = vmax.xlane.f32.xlu0 %v1490
        %v1492 = vpop.xlane.xlu0 %1491
        %v1493 = vsub.f32 %v1489, %v1492
        %v1494 = vmul.f32 %v1493, 1.442695
        %v1495 = vpow.pop %v1494
        %v1496 = vsel %vm887, %v1495, 0.0
        %1497 = vadd.xlane.f32.xlu0 %v1496
        %v1498 = vpop.xlane.xlu0 %1497
        %v1499 = vrcp.pop %v1498
        %v1500 = vmul.f32 %v1498, %v1499
        %v1501 = vsub.f32 1.0, %v1500
        %v1502 = vmul.f32 %v1499, %v1501
        %v1503 = vadd.f32 %v1499, %v1502
        %vm1504 = vweird.f32 %v1498
        %vm1505 = vweird.f32 %v1499
        %vm1506 = vmor %vm1504, %vm1505
        %v1507 = vsel %vm1506, %v1499, %v1503
        %v1508 = vand.u32 2147483647, %v1498
        %vm1509 = vcmp.eq.f32.partialorder %v1508, 8.507059e+37
        %v1510 = vand.u32 %v1498, 2147483648
        %v1511 = vor.u32 1.1754944e-38, %v1510
        %v1512 = vsel %vm1509, %v1511, %v1507
        %v1513 = vmul.f32 %v1495, %v1512
        %v1514 = vpack.c.bf16 %v1513, %v1513
        %1515 = vrot.lane.b32.xlu0 %v1466, 64
        %v1516 = vpop.permute.xlu0 %1515
        %v1518 = vsel %vm887, %v1514, 0
        %v1521 = vsel %vm939, %v1516, 0
        %1523 = vmatpush.bf16.msra.mxu0 0
        %1524 = vmatpush.bf16.msra.mxu0 0
        %1525 = vmatpush.bf16.msra.mxu0 0
        %1526 = vmatpush.bf16.msra.mxu0 0
        %1527 = vmatpush.bf16.msra.mxu0 0
        %1528 = vmatpush.bf16.msra.mxu0 0
        %1529 = vmatpush.bf16.msra.mxu0 0
        %1530 = vmatpush.bf16.msra.mxu0 %v1521
        %1531 = vmatmul.bf16.gmra.mxu0 %v1518
        %v1532 = vpop.f32.mrf.mxu0
        %v1533 = vadd.f32 0.0, %v1532
        %v1534 = vpop.f32.mrf.mxu0
        %1535 = vdwg.mxu0
        %1536 = vrot.lane.b32.xlu0 %v1466, 120
        %v1537 = vpop.permute.xlu0 %1536
        %1538 = vrot.lane.b32.xlu0 %v1466, 88
        %v1539 = vpop.permute.xlu0 %1538
        %v1541 = vsel %vm887, %v1537, 0
        %v1544 = vsel %vm887, %v1539, 0
        %1546 = vmatpush.bf16.xpose.msra.mxu0 0
        %1547 = vmatpush.bf16.xpose.msra.mxu0 0
        %1548 = vmatpush.bf16.xpose.msra.mxu0 0
        %1549 = vmatpush.bf16.xpose.msra.mxu0 0
        %1550 = vmatpush.bf16.xpose.msra.mxu0 0
        %1551 = vmatpush.bf16.xpose.msra.mxu0 0
        %1552 = vmatpush.bf16.xpose.msra.mxu0 0
        %1553 = vmatpush.bf16.xpose.msra.mxu0 %v1544
        %1554 = vmatmul.bf16.gmra.mxu0 %v1541
        %v1555 = vpop.f32.mrf.mxu0
        %v1556 = vadd.f32 0.0, %v1555
        %v1557 = vpop.f32.mrf.mxu0
        %1558 = vdwg.mxu0
        %v1559 = vmul.f32 %v1556, 0.35355338
        %v1560 = vadd.f32 %v1559, %v843
        %v1561 = vsel %vm887, %v1560, -inf
        %1562 = vmax.xlane.f32.xlu0 %v1561
        %v1563 = vpop.xlane.xlu0 %1562
        %v1564 = vsub.f32 %v1560, %v1563
        %v1565 = vmul.f32 %v1564, 1.442695
        %v1566 = vpow.pop %v1565
        %v1567 = vsel %vm887, %v1566, 0.0
        %1568 = vadd.xlane.f32.xlu0 %v1567
        %v1569 = vpop.xlane.xlu0 %1568
        %v1570 = vrcp.pop %v1569
        %v1571 = vmul.f32 %v1569, %v1570
        %v1572 = vsub.f32 1.0, %v1571
        %v1573 = vmul.f32 %v1570, %v1572
        %v1574 = vadd.f32 %v1570, %v1573
        %vm1575 = vweird.f32 %v1569
        %vm1576 = vweird.f32 %v1570
        %vm1577 = vmor %vm1575, %vm1576
        %v1578 = vsel %vm1577, %v1570, %v1574
        %v1579 = vand.u32 2147483647, %v1569
        %vm1580 = vcmp.eq.f32.partialorder %v1579, 8.507059e+37
        %v1581 = vand.u32 %v1569, 2147483648
        %v1582 = vor.u32 1.1754944e-38, %v1581
        %v1583 = vsel %vm1580, %v1582, %v1578
        %v1584 = vmul.f32 %v1566, %v1583
        %v1585 = vpack.c.bf16 %v1584, %v1584
        %1586 = vrot.lane.b32.xlu0 %v1466, 56
        %v1587 = vpop.permute.xlu0 %1586
        %v1589 = vsel %vm887, %v1585, 0
        %v1592 = vsel %vm939, %v1587, 0
        %1594 = vmatpush.bf16.msra.mxu0 0
        %1595 = vmatpush.bf16.msra.mxu0 0
        %1596 = vmatpush.bf16.msra.mxu0 0
        %1597 = vmatpush.bf16.msra.mxu0 0
        %1598 = vmatpush.bf16.msra.mxu0 0
        %1599 = vmatpush.bf16.msra.mxu0 0
        %1600 = vmatpush.bf16.msra.mxu0 0
        %1601 = vmatpush.bf16.msra.mxu0 %v1592
        %1602 = vmatmul.bf16.gmra.mxu0 %v1589
        %v1603 = vpop.f32.mrf.mxu0
        %v1604 = vadd.f32 0.0, %v1603
        %v1605 = vpop.f32.mrf.mxu0
        %1606 = vdwg.mxu0
        %1607 = vrot.lane.b32.xlu0 %v1466, 112
        %v1608 = vpop.permute.xlu0 %1607
        %1609 = vrot.lane.b32.xlu0 %v1466, 80
        %v1610 = vpop.permute.xlu0 %1609
        %v1612 = vsel %vm887, %v1608, 0
        %v1615 = vsel %vm887, %v1610, 0
        %1617 = vmatpush.bf16.xpose.msra.mxu0 0
        %1618 = vmatpush.bf16.xpose.msra.mxu0 0
        %1619 = vmatpush.bf16.xpose.msra.mxu0 0
        %1620 = vmatpush.bf16.xpose.msra.mxu0 0
        %1621 = vmatpush.bf16.xpose.msra.mxu0 0
        %1622 = vmatpush.bf16.xpose.msra.mxu0 0
        %1623 = vmatpush.bf16.xpose.msra.mxu0 0
        %1624 = vmatpush.bf16.xpose.msra.mxu0 %v1615
        %1625 = vmatmul.bf16.gmra.mxu0 %v1612
        %v1626 = vpop.f32.mrf.mxu0
        %v1627 = vadd.f32 0.0, %v1626
        %v1628 = vpop.f32.mrf.mxu0
        %1629 = vdwg.mxu0
        %v1630 = vmul.f32 %v1627, 0.35355338
        %v1631 = vadd.f32 %v1630, %v843
        %v1632 = vsel %vm887, %v1631, -inf
        %1633 = vmax.xlane.f32.xlu0 %v1632
        %v1634 = vpop.xlane.xlu0 %1633
        %v1635 = vsub.f32 %v1631, %v1634
        %v1636 = vmul.f32 %v1635, 1.442695
        %v1637 = vpow.pop %v1636
        %v1638 = vsel %vm887, %v1637, 0.0
        %1639 = vadd.xlane.f32.xlu0 %v1638
        %v1640 = vpop.xlane.xlu0 %1639
        %v1641 = vrcp.pop %v1640
        %v1642 = vmul.f32 %v1640, %v1641
        %v1643 = vsub.f32 1.0, %v1642
        %v1644 = vmul.f32 %v1641, %v1643
        %v1645 = vadd.f32 %v1641, %v1644
        %vm1646 = vweird.f32 %v1640
        %vm1647 = vweird.f32 %v1641
        %vm1648 = vmor %vm1646, %vm1647
        %v1649 = vsel %vm1648, %v1641, %v1645
        %v1650 = vand.u32 2147483647, %v1640
        %vm1651 = vcmp.eq.f32.partialorder %v1650, 8.507059e+37
        %v1652 = vand.u32 %v1640, 2147483648
        %v1653 = vor.u32 1.1754944e-38, %v1652
        %v1654 = vsel %vm1651, %v1653, %v1649
        %v1655 = vmul.f32 %v1637, %v1654
        %v1656 = vpack.c.bf16 %v1655, %v1655
        %1657 = vrot.lane.b32.xlu0 %v1466, 48
        %v1658 = vpop.permute.xlu0 %1657
        %v1660 = vsel %vm887, %v1656, 0
        %v1663 = vsel %vm939, %v1658, 0
        %1665 = vmatpush.bf16.msra.mxu0 0
        %1666 = vmatpush.bf16.msra.mxu0 0
        %1667 = vmatpush.bf16.msra.mxu0 0
        %1668 = vmatpush.bf16.msra.mxu0 0
        %1669 = vmatpush.bf16.msra.mxu0 0
        %1670 = vmatpush.bf16.msra.mxu0 0
        %1671 = vmatpush.bf16.msra.mxu0 0
        %1672 = vmatpush.bf16.msra.mxu0 %v1663
        %1673 = vmatmul.bf16.gmra.mxu0 %v1660
        %v1674 = vpop.f32.mrf.mxu0
        %v1675 = vadd.f32 0.0, %v1674
        %v1676 = vpop.f32.mrf.mxu0
        %1677 = vdwg.mxu0
        %1678 = vrot.lane.b32.xlu0 %v1466, 104
        %v1679 = vpop.permute.xlu0 %1678
        %1680 = vrot.lane.b32.xlu0 %v1466, 72
        %v1681 = vpop.permute.xlu0 %1680
        %v1683 = vsel %vm887, %v1679, 0
        %v1686 = vsel %vm887, %v1681, 0
        %1688 = vmatpush.bf16.xpose.msra.mxu0 0
        %1689 = vmatpush.bf16.xpose.msra.mxu0 0
        %1690 = vmatpush.bf16.xpose.msra.mxu0 0
        %1691 = vmatpush.bf16.xpose.msra.mxu0 0
        %1692 = vmatpush.bf16.xpose.msra.mxu0 0
        %1693 = vmatpush.bf16.xpose.msra.mxu0 0
        %1694 = vmatpush.bf16.xpose.msra.mxu0 0
        %1695 = vmatpush.bf16.xpose.msra.mxu0 %v1686
        %1696 = vmatmul.bf16.gmra.mxu0 %v1683
        %v1697 = vpop.f32.mrf.mxu0
        %v1698 = vadd.f32 0.0, %v1697
        %v1699 = vpop.f32.mrf.mxu0
        %1700 = vdwg.mxu0
        %v1701 = vmul.f32 %v1698, 0.35355338
        %v1702 = vadd.f32 %v1701, %v843
        %v1703 = vsel %vm887, %v1702, -inf
        %1704 = vmax.xlane.f32.xlu0 %v1703
        %v1705 = vpop.xlane.xlu0 %1704
        %v1706 = vsub.f32 %v1702, %v1705
        %v1707 = vmul.f32 %v1706, 1.442695
        %v1708 = vpow.pop %v1707
        %v1709 = vsel %vm887, %v1708, 0.0
        %1710 = vadd.xlane.f32.xlu0 %v1709
        %v1711 = vpop.xlane.xlu0 %1710
        %v1712 = vrcp.pop %v1711
        %v1713 = vmul.f32 %v1711, %v1712
        %v1714 = vsub.f32 1.0, %v1713
        %v1715 = vmul.f32 %v1712, %v1714
        %v1716 = vadd.f32 %v1712, %v1715
        %vm1717 = vweird.f32 %v1711
        %vm1718 = vweird.f32 %v1712
        %vm1719 = vmor %vm1717, %vm1718
        %v1720 = vsel %vm1719, %v1712, %v1716
        %v1721 = vand.u32 2147483647, %v1711
        %vm1722 = vcmp.eq.f32.partialorder %v1721, 8.507059e+37
        %v1723 = vand.u32 %v1711, 2147483648
        %v1724 = vor.u32 1.1754944e-38, %v1723
        %v1725 = vsel %vm1722, %v1724, %v1720
        %v1726 = vmul.f32 %v1708, %v1725
        %v1727 = vpack.c.bf16 %v1726, %v1726
        %1728 = vrot.lane.b32.xlu0 %v1466, 40
        %v1729 = vpop.permute.xlu0 %1728
        %v1731 = vsel %vm887, %v1727, 0
        %v1734 = vsel %vm939, %v1729, 0
        %1736 = vmatpush.bf16.msra.mxu0 0
        %1737 = vmatpush.bf16.msra.mxu0 0
        %1738 = vmatpush.bf16.msra.mxu0 0
        %1739 = vmatpush.bf16.msra.mxu0 0
        %1740 = vmatpush.bf16.msra.mxu0 0
        %1741 = vmatpush.bf16.msra.mxu0 0
        %1742 = vmatpush.bf16.msra.mxu0 0
        %1743 = vmatpush.bf16.msra.mxu0 %v1734
        %1744 = vmatmul.bf16.gmra.mxu0 %v1731
        %v1745 = vpop.f32.mrf.mxu0
        %v1746 = vadd.f32 0.0, %v1745
        %v1747 = vpop.f32.mrf.mxu0
        %1748 = vdwg.mxu0
        %1750 = vrot.lane.b32.xlu0 %v1604, 8
        %v1751 = vpop.permute.xlu0 %1750
        %1754 = vrot.lane.b32.xlu0 %v1675, 16
        %v1755 = vpop.permute.xlu0 %1754
        %1758 = vrot.lane.b32.xlu0 %v1746, 24
        %v1759 = vpop.permute.xlu0 %1758
        %v1761 = vsel %vm887, %v1533, %v1751
        %v1762 = vsel %vm1182, %v1761, %v1755
        %v1763 = vsel %vm1184, %v1762, %v1759
        %v1764 = vpack.c.bf16 %v1763, %v1763
        %s1765 = scalar_lea.vmem %s10, 16
        %v1766 = vld [vmem:[%s1765] sm:$0xf]
        %v1767 = vld [vmem:[%s1765 + $0x4] sm:$0xf]
        %v1768 = vld [vmem:[%s1765 + $0x8] sm:$0xf]
        %v1769 = vld [vmem:[%s1765 + $0xc] sm:$0xf]
        %s1770 = scalar_lea.vmem %s11, 1
        %v1771 = vld [vmem:[%s1770] sm:$0x1]
        %v1773 = vperm.slane %v1771, 0
        %v1779 = vunpack.c.l.b16 %v1766
        %v1780 = vunpack.c.l.b16 %v1767
        %v1781 = vunpack.c.l.b16 %v1768
        %v1782 = vunpack.c.l.b16 %v1769
        %v1783 = vpack.c.b16 %v1780, %v1779
        %v1784 = vpack.c.b16 %v1782, %v1781
        %v1788 = vsel %vm748, %v1764, 0
        %1790 = vmatpush.bf16.msra.mxu0 0
        %1791 = vmatpush.bf16.msra.mxu0 0
        %1792 = vmatpush.bf16.msra.mxu0 0
        %1793 = vmatpush.bf16.msra.mxu0 0
        %1794 = vmatpush.bf16.msra.mxu0 0
        %1795 = vmatpush.bf16.msra.mxu0 0
        %1796 = vmatpush.bf16.msra.mxu0 %v1784
        %1797 = vmatpush.bf16.msra.mxu0 %v1783
        %1798 = vmatmul.bf16.gmra.mxu0 %v1788
        %v1799 = vpop.f32.mrf.mxu0
        %v1800 = vadd.f32 %v1773, %v1799
        %v1801 = vpop.f32.mrf.mxu0
        %1802 = vdwg.mxu0
        %v1803 = vadd.f32 %v1800, %v1423
        %s1804 = scalar_lea.vmem %s12, 1
        %v1805 = vld [vmem:[%s1804] sm:$0x1]
        %s1806 = scalar_lea.vmem %s13, 1
        %v1807 = vld [vmem:[%s1806] sm:$0x1]
        %v1808 = vsel %vm748, %v1803, 0.0
        %1809 = vadd.xlane.f32.xlu0 %v1808
        %v1810 = vpop.xlane.xlu0 %1809
        %v1811 = vmul.f32 %v1810, %v758
        %v1812 = vsub.f32 %v1803, %v1811
        %v1813 = vmul.f32 %v1812, %v1812
        %v1814 = vsel %vm748, %v1813, 0.0
        %1815 = vadd.xlane.f32.xlu0 %v1814
        %v1816 = vpop.xlane.xlu0 %1815
        %v1817 = vmul.f32 %v1816, %v758
        %v1818 = vadd.f32 %v1817, 1e-12
        %v1819 = vrsqrt.pop %v1818
        %v1820 = vmul.f32 %v1819, %v1818
        %v1821 = vmul.f32 %v1820, %v1819
        %v1822 = vmul.f32 0.5, %v1821
        %v1823 = vsub.f32 1.5, %v1822
        %v1824 = vmul.f32 %v1819, %v1823
        %vm1825 = vweird.f32 %v1818
        %vm1826 = vweird.f32 %v1819
        %vm1827 = vmor %vm1825, %vm1826
        %v1828 = vsel %vm1827, %v1819, %v1824
        %v1829 = vmul.f32 %v1812, %v1828
        %v1831 = vperm.slane %v1805, 0
        %v1833 = vmul.f32 %v1829, %v1831
        %v1835 = vperm.slane %v1807, 0
        %v1837 = vadd.f32 %v1833, %v1835
        %v1838 = vpack.c.bf16 %v1837, %v1837
        %s1839 = scalar_lea.vmem %s14, 16
        %v1840 = vld [vmem:[%s1839] sm:$0xf]
        %v1841 = vld [vmem:[%s1839 + $0x4] sm:$0xf]
        %v1842 = vld [vmem:[%s1839 + $0x8] sm:$0xf]
        %v1843 = vld [vmem:[%s1839 + $0xc] sm:$0xf]
        %s1844 = scalar_lea.vmem %s15, 1
        %v1845 = vld [vmem:[%s1844] sm:$0x1]
        %v1847 = vperm.slane %v1845, 0
        %v1853 = vunpack.c.l.b16 %v1840
        %v1854 = vunpack.c.l.b16 %v1841
        %v1855 = vunpack.c.l.b16 %v1842
        %v1856 = vunpack.c.l.b16 %v1843
        %v1857 = vpack.c.b16 %v1854, %v1853
        %v1858 = vpack.c.b16 %v1856, %v1855
        %v1862 = vsel %vm748, %v1838, 0
        %1864 = vmatpush.bf16.msra.mxu0 0
        %1865 = vmatpush.bf16.msra.mxu0 0
        %1866 = vmatpush.bf16.msra.mxu0 0
        %1867 = vmatpush.bf16.msra.mxu0 0
        %1868 = vmatpush.bf16.msra.mxu0 0
        %1869 = vmatpush.bf16.msra.mxu0 0
        %1870 = vmatpush.bf16.msra.mxu0 %v1858
        %1871 = vmatpush.bf16.msra.mxu0 %v1857
        %1872 = vmatmul.bf16.gmra.mxu0 %v1862
        %v1873 = vpop.f32.mrf.mxu0
        %v1874 = vadd.f32 %v1847, %v1873
        %v1875 = vpop.f32.mrf.mxu0
        %1876 = vdwg.mxu0
        %v1877 = vmul.f32 %v1874, 0.5
        %v1878 = vmul.f32 %v1874, 0.70710677
        %v1879 = vmul.f32 %v1878, %v1878
        %v1880 = vmin.f32 16.0, %v1879
        %v1881 = vmul.f32 %v1880, 2.1237322e-06
        %v1882 = vadd.f32 %v1881, 0.00028619796
        %v1883 = vmul.f32 %v1880, %v1882
        %v1884 = vadd.f32 %v1883, 0.0036580483
        %v1885 = vmul.f32 %v1880, %v1884
        %v1886 = vadd.f32 %v1885, 0.05243302
        %v1887 = vmul.f32 %v1880, %v1886
        %v1888 = vadd.f32 %v1887, 0.18741608
        %v1889 = vmul.f32 %v1880, %v1888
        %v1890 = vadd.f32 %v1889, 1.1283791
        %v1891 = vmul.f32 %v1878, %v1890
        %v1892 = vmul.f32 %v1880, 3.8918573e-05
        %v1893 = vadd.f32 %v1892, 0.001143296
        %v1894 = vmul.f32 %v1880, %v1893
        %v1895 = vadd.f32 %v1894, 0.014752088
        %v1896 = vmul.f32 %v1880, %v1895
        %v1897 = vadd.f32 %v1896, 0.112945676
        %v1898 = vmul.f32 %v1880, %v1897
        %v1899 = vadd.f32 %v1898, 0.4994258
        %v1900 = vmul.f32 %v1880, %v1899
        %v1901 = vadd.f32 %v1900, 1.0
        %v1902 = vrcp.pop %v1901
        %v1903 = vmul.f32 %v1901, %v1902
        %v1904 = vsub.f32 1.0, %v1903
        %v1905 = vmul.f32 %v1902, %v1904
        %v1906 = vadd.f32 %v1902, %v1905
        %vm1907 = vweird.f32 %v1901
        %vm1908 = vweird.f32 %v1902
        %vm1909 = vmor %vm1907, %vm1908
        %v1910 = vsel %vm1909, %v1902, %v1906
        %v1911 = vand.u32 2147483647, %v1901
        %vm1912 = vcmp.eq.f32.partialorder %v1911, 8.507059e+37
        %v1913 = vand.u32 %v1901, 2147483648
        %v1914 = vor.u32 1.1754944e-38, %v1913
        %v1915 = vsel %vm1912, %v1914, %v1910
        %v1916 = vmul.f32 %v1891, %v1915
        %v1917 = vmin.f32 %v1916, 1.0
        %v1918 = vmax.f32 %v1917, -1.0
        %v1919 = vadd.f32 %v1918, 1.0
        %v1920 = vmul.f32 %v1877, %v1919
        %v1921 = vpack.c.bf16 %v1920, %v1920
        %s1922 = scalar_lea.vmem %s16, 32
        %v1923 = vld [vmem:[%s1922] sm:$0xf]
        %v1924 = vld [vmem:[%s1922 + $0x4] sm:$0xf]
        %v1925 = vld [vmem:[%s1922 + $0x8] sm:$0xf]
        %v1926 = vld [vmem:[%s1922 + $0xc] sm:$0xf]
        %v1927 = vld [vmem:[%s1922 + $0x10] sm:$0xf]
        %v1928 = vld [vmem:[%s1922 + $0x14] sm:$0xf]
        %v1929 = vld [vmem:[%s1922 + $0x18] sm:$0xf]
        %v1930 = vld [vmem:[%s1922 + $0x1c] sm:$0xf]
        %s1931 = scalar_lea.vmem %s17, 1
        %v1932 = vld [vmem:[%s1931] sm:$0x1]
        %v1934 = vperm.slane %v1932, 0
        %v1944 = vunpack.c.l.b16 %v1923
        %v1945 = vunpack.c.l.b16 %v1924
        %v1946 = vunpack.c.l.b16 %v1925
        %v1947 = vunpack.c.l.b16 %v1926
        %v1948 = vunpack.c.l.b16 %v1927
        %v1949 = vunpack.c.l.b16 %v1928
        %v1950 = vunpack.c.l.b16 %v1929
        %v1951 = vunpack.c.l.b16 %v1930
        %v1952 = vpack.c.b16 %v1945, %v1944
        %v1953 = vpack.c.b16 %v1947, %v1946
        %v1954 = vpack.c.b16 %v1949, %v1948
        %v1955 = vpack.c.b16 %v1951, %v1950
        %v1961 = vsel %vm1374, %v1921, 0
        %1963 = vmatpush.bf16.msra.mxu0 0
        %1964 = vmatpush.bf16.msra.mxu0 0
        %1965 = vmatpush.bf16.msra.mxu0 0
        %1966 = vmatpush.bf16.msra.mxu0 0
        %1967 = vmatpush.bf16.msra.mxu0 %v1955
        %1968 = vmatpush.bf16.msra.mxu0 %v1954
        %1969 = vmatpush.bf16.msra.mxu0 %v1953
        %1970 = vmatpush.bf16.msra.mxu0 %v1952
        %1971 = vmatmul.bf16.gmra.mxu0 %v1961
        %v1972 = vpop.f32.mrf.mxu0
        %v1973 = vadd.f32 %v1934, %v1972
        %v1974 = vpop.f32.mrf.mxu0
        %1975 = vdwg.mxu0
        %v1976 = vadd.f32 %v1973, %v1837
        %s1977 = scalar_lea.vmem %s18, 1
        %v1978 = vld [vmem:[%s1977] sm:$0x1]
        %s1979 = scalar_lea.vmem %s19, 1
        %v1980 = vld [vmem:[%s1979] sm:$0x1]
        %v1981 = vsel %vm748, %v1976, 0.0
        %1982 = vadd.xlane.f32.xlu0 %v1981
        %v1983 = vpop.xlane.xlu0 %1982
        %v1984 = vmul.f32 %v1983, %v758
        %v1985 = vsub.f32 %v1976, %v1984
        %v1986 = vmul.f32 %v1985, %v1985
        %v1987 = vsel %vm748, %v1986, 0.0
        %1988 = vadd.xlane.f32.xlu0 %v1987
        %v1989 = vpop.xlane.xlu0 %1988
        %v1990 = vmul.f32 %v1989, %v758
        %v1991 = vadd.f32 %v1990, 1e-12
        %v1992 = vrsqrt.pop %v1991
        %v1993 = vmul.f32 %v1992, %v1991
        %v1994 = vmul.f32 %v1993, %v1992
        %v1995 = vmul.f32 0.5, %v1994
        %v1996 = vsub.f32 1.5, %v1995
        %v1997 = vmul.f32 %v1992, %v1996
        %vm1998 = vweird.f32 %v1991
        %vm1999 = vweird.f32 %v1992
        %vm2000 = vmor %vm1998, %vm1999
        %v2001 = vsel %vm2000, %v1992, %v1997
        %v2002 = vmul.f32 %v1985, %v2001
        %v2004 = vperm.slane %v1978, 0
        %v2006 = vmul.f32 %v2002, %v2004
        %v2008 = vperm.slane %v1980, 0
        %v2010 = vadd.f32 %v2006, %v2008
        %v2011 = vpack.c.bf16 %v2010, %v2010
        %v2012 = vld [vmem:[%s20] sm:$0xf]
        %v2013 = vld [vmem:[%s20 + $0x4] sm:$0xf]
        %v2014 = vld [vmem:[%s20 + $0x8] sm:$0xf]
        %v2015 = vld [vmem:[%s20 + $0xc] sm:$0xf]
        %v2016 = vld [vmem:[%s21] sm:$0x1]
        %v2021 = vunpack.c.l.b16 %v2012
        %v2022 = vunpack.c.l.b16 %v2013
        %v2023 = vunpack.c.l.b16 %v2014
        %v2024 = vunpack.c.l.b16 %v2015
        %v2025 = vpack.c.b16 %v2022, %v2021
        %v2026 = vpack.c.b16 %v2024, %v2023
        %v2030 = vsel %vm748, %v2011, 0
        %2032 = vmatpush.bf16.msra.mxu0 0
        %2033 = vmatpush.bf16.msra.mxu0 0
        %2034 = vmatpush.bf16.msra.mxu0 0
        %2035 = vmatpush.bf16.msra.mxu0 0
        %2036 = vmatpush.bf16.msra.mxu0 0
        %2037 = vmatpush.bf16.msra.mxu0 0
        %2038 = vmatpush.bf16.msra.mxu0 %v2026
        %2039 = vmatpush.bf16.msra.mxu0 %v2025
        %2040 = vmatmul.bf16.gmra.mxu0 %v2030
        %v2041 = vpop.f32.mrf.mxu0
        %v2042 = vadd.f32 %v2016, %v2041
        %v2043 = vpop.f32.mrf.mxu0
        %2044 = vdwg.mxu0
        %v2045 = vtanh.pop %v2042
        %v2046 = vpack.c.bf16 %v2045, %v2045
        %v2047 = vld [vmem:[%s22] sm:$0xf]
        %v2048 = vld [vmem:[%s22 + $0x4] sm:$0xf]
        %v2049 = vld [vmem:[%s22 + $0x8] sm:$0xf]
        %v2050 = vld [vmem:[%s22 + $0xc] sm:$0xf]
        %v2051 = vld [vmem:[%s23] sm:$0x1]
        %v2056 = vunpack.c.l.b16 %v2047
        %v2057 = vunpack.c.l.b16 %v2048
        %v2058 = vunpack.c.l.b16 %v2049
        %v2059 = vunpack.c.l.b16 %v2050
        %v2060 = vpack.c.b16 %v2057, %v2056
        %v2061 = vpack.c.b16 %v2059, %v2058
        %v2065 = vsel %vm748, %v2046, 0
        %2067 = vmatpush.bf16.msra.mxu0 0
        %2068 = vmatpush.bf16.msra.mxu0 0
        %2069 = vmatpush.bf16.msra.mxu0 0
        %2070 = vmatpush.bf16.msra.mxu0 0
        %2071 = vmatpush.bf16.msra.mxu0 0
        %2072 = vmatpush.bf16.msra.mxu0 0
        %2073 = vmatpush.bf16.msra.mxu0 %v2061
        %2074 = vmatpush.bf16.msra.mxu0 %v2060
        %2075 = vmatmul.bf16.gmra.mxu0 %v2065
        %v2076 = vpop.f32.mrf.mxu0
        %v2077 = vadd.f32 %v2051, %v2076
        %v2078 = vpop.f32.mrf.mxu0
        %2079 = vdwg.mxu0
        %vm2080 = vcmask 16384
        %2081 = vst.msk [vmem:[%s654] sm:$0x1] %vm2080, %v2077
        %s2082 = sand.u32 %s505, 1
        %s2083 = scalar_lea.sflag [#allocation8], %s2082
        %s2084 = sand.u32 %s505, 1
        %s2085 = scalar_lea.vmem [#allocation7], %s2084
        // Predicated region
        $region105: #{bert_cl_forward.1} parent=103 // pred_check
          %p2086 = pneg %p515
        $region106: #{bert_cl_forward.1} parent=103 // pred_check_branch
          %2088 = sbr.rel (%p2086) target = $region108
        $region107: #{bert_cl_forward.1} parent=103 // pred_region
          %2090 = vsyncadd %s2083, 0
          %s2091 = scalar_lea.hbm %s24, %s56
          %s2093 = sshll.u32 %s2085, 4
          %s2094 = int_to_ptr.vmem [resolvable:$true] %s2093
          %s2095 = sshll.u32 %s2091, 4
          %s2096 = int_to_ptr.hbm [resolvable:$true] %s2095
          %2098 = dma.vmem_to_hbm [thread:$0]  %s2094, 16, %s2096, %s2083
        $region108: #{bert_cl_forward.1} parent=103 // pred_fallthru
          _
      $region104: #{bert_cl_forward.1} parent=5 // pred_fallthru
        _
      %p2099 = scmp.le.s32.totalorder 2, %s51
      // Predicated region
      $region109: #{bert_cl_forward.1} parent=5 // pred_check
        %p2100 = pneg %p2099
      $region110: #{bert_cl_forward.1} parent=5 // pred_check_branch
        %2102 = sbr.rel (%p2100) target = $region112
      $region111: #{bert_cl_forward.1} parent=5 // pred_region
        %s2103 = ssub.s32 %s51, 2
        // Predicated region
        $region113: #{bert_cl_forward.1} parent=111 // pred_check
          %p2104 = pneg %p521
        $region114: #{bert_cl_forward.1} parent=111 // pred_check_branch
          %2106 = sbr.rel (%p2104) target = $region116
        $region115: #{bert_cl_forward.1} parent=111 // pred_region
          %s2107 = sand.u32 %s506, 1
          %s2108 = scalar_lea.sflag [#allocation8], %s2107
          %s2109 = sand.u32 %s506, 1
          %s2110 = scalar_lea.vmem [#allocation7], %s2109
          %2112 = dma.done %s2108, 16
        $region116: #{bert_cl_forward.1} parent=111 // pred_fallthru
          _
      $region112: #{bert_cl_forward.1} parent=5 // pred_fallthru
        _
    $region6: #{bert_cl_forward.1} parent=1 // loop_footer
      %s55 = sadd.s32 1, %s51
    $region7: #{bert_cl_forward.1} parent=1 // loop_footer_branch
      %50 = sbr.rel target = $region3
    $region8: #{bert_cl_forward.1} parent=1 // loop_exit
      _
    %2113 = vsyncpa [#allocation8], 1
    %s2114 = scalar_lea.sflag [#allocation8], 1
    %2115 = vsyncpa %s2114, 1

</llo_original>
